<compile_context>
chip_gen: v7x
topology: tpu7x:2x2x1
jax: 0.10.0
libtpu: 0.0.40
codegen_flags: <defaults>
</compile_context>

<pallas_src>
import functools

import numpy as np
import jax
import jax.numpy as jnp
from jax.experimental import pallas as pl
from jax.experimental.pallas import tpu as pltpu


NEG_INF = -1e30
VMEM_LIMIT_BYTES = 32 * 1024 * 1024


# --------------------------------------------------------------------------- tiling utils
def _round_up(n, m):
    return ((n + m - 1) // m) * m


def _pick_tile(n, target, align):
    """Largest multiple of `align` that divides n and is <= target; else n (full dim)."""
    if n <= target or n % align != 0:
        return n
    t = (min(target, n) // align) * align
    while t >= align:
        if n % t == 0:
            return t
        t -= align
    return n


def _pick_row_tile(n, target=512, align=16):
    # Prefer >= 2 row tiles so the "parallel" axis can be sharded across both v7x cores.
    return _pick_tile(n, min(target, max(align, n // 2)), align)


# --------------------------------------------------------------------------- linear kernel
def _linear_kernel(x_ref, w_ref, xw_ref, s_ref, *, hf):
    # One row-tile: fused feature transform + attention-score projection (single MXU pass).
    res = jnp.dot(x_ref[...], w_ref[...], preferred_element_type=jnp.float32)  # (Tn, hf+128)
    xw_ref[...] = res[:, :hf].astype(jnp.bfloat16)        # transformed features (bf16)
    s_ref[...] = res[:, hf:]                               # [a_src heads | a_dst heads | 0-pad]


def gat_linear(x, w_ext, hf, row_tile):
    n, cin = x.shape
    m = w_ext.shape[1]
    tn = row_tile
    kernel = functools.partial(_linear_kernel, hf=hf)
    return pl.pallas_call(
        kernel,
        out_shape=(jax.ShapeDtypeStruct((n, hf), jnp.bfloat16),
                   jax.ShapeDtypeStruct((n, 128), jnp.float32)),
        grid=(n // tn,),
        in_specs=[pl.BlockSpec((tn, cin), lambda i: (i, 0)),
                  pl.BlockSpec((cin, m), lambda i: (0, 0))],
        out_specs=(pl.BlockSpec((tn, hf), lambda i: (i, 0)),
                   pl.BlockSpec((tn, 128), lambda i: (i, 0))),
        compiler_params=pltpu.CompilerParams(
            dimension_semantics=("parallel",),
            vmem_limit_bytes=VMEM_LIMIT_BYTES),
    )(x, w_ext)


# ------------------------------------------------------------------------ attention kernel
def _gat_attn_kernel(jmap_ref, xw_j_ref, s_i_ref, sT_ref, flags_ref, bias_ref, o_ref,
                     m_ref, l_ref, acc_ref, *, heads, feat, apply_elu, square_dim):
    # grid = (i: target-row tiles [parallel], jj: banded source tiles [arbitrary, innermost])
    i = pl.program_id(0)
    jj = pl.program_id(1)
    nj = pl.num_programs(1)
    ti = s_i_ref.shape[0]
    tj = xw_j_ref.shape[0]

    @pl.when(jj == 0)
    def _init():
        m_ref[...] = jnp.full_like(m_ref, NEG_INF)
        l_ref[...] = jnp.zeros_like(l_ref)
        acc_ref[...] = jnp.zeros_like(acc_ref)

    jblk = jmap_ref[i, jj]                                   # SMEM scalar: actual j block

    # --- analytic banded adjacency mask: no dense NxN adjacency is ever materialized ---
    rows = jax.lax.broadcasted_iota(jnp.int32, (ti, tj), 0) + i * ti
    cols = jax.lax.broadcasted_iota(jnp.int32, (ti, tj), 1) + jblk * tj
    diff = cols - rows
    f_p1 = flags_ref[:, 0:1] > 0                             # source r+1 allowed
    f_ps = flags_ref[:, 1:2] > 0                             # source r+square_dim allowed
    f_ms = flags_ref[:, 2:3] > 0                             # source r-square_dim allowed
    mask = ((diff == 0) | (diff == -1)
            | ((diff == 1) & f_p1)
            | ((diff == square_dim) & f_ps)
            | ((diff == -square_dim) & f_ms))

    xw_j = xw_j_ref[...]                                     # (Tj, heads*feat) bf16
    s_i = s_i_ref[...]                                       # (Ti, 128) f32 (a_dst lanes)
    sT = sT_ref[...]                                         # (heads, Tj) f32 (a_src, pre-T)

    for h in range(heads):                                   # static unroll over heads
        a_dst = s_i[:, heads + h:heads + h + 1]              # (Ti, 1)
        a_src = sT[h:h + 1, :]                               # (1, Tj), no in-kernel transpose
        e = a_dst + a_src                                    # (Ti, Tj)
        e = jnp.maximum(e, 0.2 * e)                          # LeakyReLU(0.2), single VPU op
        e = jnp.where(mask, e, NEG_INF)                      # mask non-edges

        m_prev = m_ref[h]                                    # (Ti, 1)
        m_new = jnp.maximum(m_prev, jnp.max(e, axis=1, keepdims=True))
        alpha = jnp.exp(m_prev - m_new)                      # rescale factor for running sums
        p = jnp.where(mask, jnp.exp(e - m_new), 0.0)         # load-bearing second mask
        l_ref[h] = alpha * l_ref[h] + jnp.sum(p, axis=1, keepdims=True)
        pv = jnp.dot(p.astype(jnp.bfloat16),
                     xw_j[:, h * feat:(h + 1) * feat],
                     preferred_element_type=jnp.float32)     # (Ti, feat)
        acc_ref[h] = alpha * acc_ref[h] + pv
        m_ref[h] = m_new

    @pl.when(jj == nj - 1)
    def _finalize():
        outs = []
        for h in range(heads):
            inv_l = pl.reciprocal(l_ref[h], approx=True)     # deferred softmax normalization
            outs.append(acc_ref[h] * inv_l)
        out = outs[0] if heads == 1 else jnp.concatenate(outs, axis=-1)
        out = out + bias_ref[...]
        if apply_elu:
            out = jnp.where(out > 0, out, jnp.exp(jnp.minimum(out, 0.0)) - 1.0)
        o_ref[...] = out.astype(o_ref.dtype)


def gat_attention(xw, s, sT, flags, jmap, bias, heads, feat, apply_elu,
                  square_dim, out_dtype, ti, tj):
    n, hf = xw.shape
    n_i = n // ti
    nb = jmap.shape[1]
    kernel = functools.partial(_gat_attn_kernel, heads=heads, feat=feat,
                               apply_elu=apply_elu, square_dim=square_dim)
    grid_spec = pltpu.PrefetchScalarGridSpec(
        num_scalar_prefetch=1,                               # jmap: per-row-tile band blocks
        grid=(n_i, nb),
        in_specs=[
            pl.BlockSpec((tj, hf), lambda i, j, jm: (jm[i, j], 0)),     # source features
            pl.BlockSpec((ti, 128), lambda i, j, jm: (i, 0)),           # target scores (a_dst)
            pl.BlockSpec((heads, tj), lambda i, j, jm: (0, jm[i, j])),  # source scores (pre-T)
            pl.BlockSpec((ti, 8), lambda i, j, jm: (i, 0)),             # per-row edge flags
            pl.BlockSpec((1, hf), lambda i, j, jm: (0, 0)),             # bias
        ],
        out_specs=pl.BlockSpec((ti, hf), lambda i, j, jm: (i, 0)),
        scratch_shapes=[
            pltpu.VMEM((heads, ti, 1), jnp.float32),          # running max
            pltpu.VMEM((heads, ti, 1), jnp.float32),          # running sum
            pltpu.VMEM((heads, ti, feat), jnp.float32),       # unnormalized accumulator
        ],
    )
    return pl.pallas_call(
        kernel,
        out_shape=jax.ShapeDtypeStruct((n, hf), out_dtype),
        grid_spec=grid_spec,
        compiler_params=pltpu.CompilerParams(
            dimension_semantics=("parallel", "arbitrary"),
            vmem_limit_bytes=VMEM_LIMIT_BYTES),
    )(jmap, xw, s, sT, flags, bias)


# ----------------------------------------------------------------------------- graph meta
def build_graph_meta(square_dim, batch_size, n_pad, ti, tj):
    """O(N) replacement for the dense adjacency: per-row edge flags + banded block map.

    Edge semantics match GATClassifier.create_edges (knn=4) plus PyG self-loops, with the
    same cross-image wrap edges and with the out-of-range (target == N) edges dropped.
    For target row r, sources are {r, r-1, r+1 [flag0], r+s [flag1], r-s [flag2]}.
    """
    s = square_dim
    n_per = s * s
    r = np.arange(n_pad, dtype=np.int64)
    flags = np.zeros((n_pad, 8), np.int32)
    flags[:, 0] = ((r + 1) % n_per) != 0
    flags[:, 1] = ((r + s) % n_per) >= s
    flags[:, 2] = ((r - s) % n_per) <= (n_per - s)

    n_i = n_pad // ti
    n_j = n_pad // tj
    needed_lists = []
    nb = 1
    for it in range(n_i):
        lo = max(it * ti - s, 0)
        hi = min(it * ti + ti - 1 + s, n_pad - 1)
        needed = list(range(lo // tj, hi // tj + 1))
        needed_lists.append(needed)
        nb = max(nb, len(needed))
    jmap = np.zeros((n_i, nb), np.int32)
    for it, needed in enumerate(needed_lists):
        # pad with out-of-band blocks (analytic mask is all-false there -> harmless)
        pad_blocks = [b for b in range(n_j) if b not in needed][: nb - len(needed)]
        jmap[it] = np.array(needed + pad_blocks, np.int32)
    return jnp.asarray(flags), jnp.asarray(jmap)


def _gat_stack(x, flags, jmap, weights, *, meta, square_dim, ti, tj):
    for (heads, fp, apply_elu), (w_ext, bias) in zip(meta, weights):
        hf = heads * fp
        xw, s = gat_linear(x, w_ext, hf, row_tile=ti)
        sT = jnp.transpose(s[:, :heads])                     # (heads, N) pre-transposed a_src
        out_dtype = jnp.bfloat16 if apply_elu else jnp.float32
        x = gat_attention(xw, s, sT, flags, jmap, bias, heads, fp, apply_elu,
                          square_dim, out_dtype, ti=ti, tj=tj)
    return x


# ----------------------------------------------------------------------------- model
class GATClassifierPallas:
    def __init__(self, num_classes, row=2, line=2, gnn_layers=3, knn=4, seed=0):
        self.num_classes = num_classes + 1
        self.in_feat = 256
        self.hidden_dim = 64
        self.num_heads = 4
        self.num_gat_layers = gnn_layers
        self.k = knn
        self._fwd_cache = {}

        # (cin, out_per_head, heads, apply_elu)
        cfgs = [(self.in_feat, self.hidden_dim, self.num_heads, True)]
        for _ in range(gnn_layers - 2):
            cfgs.append((self.hidden_dim * self.num_heads, self.hidden_dim,
                         self.num_heads, True))
        cfgs.append((self.hidden_dim * self.num_heads, self.num_classes, 1, False))

        rng = np.random.default_rng(seed)
        weights, meta = [], []
        for cin, fout, heads, elu in cfgs:
            scale = 1.0 / np.sqrt(cin)
            w = rng.standard_normal((cin, heads * fout), np.float32) * scale
            att_src = rng.standard_normal((heads, fout), np.float32) * 0.1
            att_dst = rng.standard_normal((heads, fout), np.float32) * 0.1
            bias = rng.standard_normal((heads * fout,), np.float32) * 0.01

            # Pad per-head width so the kernel output stays lane-dense (multiple of 128).
            if (heads * fout) % 128 == 0:
                fp = fout
            else:
                fp = _round_up(fout, 128)

            w_p = np.zeros((cin, heads * fp), np.float32)
            att_s_p = np.zeros((heads, fp), np.float32)
            att_d_p = np.zeros((heads, fp), np.float32)
            bias_p = np.zeros((1, heads * fp), np.float32)
            for h in range(heads):
                w_p[:, h * fp:h * fp + fout] = w[:, h * fout:(h + 1) * fout]
                att_s_p[h, :fout] = att_src[h]
                att_d_p[h, :fout] = att_dst[h]
                bias_p[0, h * fp:h * fp + fout] = bias[h * fout:(h + 1) * fout]

            # Fold the attention-score projection into the linear:
            #   s[:, h]         = a_src for head h
            #   s[:, heads + h] = a_dst for head h      (remaining lanes zero)
            a_proj = np.zeros((heads * fp, 128), np.float32)
            for h in range(heads):
                a_proj[h * fp:(h + 1) * fp, h] = att_s_p[h]
                a_proj[h * fp:(h + 1) * fp, heads + h] = att_d_p[h]
            w_ext = np.concatenate([w_p, w_p @ a_proj], axis=1)   # (cin, heads*fp + 128)

            weights.append((jnp.asarray(w_ext, jnp.bfloat16),      # bf16 weights on host
                            jnp.asarray(bias_p)))
            meta.append((heads, fp, elu))

        self._weights = tuple(weights)
        self._meta = tuple(meta)

    def _get_forward(self, square_dim, batch_size):
        key = (square_dim, batch_size)
        if key not in self._fwd_cache:
            n_real = batch_size * square_dim * square_dim
            if n_real >= 2048:
                n_pad = _round_up(n_real, 512)
            elif n_real >= 256:
                n_pad = _round_up(n_real, 128)
            else:
                n_pad = _round_up(n_real, 16)
            ti = _pick_row_tile(n_pad, 512)
            tj = _pick_tile(n_pad, 1024, 128)
            flags, jmap = build_graph_meta(square_dim, batch_size, n_pad, ti, tj)
            fwd = jax.jit(functools.partial(_gat_stack, meta=self._meta,
                                            square_dim=square_dim, ti=ti, tj=tj))
            self._fwd_cache[key] = (fwd, flags, jmap, n_pad)
        return self._fwd_cache[key]

    def __call__(self, feat_space, anchor_points):
        # feat_space: NCHW [B, 256, H, W];  anchor_points: [B, H*W, 2]
        b, c, hs, ws = feat_space.shape
        assert hs == ws, "reference create_edges assumes a square proposal grid"
        batch_features = feat_space.reshape(b, c, hs * ws).transpose(0, 2, 1)   # (B, HW, C)
        flat_features = batch_features.reshape(b * hs * ws, c).astype(jnp.bfloat16)

        fwd, flags, jmap, n_pad = self._get_forward(hs, b)
        n_real = b * hs * ws
        if n_pad != n_real:
            x = jnp.zeros((n_pad, c), jnp.bfloat16).at[:n_real].set(flat_features)
        else:
            x = flat_features

        y = fwd(x, flags, jmap, self._weights)                                   # (n_pad, hf)
        logits = y[:n_real, :self.num_classes].astype(jnp.float32)
        classification = logits.reshape(b, hs * ws, self.num_classes)
        return {"pred_logits": classification, "pred_points": anchor_points}


# ----------------------------------------------------------------------------- main
if __name__ == "__main__":
    key = jax.random.PRNGKey(0)
    B, C, Hs, Ws = 2, 256, 4, 4            # small spatial grid -> 32 nodes total

    # TODO(synk): backbone / Decoder(FPN) / AnchorPoints are not defined in the reference
    # source; synthesize the FPN feature map and anchor coordinates here.
    k1, _ = jax.random.split(key)
    feat_space = jax.random.normal(k1, (B, C, Hs, Ws), jnp.float32)

    ys, xs = jnp.meshgrid(jnp.arange(Hs, dtype=jnp.float32) + 0.5,
                          jnp.arange(Ws, dtype=jnp.float32) + 0.5, indexing="ij")
    pts = jnp.stack([xs.ravel(), ys.ravel()], axis=-1) * 8.0    # stride of pyramid level 3
    anchor_points = jnp.broadcast_to(pts[None], (B, Hs * Ws, 2))

    model = GATClassifierPallas(num_classes=3, row=2, line=2, gnn_layers=3, knn=4)
    out = model(feat_space, anchor_points)

    jax.block_until_ready(out["pred_logits"])
    jax.block_until_ready(out["pred_points"])
    assert out["pred_logits"].shape == (B, Hs * Ws, 4)
    assert out["pred_points"].shape == (B, Hs * Ws, 2)
    assert bool(jnp.all(jnp.isfinite(out["pred_logits"])))
    print("KERNEL_OK")
</pallas_src>

<mosaic_0001>
module attributes {stable_mosaic.version = 11 : i64} {
  func.func @_linear_kernel(%arg0: i32, %arg1: memref<16x256xbf16, #tpu.memory_space<vmem>>, %arg2: memref<256x384xbf16, #tpu.memory_space<vmem>>, %arg3: memref<16x256xbf16, #tpu.memory_space<vmem>>, %arg4: memref<16x128xf32, #tpu.memory_space<vmem>>) attributes {dimension_semantics = [#tpu.dimension_semantics<parallel>], iteration_bounds = array<i64: 2>, scalar_prefetch = 0 : i64, scratch_operands = 0 : i64, tpu.core_type = #tpu.core_type<tc>, window_params = [{transform_indices = @transform_0, window_bounds = array<i64: 16, 256>}, {pipeline_mode = #tpu.pipeline_mode<synchronous>, transform_indices = @transform_1, window_bounds = array<i64: 256, 384>}, {transform_indices = @transform_2, window_bounds = array<i64: 16, 256>}, {transform_indices = @transform_3, window_bounds = array<i64: 16, 128>}]} {
    %c0 = arith.constant 0 : index
    %c0_0 = arith.constant 0 : index
    %0 = vector.load %arg1[%c0, %c0_0] : memref<16x256xbf16, #tpu.memory_space<vmem>>, vector<16x256xbf16>
    %c0_1 = arith.constant 0 : index
    %c0_2 = arith.constant 0 : index
    %1 = vector.load %arg2[%c0_1, %c0_2] : memref<256x384xbf16, #tpu.memory_space<vmem>>, vector<256x384xbf16>
    %cst = arith.constant dense<0.000000e+00> : vector<16x384xf32>
    %2 = tpu.matmul %0, %1, %cst {dimension_numbers = #tpu.dot_dimension_numbers<[1], [0], [0], [1], [0, 0, 1, 1], [], []>} : vector<16x256xbf16>, vector<256x384xbf16>, vector<16x384xf32> -> vector<16x384xf32>
    %3 = vector.extract_strided_slice %2 {offsets = [0, 0], sizes = [16, 256], strides = [1, 1]} : vector<16x384xf32> to vector<16x256xf32>
    %4 = arith.truncf %3 : vector<16x256xf32> to vector<16x256xbf16>
    %c0_3 = arith.constant 0 : index
    %c0_4 = arith.constant 0 : index
    %5 = vector.load %arg3[%c0_3, %c0_4] : memref<16x256xbf16, #tpu.memory_space<vmem>>, vector<16x256xbf16>
    tpu.vector_store %arg3[%c0_3, %c0_4], %4 {strides = array<i32>} : memref<16x256xbf16, #tpu.memory_space<vmem>>, vector<16x256xbf16>,
    %6 = vector.extract_strided_slice %2 {offsets = [0, 256], sizes = [16, 128], strides = [1, 1]} : vector<16x384xf32> to vector<16x128xf32>
    %c0_5 = arith.constant 0 : index
    %c0_6 = arith.constant 0 : index
    %7 = vector.load %arg4[%c0_5, %c0_6] : memref<16x128xf32, #tpu.memory_space<vmem>>, vector<16x128xf32>
    tpu.vector_store %arg4[%c0_5, %c0_6], %6 {strides = array<i32>} : memref<16x128xf32, #tpu.memory_space<vmem>>, vector<16x128xf32>,
    return
  }
  func.func @transform_0(%arg0: i32) -> (i32, i32) {
    %c0_i32 = arith.constant 0 : i32
    %c0_i32_0 = arith.constant 0 : i32
    return %arg0, %c0_i32 : i32, i32
  }
  func.func @transform_1(%arg0: i32) -> (i32, i32) {
    %c0_i32 = arith.constant 0 : i32
    %c0_i32_0 = arith.constant 0 : i32
    %c0_i32_1 = arith.constant 0 : i32
    return %c0_i32, %c0_i32_0 : i32, i32
  }
  func.func @transform_2(%arg0: i32) -> (i32, i32) {
    %c0_i32 = arith.constant 0 : i32
    %c0_i32_0 = arith.constant 0 : i32
    return %arg0, %c0_i32 : i32, i32
  }
  func.func @transform_3(%arg0: i32) -> (i32, i32) {
    %c0_i32 = arith.constant 0 : i32
    %c0_i32_0 = arith.constant 0 : i32
    return %arg0, %c0_i32 : i32, i32
  }
}

module attributes {stable_mosaic.version = 11 : i64} {
  func.func @_gat_attn_kernel(%arg0: i32, %arg1: i32, %arg2: memref<2x1xi32, #tpu.memory_space<smem>>, %arg3: memref<32x256xbf16, #tpu.memory_space<vmem>>, %arg4: memref<16x128xf32, #tpu.memory_space<vmem>>, %arg5: memref<4x32xf32, #tpu.memory_space<vmem>>, %arg6: memref<16x8xi32, #tpu.memory_space<vmem>>, %arg7: memref<1x256xf32, #tpu.memory_space<vmem>>, %arg8: memref<16x256xbf16, #tpu.memory_space<vmem>>, %arg9: memref<4x16x1xf32, #tpu.memory_space<vmem>>, %arg10: memref<4x16x1xf32, #tpu.memory_space<vmem>>, %arg11: memref<4x16x64xf32, #tpu.memory_space<vmem>>) attributes {dimension_semantics = [#tpu.dimension_semantics<parallel>, #tpu.dimension_semantics<arbitrary>], iteration_bounds = array<i64: 2, 1>, scalar_prefetch = 1 : i64, scratch_operands = 3 : i64, tpu.core_type = #tpu.core_type<tc>, window_params = [{transform_indices = @transform_0, window_bounds = array<i64: 32, 256>}, {transform_indices = @transform_1, window_bounds = array<i64: 16, 128>}, {transform_indices = @transform_2, window_bounds = array<i64: 4, 32>}, {transform_indices = @transform_3, window_bounds = array<i64: 16, 8>}, {pipeline_mode = #tpu.pipeline_mode<synchronous>, transform_indices = @transform_4, window_bounds = array<i64: 1, 256>}, {transform_indices = @transform_5, window_bounds = array<i64: 16, 256>}]} {
    %c0_i32 = arith.constant 0 : i32
    %0 = arith.cmpi eq, %arg1, %c0_i32 : i32
    %1 = arith.extui %0 : i1 to i32
    %c0_i32_0 = arith.constant 0 : i32
    %2 = arith.cmpi ne, %1, %c0_i32_0 : i32
    scf.if %2 {
      %cst_110 = arith.constant -1.000000e+30 : f32
      %230 = vector.broadcast %cst_110 : f32 to vector<4x16x1xf32>
      %c0_111 = arith.constant 0 : index
      %c0_112 = arith.constant 0 : index
      %c0_113 = arith.constant 0 : index
      %231 = vector.load %arg9[%c0_111, %c0_112, %c0_113] : memref<4x16x1xf32, #tpu.memory_space<vmem>>, vector<4x16x1xf32>
      tpu.vector_store %arg9[%c0_111, %c0_112, %c0_113], %230 {strides = array<i32>} : memref<4x16x1xf32, #tpu.memory_space<vmem>>, vector<4x16x1xf32>,
      %cst_114 = arith.constant 0.000000e+00 : f32
      %232 = vector.broadcast %cst_114 : f32 to vector<4x16x1xf32>
      %c0_115 = arith.constant 0 : index
      %c0_116 = arith.constant 0 : index
      %c0_117 = arith.constant 0 : index
      %233 = vector.load %arg10[%c0_115, %c0_116, %c0_117] : memref<4x16x1xf32, #tpu.memory_space<vmem>>, vector<4x16x1xf32>
      tpu.vector_store %arg10[%c0_115, %c0_116, %c0_117], %232 {strides = array<i32>} : memref<4x16x1xf32, #tpu.memory_space<vmem>>, vector<4x16x1xf32>,
      %cst_118 = arith.constant 0.000000e+00 : f32
      %234 = vector.broadcast %cst_118 : f32 to vector<4x16x64xf32>
      %c0_119 = arith.constant 0 : index
      %c0_120 = arith.constant 0 : index
      %c0_121 = arith.constant 0 : index
      %235 = vector.load %arg11[%c0_119, %c0_120, %c0_121] : memref<4x16x64xf32, #tpu.memory_space<vmem>>, vector<4x16x64xf32>
      tpu.vector_store %arg11[%c0_119, %c0_120, %c0_121], %234 {strides = array<i32>} : memref<4x16x64xf32, #tpu.memory_space<vmem>>, vector<4x16x64xf32>,
    } else {
    }
    %3 = arith.index_cast %arg0 : i32 to index
    %4 = arith.index_cast %arg1 : i32 to index
    %5 = memref.load %arg2[%3, %4] : memref<2x1xi32, #tpu.memory_space<smem>>
    %6 = tpu.iota {dimensions = array<i32: 0>} : vector<16x32xi32>
    %c16_i32 = arith.constant 16 : i32
    %7 = arith.muli %arg0, %c16_i32 : i32
    %8 = vector.broadcast %7 : i32 to vector<16x32xi32>
    %9 = arith.addi %6, %8 : vector<16x32xi32>
    %10 = tpu.iota {dimensions = array<i32: 1>} : vector<16x32xi32>
    %c32_i32 = arith.constant 32 : i32
    %11 = arith.muli %5, %c32_i32 : i32
    %12 = vector.broadcast %11 : i32 to vector<16x32xi32>
    %13 = arith.addi %10, %12 : vector<16x32xi32>
    %14 = arith.subi %13, %9 : vector<16x32xi32>
    %c0 = arith.constant 0 : index
    %c0_1 = arith.constant 0 : index
    %15 = vector.load %arg6[%c0, %c0_1] : memref<16x8xi32, #tpu.memory_space<vmem>>, vector<16x1xi32>
    %c0_i32_2 = arith.constant 0 : i32
    %16 = vector.broadcast %c0_i32_2 : i32 to vector<16x1xi32>
    %17 = arith.cmpi sgt, %15, %16 : vector<16x1xi32>
    %c0_3 = arith.constant 0 : index
    %c1 = arith.constant 1 : index
    %18 = vector.load %arg6[%c0_3, %c1] : memref<16x8xi32, #tpu.memory_space<vmem>>, vector<16x1xi32>
    %c0_i32_4 = arith.constant 0 : i32
    %19 = vector.broadcast %c0_i32_4 : i32 to vector<16x1xi32>
    %20 = arith.cmpi sgt, %18, %19 : vector<16x1xi32>
    %c0_5 = arith.constant 0 : index
    %c2 = arith.constant 2 : index
    %21 = vector.load %arg6[%c0_5, %c2] : memref<16x8xi32, #tpu.memory_space<vmem>>, vector<16x1xi32>
    %c0_i32_6 = arith.constant 0 : i32
    %22 = vector.broadcast %c0_i32_6 : i32 to vector<16x1xi32>
    %23 = arith.cmpi sgt, %21, %22 : vector<16x1xi32>
    %c0_i32_7 = arith.constant 0 : i32
    %24 = vector.broadcast %c0_i32_7 : i32 to vector<16x32xi32>
    %25 = arith.cmpi eq, %14, %24 : vector<16x32xi32>
    %c-1_i32 = arith.constant -1 : i32
    %26 = vector.broadcast %c-1_i32 : i32 to vector<16x32xi32>
    %27 = arith.cmpi eq, %14, %26 : vector<16x32xi32>
    %28 = arith.ori %25, %27 : vector<16x32xi1>
    %c1_i32 = arith.constant 1 : i32
    %29 = vector.broadcast %c1_i32 : i32 to vector<16x32xi32>
    %30 = arith.cmpi eq, %14, %29 : vector<16x32xi32>
    %31 = vector.broadcast %17 : vector<16x1xi1> to vector<16x32xi1>
    %32 = arith.andi %30, %31 : vector<16x32xi1>
    %33 = arith.ori %28, %32 : vector<16x32xi1>
    %c4_i32 = arith.constant 4 : i32
    %34 = vector.broadcast %c4_i32 : i32 to vector<16x32xi32>
    %35 = arith.cmpi eq, %14, %34 : vector<16x32xi32>
    %36 = vector.broadcast %20 : vector<16x1xi1> to vector<16x32xi1>
    %37 = arith.andi %35, %36 : vector<16x32xi1>
    %38 = arith.ori %33, %37 : vector<16x32xi1>
    %c-4_i32 = arith.constant -4 : i32
    %39 = vector.broadcast %c-4_i32 : i32 to vector<16x32xi32>
    %40 = arith.cmpi eq, %14, %39 : vector<16x32xi32>
    %41 = vector.broadcast %23 : vector<16x1xi1> to vector<16x32xi1>
    %42 = arith.andi %40, %41 : vector<16x32xi1>
    %43 = arith.ori %38, %42 : vector<16x32xi1>
    %c0_8 = arith.constant 0 : index
    %c0_9 = arith.constant 0 : index
    %44 = vector.load %arg3[%c0_8, %c0_9] : memref<32x256xbf16, #tpu.memory_space<vmem>>, vector<32x256xbf16>
    %c0_10 = arith.constant 0 : index
    %c0_11 = arith.constant 0 : index
    %45 = vector.load %arg4[%c0_10, %c0_11] : memref<16x128xf32, #tpu.memory_space<vmem>>, vector<16x128xf32>
    %c0_12 = arith.constant 0 : index
    %c0_13 = arith.constant 0 : index
    %46 = vector.load %arg5[%c0_12, %c0_13] : memref<4x32xf32, #tpu.memory_space<vmem>>, vector<4x32xf32>
    %47 = vector.extract_strided_slice %45 {offsets = [0, 4], sizes = [16, 1], strides = [1, 1]} : vector<16x128xf32> to vector<16x1xf32>
    %48 = vector.extract_strided_slice %46 {offsets = [0, 0], sizes = [1, 32], strides = [1, 1]} : vector<4x32xf32> to vector<1x32xf32>
    %49 = vector.broadcast %47 : vector<16x1xf32> to vector<16x32xf32>
    %50 = vector.broadcast %48 : vector<1x32xf32> to vector<16x32xf32>
    %51 = arith.addf %49, %50 : vector<16x32xf32>
    %cst = arith.constant 2.000000e-01 : f32
    %52 = vector.broadcast %cst : f32 to vector<16x32xf32>
    %53 = arith.mulf %52, %51 : vector<16x32xf32>
    %54 = arith.maximumf %51, %53 : vector<16x32xf32>
    %cst_14 = arith.constant -1.000000e+30 : f32
    %55 = vector.broadcast %cst_14 : f32 to vector<16x32xf32>
    %56 = arith.select %43, %54, %55 : vector<16x32xi1>, vector<16x32xf32>
    %c0_15 = arith.constant 0 : index
    %c0_16 = arith.constant 0 : index
    %c0_17 = arith.constant 0 : index
    %57 = vector.load %arg9[%c0_15, %c0_16, %c0_17] : memref<4x16x1xf32, #tpu.memory_space<vmem>>, vector<1x16x1xf32>
    %58 = vector.shape_cast %57 : vector<1x16x1xf32> to vector<16x1xf32>
    %cst_18 = arith.constant dense<0xFF800000> : vector<16xf32>
    %59 = vector.multi_reduction <maximumf>, %56, %cst_18 [1] : vector<16x32xf32> to vector<16xf32>
    %60 = vector.shape_cast %59 : vector<16xf32> to vector<16x1xf32>
    %61 = arith.maximumf %58, %60 : vector<16x1xf32>
    %62 = arith.subf %58, %61 : vector<16x1xf32>
    %63 = math.exp %62 : vector<16x1xf32>
    %64 = vector.broadcast %61 : vector<16x1xf32> to vector<16x32xf32>
    %65 = arith.subf %56, %64 : vector<16x32xf32>
    %66 = math.exp %65 : vector<16x32xf32>
    %cst_19 = arith.constant 0.000000e+00 : f32
    %67 = vector.broadcast %cst_19 : f32 to vector<16x32xf32>
    %68 = arith.select %43, %66, %67 : vector<16x32xi1>, vector<16x32xf32>
    %c0_20 = arith.constant 0 : index
    %c0_21 = arith.constant 0 : index
    %c0_22 = arith.constant 0 : index
    %69 = vector.load %arg10[%c0_20, %c0_21, %c0_22] : memref<4x16x1xf32, #tpu.memory_space<vmem>>, vector<1x16x1xf32>
    %70 = vector.shape_cast %69 : vector<1x16x1xf32> to vector<16x1xf32>
    %71 = arith.mulf %63, %70 : vector<16x1xf32>
    %cst_23 = arith.constant dense<0.000000e+00> : vector<16xf32>
    %72 = vector.multi_reduction <add>, %68, %cst_23 [1] : vector<16x32xf32> to vector<16xf32>
    %73 = vector.shape_cast %72 : vector<16xf32> to vector<16x1xf32>
    %74 = arith.addf %71, %73 : vector<16x1xf32>
    %c0_24 = arith.constant 0 : index
    %c0_25 = arith.constant 0 : index
    %c0_26 = arith.constant 0 : index
    %75 = vector.load %arg10[%c0_24, %c0_25, %c0_26] : memref<4x16x1xf32, #tpu.memory_space<vmem>>, vector<1x16x1xf32>
    %76 = vector.shape_cast %75 : vector<1x16x1xf32> to vector<16x1xf32>
    %77 = vector.shape_cast %74 : vector<16x1xf32> to vector<1x16x1xf32>
    tpu.vector_store %arg10[%c0_24, %c0_25, %c0_26], %77 {strides = array<i32>} : memref<4x16x1xf32, #tpu.memory_space<vmem>>, vector<1x16x1xf32>,
    %78 = arith.truncf %68 : vector<16x32xf32> to vector<16x32xbf16>
    %79 = vector.extract_strided_slice %44 {offsets = [0, 0], sizes = [32, 64], strides = [1, 1]} : vector<32x256xbf16> to vector<32x64xbf16>
    %cst_27 = arith.constant dense<0.000000e+00> : vector<16x64xf32>
    %80 = tpu.matmul %78, %79, %cst_27 {dimension_numbers = #tpu.dot_dimension_numbers<[1], [0], [0], [1], [0, 0, 1, 1], [], []>} : vector<16x32xbf16>, vector<32x64xbf16>, vector<16x64xf32> -> vector<16x64xf32>
    %c0_28 = arith.constant 0 : index
    %c0_29 = arith.constant 0 : index
    %c0_30 = arith.constant 0 : index
    %81 = vector.load %arg11[%c0_28, %c0_29, %c0_30] : memref<4x16x64xf32, #tpu.memory_space<vmem>>, vector<1x16x64xf32>
    %82 = vector.shape_cast %81 : vector<1x16x64xf32> to vector<16x64xf32>
    %83 = vector.broadcast %63 : vector<16x1xf32> to vector<16x64xf32>
    %84 = arith.mulf %83, %82 : vector<16x64xf32>
    %85 = arith.addf %84, %80 : vector<16x64xf32>
    %c0_31 = arith.constant 0 : index
    %c0_32 = arith.constant 0 : index
    %c0_33 = arith.constant 0 : index
    %86 = vector.load %arg11[%c0_31, %c0_32, %c0_33] : memref<4x16x64xf32, #tpu.memory_space<vmem>>, vector<1x16x64xf32>
    %87 = vector.shape_cast %86 : vector<1x16x64xf32> to vector<16x64xf32>
    %88 = vector.shape_cast %85 : vector<16x64xf32> to vector<1x16x64xf32>
    tpu.vector_store %arg11[%c0_31, %c0_32, %c0_33], %88 {strides = array<i32>} : memref<4x16x64xf32, #tpu.memory_space<vmem>>, vector<1x16x64xf32>,
    %c0_34 = arith.constant 0 : index
    %c0_35 = arith.constant 0 : index
    %c0_36 = arith.constant 0 : index
    %89 = vector.load %arg9[%c0_34, %c0_35, %c0_36] : memref<4x16x1xf32, #tpu.memory_space<vmem>>, vector<1x16x1xf32>
    %90 = vector.shape_cast %89 : vector<1x16x1xf32> to vector<16x1xf32>
    %91 = vector.shape_cast %61 : vector<16x1xf32> to vector<1x16x1xf32>
    tpu.vector_store %arg9[%c0_34, %c0_35, %c0_36], %91 {strides = array<i32>} : memref<4x16x1xf32, #tpu.memory_space<vmem>>, vector<1x16x1xf32>,
    %92 = vector.extract_strided_slice %45 {offsets = [0, 5], sizes = [16, 1], strides = [1, 1]} : vector<16x128xf32> to vector<16x1xf32>
    %93 = vector.extract_strided_slice %46 {offsets = [1, 0], sizes = [1, 32], strides = [1, 1]} : vector<4x32xf32> to vector<1x32xf32>
    %94 = vector.broadcast %92 : vector<16x1xf32> to vector<16x32xf32>
    %95 = vector.broadcast %93 : vector<1x32xf32> to vector<16x32xf32>
    %96 = arith.addf %94, %95 : vector<16x32xf32>
    %cst_37 = arith.constant 2.000000e-01 : f32
    %97 = vector.broadcast %cst_37 : f32 to vector<16x32xf32>
    %98 = arith.mulf %97, %96 : vector<16x32xf32>
    %99 = arith.maximumf %96, %98 : vector<16x32xf32>
    %cst_38 = arith.constant -1.000000e+30 : f32
    %100 = vector.broadcast %cst_38 : f32 to vector<16x32xf32>
    %101 = arith.select %43, %99, %100 : vector<16x32xi1>, vector<16x32xf32>
    %c1_39 = arith.constant 1 : index
    %c0_40 = arith.constant 0 : index
    %c0_41 = arith.constant 0 : index
    %102 = vector.load %arg9[%c1_39, %c0_40, %c0_41] : memref<4x16x1xf32, #tpu.memory_space<vmem>>, vector<1x16x1xf32>
    %103 = vector.shape_cast %102 : vector<1x16x1xf32> to vector<16x1xf32>
    %cst_42 = arith.constant dense<0xFF800000> : vector<16xf32>
    %104 = vector.multi_reduction <maximumf>, %101, %cst_42 [1] : vector<16x32xf32> to vector<16xf32>
    %105 = vector.shape_cast %104 : vector<16xf32> to vector<16x1xf32>
    %106 = arith.maximumf %103, %105 : vector<16x1xf32>
    %107 = arith.subf %103, %106 : vector<16x1xf32>
    %108 = math.exp %107 : vector<16x1xf32>
    %109 = vector.broadcast %106 : vector<16x1xf32> to vector<16x32xf32>
    %110 = arith.subf %101, %109 : vector<16x32xf32>
    %111 = math.exp %110 : vector<16x32xf32>
    %cst_43 = arith.constant 0.000000e+00 : f32
    %112 = vector.broadcast %cst_43 : f32 to vector<16x32xf32>
    %113 = arith.select %43, %111, %112 : vector<16x32xi1>, vector<16x32xf32>
    %c1_44 = arith.constant 1 : index
    %c0_45 = arith.constant 0 : index
    %c0_46 = arith.constant 0 : index
    %114 = vector.load %arg10[%c1_44, %c0_45, %c0_46] : memref<4x16x1xf32, #tpu.memory_space<vmem>>, vector<1x16x1xf32>
    %115 = vector.shape_cast %114 : vector<1x16x1xf32> to vector<16x1xf32>
    %116 = arith.mulf %108, %115 : vector<16x1xf32>
    %cst_47 = arith.constant dense<0.000000e+00> : vector<16xf32>
    %117 = vector.multi_reduction <add>, %113, %cst_47 [1] : vector<16x32xf32> to vector<16xf32>
    %118 = vector.shape_cast %117 : vector<16xf32> to vector<16x1xf32>
    %119 = arith.addf %116, %118 : vector<16x1xf32>
    %c1_48 = arith.constant 1 : index
    %c0_49 = arith.constant 0 : index
    %c0_50 = arith.constant 0 : index
    %120 = vector.load %arg10[%c1_48, %c0_49, %c0_50] : memref<4x16x1xf32, #tpu.memory_space<vmem>>, vector<1x16x1xf32>
    %121 = vector.shape_cast %120 : vector<1x16x1xf32> to vector<16x1xf32>
    %122 = vector.shape_cast %119 : vector<16x1xf32> to vector<1x16x1xf32>
    tpu.vector_store %arg10[%c1_48, %c0_49, %c0_50], %122 {strides = array<i32>} : memref<4x16x1xf32, #tpu.memory_space<vmem>>, vector<1x16x1xf32>,
    %123 = arith.truncf %113 : vector<16x32xf32> to vector<16x32xbf16>
    %124 = vector.extract_strided_slice %44 {offsets = [0, 64], sizes = [32, 64], strides = [1, 1]} : vector<32x256xbf16> to vector<32x64xbf16>
    %cst_51 = arith.constant dense<0.000000e+00> : vector<16x64xf32>
    %125 = tpu.matmul %123, %124, %cst_51 {dimension_numbers = #tpu.dot_dimension_numbers<[1], [0], [0], [1], [0, 0, 1, 1], [], []>} : vector<16x32xbf16>, vector<32x64xbf16>, vector<16x64xf32> -> vector<16x64xf32>
    %c1_52 = arith.constant 1 : index
    %c0_53 = arith.constant 0 : index
    %c0_54 = arith.constant 0 : index
    %126 = vector.load %arg11[%c1_52, %c0_53, %c0_54] : memref<4x16x64xf32, #tpu.memory_space<vmem>>, vector<1x16x64xf32>
    %127 = vector.shape_cast %126 : vector<1x16x64xf32> to vector<16x64xf32>
    %128 = vector.broadcast %108 : vector<16x1xf32> to vector<16x64xf32>
    %129 = arith.mulf %128, %127 : vector<16x64xf32>
    %130 = arith.addf %129, %125 : vector<16x64xf32>
    %c1_55 = arith.constant 1 : index
    %c0_56 = arith.constant 0 : index
    %c0_57 = arith.constant 0 : index
    %131 = vector.load %arg11[%c1_55, %c0_56, %c0_57] : memref<4x16x64xf32, #tpu.memory_space<vmem>>, vector<1x16x64xf32>
    %132 = vector.shape_cast %131 : vector<1x16x64xf32> to vector<16x64xf32>
    %133 = vector.shape_cast %130 : vector<16x64xf32> to vector<1x16x64xf32>
    tpu.vector_store %arg11[%c1_55, %c0_56, %c0_57], %133 {strides = array<i32>} : memref<4x16x64xf32, #tpu.memory_space<vmem>>, vector<1x16x64xf32>,
    %c1_58 = arith.constant 1 : index
    %c0_59 = arith.constant 0 : index
    %c0_60 = arith.constant 0 : index
    %134 = vector.load %arg9[%c1_58, %c0_59, %c0_60] : memref<4x16x1xf32, #tpu.memory_space<vmem>>, vector<1x16x1xf32>
    %135 = vector.shape_cast %134 : vector<1x16x1xf32> to vector<16x1xf32>
    %136 = vector.shape_cast %106 : vector<16x1xf32> to vector<1x16x1xf32>
    tpu.vector_store %arg9[%c1_58, %c0_59, %c0_60], %136 {strides = array<i32>} : memref<4x16x1xf32, #tpu.memory_space<vmem>>, vector<1x16x1xf32>,
    %137 = vector.extract_strided_slice %45 {offsets = [0, 6], sizes = [16, 1], strides = [1, 1]} : vector<16x128xf32> to vector<16x1xf32>
    %138 = vector.extract_strided_slice %46 {offsets = [2, 0], sizes = [1, 32], strides = [1, 1]} : vector<4x32xf32> to vector<1x32xf32>
    %139 = vector.broadcast %137 : vector<16x1xf32> to vector<16x32xf32>
    %140 = vector.broadcast %138 : vector<1x32xf32> to vector<16x32xf32>
    %141 = arith.addf %139, %140 : vector<16x32xf32>
    %cst_61 = arith.constant 2.000000e-01 : f32
    %142 = vector.broadcast %cst_61 : f32 to vector<16x32xf32>
    %143 = arith.mulf %142, %141 : vector<16x32xf32>
    %144 = arith.maximumf %141, %143 : vector<16x32xf32>
    %cst_62 = arith.constant -1.000000e+30 : f32
    %145 = vector.broadcast %cst_62 : f32 to vector<16x32xf32>
    %146 = arith.select %43, %144, %145 : vector<16x32xi1>, vector<16x32xf32>
    %c2_63 = arith.constant 2 : index
    %c0_64 = arith.constant 0 : index
    %c0_65 = arith.constant 0 : index
    %147 = vector.load %arg9[%c2_63, %c0_64, %c0_65] : memref<4x16x1xf32, #tpu.memory_space<vmem>>, vector<1x16x1xf32>
    %148 = vector.shape_cast %147 : vector<1x16x1xf32> to vector<16x1xf32>
    %cst_66 = arith.constant dense<0xFF800000> : vector<16xf32>
    %149 = vector.multi_reduction <maximumf>, %146, %cst_66 [1] : vector<16x32xf32> to vector<16xf32>
    %150 = vector.shape_cast %149 : vector<16xf32> to vector<16x1xf32>
    %151 = arith.maximumf %148, %150 : vector<16x1xf32>
    %152 = arith.subf %148, %151 : vector<16x1xf32>
    %153 = math.exp %152 : vector<16x1xf32>
    %154 = vector.broadcast %151 : vector<16x1xf32> to vector<16x32xf32>
    %155 = arith.subf %146, %154 : vector<16x32xf32>
    %156 = math.exp %155 : vector<16x32xf32>
    %cst_67 = arith.constant 0.000000e+00 : f32
    %157 = vector.broadcast %cst_67 : f32 to vector<16x32xf32>
    %158 = arith.select %43, %156, %157 : vector<16x32xi1>, vector<16x32xf32>
    %c2_68 = arith.constant 2 : index
    %c0_69 = arith.constant 0 : index
    %c0_70 = arith.constant 0 : index
    %159 = vector.load %arg10[%c2_68, %c0_69, %c0_70] : memref<4x16x1xf32, #tpu.memory_space<vmem>>, vector<1x16x1xf32>
    %160 = vector.shape_cast %159 : vector<1x16x1xf32> to vector<16x1xf32>
    %161 = arith.mulf %153, %160 : vector<16x1xf32>
    %cst_71 = arith.constant dense<0.000000e+00> : vector<16xf32>
    %162 = vector.multi_reduction <add>, %158, %cst_71 [1] : vector<16x32xf32> to vector<16xf32>
    %163 = vector.shape_cast %162 : vector<16xf32> to vector<16x1xf32>
    %164 = arith.addf %161, %163 : vector<16x1xf32>
    %c2_72 = arith.constant 2 : index
    %c0_73 = arith.constant 0 : index
    %c0_74 = arith.constant 0 : index
    %165 = vector.load %arg10[%c2_72, %c0_73, %c0_74] : memref<4x16x1xf32, #tpu.memory_space<vmem>>, vector<1x16x1xf32>
    %166 = vector.shape_cast %165 : vector<1x16x1xf32> to vector<16x1xf32>
    %167 = vector.shape_cast %164 : vector<16x1xf32> to vector<1x16x1xf32>
    tpu.vector_store %arg10[%c2_72, %c0_73, %c0_74], %167 {strides = array<i32>} : memref<4x16x1xf32, #tpu.memory_space<vmem>>, vector<1x16x1xf32>,
    %168 = arith.truncf %158 : vector<16x32xf32> to vector<16x32xbf16>
    %169 = vector.extract_strided_slice %44 {offsets = [0, 128], sizes = [32, 64], strides = [1, 1]} : vector<32x256xbf16> to vector<32x64xbf16>
    %cst_75 = arith.constant dense<0.000000e+00> : vector<16x64xf32>
    %170 = tpu.matmul %168, %169, %cst_75 {dimension_numbers = #tpu.dot_dimension_numbers<[1], [0], [0], [1], [0, 0, 1, 1], [], []>} : vector<16x32xbf16>, vector<32x64xbf16>, vector<16x64xf32> -> vector<16x64xf32>
    %c2_76 = arith.constant 2 : index
    %c0_77 = arith.constant 0 : index
    %c0_78 = arith.constant 0 : index
    %171 = vector.load %arg11[%c2_76, %c0_77, %c0_78] : memref<4x16x64xf32, #tpu.memory_space<vmem>>, vector<1x16x64xf32>
    %172 = vector.shape_cast %171 : vector<1x16x64xf32> to vector<16x64xf32>
    %173 = vector.broadcast %153 : vector<16x1xf32> to vector<16x64xf32>
    %174 = arith.mulf %173, %172 : vector<16x64xf32>
    %175 = arith.addf %174, %170 : vector<16x64xf32>
    %c2_79 = arith.constant 2 : index
    %c0_80 = arith.constant 0 : index
    %c0_81 = arith.constant 0 : index
    %176 = vector.load %arg11[%c2_79, %c0_80, %c0_81] : memref<4x16x64xf32, #tpu.memory_space<vmem>>, vector<1x16x64xf32>
    %177 = vector.shape_cast %176 : vector<1x16x64xf32> to vector<16x64xf32>
    %178 = vector.shape_cast %175 : vector<16x64xf32> to vector<1x16x64xf32>
    tpu.vector_store %arg11[%c2_79, %c0_80, %c0_81], %178 {strides = array<i32>} : memref<4x16x64xf32, #tpu.memory_space<vmem>>, vector<1x16x64xf32>,
    %c2_82 = arith.constant 2 : index
    %c0_83 = arith.constant 0 : index
    %c0_84 = arith.constant 0 : index
    %179 = vector.load %arg9[%c2_82, %c0_83, %c0_84] : memref<4x16x1xf32, #tpu.memory_space<vmem>>, vector<1x16x1xf32>
    %180 = vector.shape_cast %179 : vector<1x16x1xf32> to vector<16x1xf32>
    %181 = vector.shape_cast %151 : vector<16x1xf32> to vector<1x16x1xf32>
    tpu.vector_store %arg9[%c2_82, %c0_83, %c0_84], %181 {strides = array<i32>} : memref<4x16x1xf32, #tpu.memory_space<vmem>>, vector<1x16x1xf32>,
    %182 = vector.extract_strided_slice %45 {offsets = [0, 7], sizes = [16, 1], strides = [1, 1]} : vector<16x128xf32> to vector<16x1xf32>
    %183 = vector.extract_strided_slice %46 {offsets = [3, 0], sizes = [1, 32], strides = [1, 1]} : vector<4x32xf32> to vector<1x32xf32>
    %184 = vector.broadcast %182 : vector<16x1xf32> to vector<16x32xf32>
    %185 = vector.broadcast %183 : vector<1x32xf32> to vector<16x32xf32>
    %186 = arith.addf %184, %185 : vector<16x32xf32>
    %cst_85 = arith.constant 2.000000e-01 : f32
    %187 = vector.broadcast %cst_85 : f32 to vector<16x32xf32>
    %188 = arith.mulf %187, %186 : vector<16x32xf32>
    %189 = arith.maximumf %186, %188 : vector<16x32xf32>
    %cst_86 = arith.constant -1.000000e+30 : f32
    %190 = vector.broadcast %cst_86 : f32 to vector<16x32xf32>
    %191 = arith.select %43, %189, %190 : vector<16x32xi1>, vector<16x32xf32>
    %c3 = arith.constant 3 : index
    %c0_87 = arith.constant 0 : index
    %c0_88 = arith.constant 0 : index
    %192 = vector.load %arg9[%c3, %c0_87, %c0_88] : memref<4x16x1xf32, #tpu.memory_space<vmem>>, vector<1x16x1xf32>
    %193 = vector.shape_cast %192 : vector<1x16x1xf32> to vector<16x1xf32>
    %cst_89 = arith.constant dense<0xFF800000> : vector<16xf32>
    %194 = vector.multi_reduction <maximumf>, %191, %cst_89 [1] : vector<16x32xf32> to vector<16xf32>
    %195 = vector.shape_cast %194 : vector<16xf32> to vector<16x1xf32>
    %196 = arith.maximumf %193, %195 : vector<16x1xf32>
    %197 = arith.subf %193, %196 : vector<16x1xf32>
    %198 = math.exp %197 : vector<16x1xf32>
    %199 = vector.broadcast %196 : vector<16x1xf32> to vector<16x32xf32>
    %200 = arith.subf %191, %199 : vector<16x32xf32>
    %201 = math.exp %200 : vector<16x32xf32>
    %cst_90 = arith.constant 0.000000e+00 : f32
    %202 = vector.broadcast %cst_90 : f32 to vector<16x32xf32>
    %203 = arith.select %43, %201, %202 : vector<16x32xi1>, vector<16x32xf32>
    %c3_91 = arith.constant 3 : index
    %c0_92 = arith.constant 0 : index
    %c0_93 = arith.constant 0 : index
    %204 = vector.load %arg10[%c3_91, %c0_92, %c0_93] : memref<4x16x1xf32, #tpu.memory_space<vmem>>, vector<1x16x1xf32>
    %205 = vector.shape_cast %204 : vector<1x16x1xf32> to vector<16x1xf32>
    %206 = arith.mulf %198, %205 : vector<16x1xf32>
    %cst_94 = arith.constant dense<0.000000e+00> : vector<16xf32>
    %207 = vector.multi_reduction <add>, %203, %cst_94 [1] : vector<16x32xf32> to vector<16xf32>
    %208 = vector.shape_cast %207 : vector<16xf32> to vector<16x1xf32>
    %209 = arith.addf %206, %208 : vector<16x1xf32>
    %c3_95 = arith.constant 3 : index
    %c0_96 = arith.constant 0 : index
    %c0_97 = arith.constant 0 : index
    %210 = vector.load %arg10[%c3_95, %c0_96, %c0_97] : memref<4x16x1xf32, #tpu.memory_space<vmem>>, vector<1x16x1xf32>
    %211 = vector.shape_cast %210 : vector<1x16x1xf32> to vector<16x1xf32>
    %212 = vector.shape_cast %209 : vector<16x1xf32> to vector<1x16x1xf32>
    tpu.vector_store %arg10[%c3_95, %c0_96, %c0_97], %212 {strides = array<i32>} : memref<4x16x1xf32, #tpu.memory_space<vmem>>, vector<1x16x1xf32>,
    %213 = arith.truncf %203 : vector<16x32xf32> to vector<16x32xbf16>
    %214 = vector.extract_strided_slice %44 {offsets = [0, 192], sizes = [32, 64], strides = [1, 1]} : vector<32x256xbf16> to vector<32x64xbf16>
    %cst_98 = arith.constant dense<0.000000e+00> : vector<16x64xf32>
    %215 = tpu.matmul %213, %214, %cst_98 {dimension_numbers = #tpu.dot_dimension_numbers<[1], [0], [0], [1], [0, 0, 1, 1], [], []>} : vector<16x32xbf16>, vector<32x64xbf16>, vector<16x64xf32> -> vector<16x64xf32>
    %c3_99 = arith.constant 3 : index
    %c0_100 = arith.constant 0 : index
    %c0_101 = arith.constant 0 : index
    %216 = vector.load %arg11[%c3_99, %c0_100, %c0_101] : memref<4x16x64xf32, #tpu.memory_space<vmem>>, vector<1x16x64xf32>
    %217 = vector.shape_cast %216 : vector<1x16x64xf32> to vector<16x64xf32>
    %218 = vector.broadcast %198 : vector<16x1xf32> to vector<16x64xf32>
    %219 = arith.mulf %218, %217 : vector<16x64xf32>
    %220 = arith.addf %219, %215 : vector<16x64xf32>
    %c3_102 = arith.constant 3 : index
    %c0_103 = arith.constant 0 : index
    %c0_104 = arith.constant 0 : index
    %221 = vector.load %arg11[%c3_102, %c0_103, %c0_104] : memref<4x16x64xf32, #tpu.memory_space<vmem>>, vector<1x16x64xf32>
    %222 = vector.shape_cast %221 : vector<1x16x64xf32> to vector<16x64xf32>
    %223 = vector.shape_cast %220 : vector<16x64xf32> to vector<1x16x64xf32>
    tpu.vector_store %arg11[%c3_102, %c0_103, %c0_104], %223 {strides = array<i32>} : memref<4x16x64xf32, #tpu.memory_space<vmem>>, vector<1x16x64xf32>,
    %c3_105 = arith.constant 3 : index
    %c0_106 = arith.constant 0 : index
    %c0_107 = arith.constant 0 : index
    %224 = vector.load %arg9[%c3_105, %c0_106, %c0_107] : memref<4x16x1xf32, #tpu.memory_space<vmem>>, vector<1x16x1xf32>
    %225 = vector.shape_cast %224 : vector<1x16x1xf32> to vector<16x1xf32>
    %226 = vector.shape_cast %196 : vector<16x1xf32> to vector<1x16x1xf32>
    tpu.vector_store %arg9[%c3_105, %c0_106, %c0_107], %226 {strides = array<i32>} : memref<4x16x1xf32, #tpu.memory_space<vmem>>, vector<1x16x1xf32>,
    %c0_i32_108 = arith.constant 0 : i32
    %227 = arith.cmpi eq, %arg1, %c0_i32_108 : i32
    %228 = arith.extui %227 : i1 to i32
    %c0_i32_109 = arith.constant 0 : i32
    %229 = arith.cmpi ne, %228, %c0_i32_109 : i32
    scf.if %229 {
      %c0_110 = arith.constant 0 : index
      %c0_111 = arith.constant 0 : index
      %c0_112 = arith.constant 0 : index
      %230 = vector.load %arg10[%c0_110, %c0_111, %c0_112] : memref<4x16x1xf32, #tpu.memory_space<vmem>>, vector<1x16x1xf32>
      %231 = vector.shape_cast %230 : vector<1x16x1xf32> to vector<16x1xf32>
      %232 = tpu.reciprocal %231 {approx = true} : vector<16x1xf32> -> vector<16x1xf32>
      %c0_113 = arith.constant 0 : index
      %c0_114 = arith.constant 0 : index
      %c0_115 = arith.constant 0 : index
      %233 = vector.load %arg11[%c0_113, %c0_114, %c0_115] : memref<4x16x64xf32, #tpu.memory_space<vmem>>, vector<1x16x64xf32>
      %234 = vector.shape_cast %233 : vector<1x16x64xf32> to vector<16x64xf32>
      %235 = vector.broadcast %232 : vector<16x1xf32> to vector<16x64xf32>
      %236 = arith.mulf %234, %235 : vector<16x64xf32>
      %c1_116 = arith.constant 1 : index
      %c0_117 = arith.constant 0 : index
      %c0_118 = arith.constant 0 : index
      %237 = vector.load %arg10[%c1_116, %c0_117, %c0_118] : memref<4x16x1xf32, #tpu.memory_space<vmem>>, vector<1x16x1xf32>
      %238 = vector.shape_cast %237 : vector<1x16x1xf32> to vector<16x1xf32>
      %239 = tpu.reciprocal %238 {approx = true} : vector<16x1xf32> -> vector<16x1xf32>
      %c1_119 = arith.constant 1 : index
      %c0_120 = arith.constant 0 : index
      %c0_121 = arith.constant 0 : index
      %240 = vector.load %arg11[%c1_119, %c0_120, %c0_121] : memref<4x16x64xf32, #tpu.memory_space<vmem>>, vector<1x16x64xf32>
      %241 = vector.shape_cast %240 : vector<1x16x64xf32> to vector<16x64xf32>
      %242 = vector.broadcast %239 : vector<16x1xf32> to vector<16x64xf32>
      %243 = arith.mulf %241, %242 : vector<16x64xf32>
      %c2_122 = arith.constant 2 : index
      %c0_123 = arith.constant 0 : index
      %c0_124 = arith.constant 0 : index
      %244 = vector.load %arg10[%c2_122, %c0_123, %c0_124] : memref<4x16x1xf32, #tpu.memory_space<vmem>>, vector<1x16x1xf32>
      %245 = vector.shape_cast %244 : vector<1x16x1xf32> to vector<16x1xf32>
      %246 = tpu.reciprocal %245 {approx = true} : vector<16x1xf32> -> vector<16x1xf32>
      %c2_125 = arith.constant 2 : index
      %c0_126 = arith.constant 0 : index
      %c0_127 = arith.constant 0 : index
      %247 = vector.load %arg11[%c2_125, %c0_126, %c0_127] : memref<4x16x64xf32, #tpu.memory_space<vmem>>, vector<1x16x64xf32>
      %248 = vector.shape_cast %247 : vector<1x16x64xf32> to vector<16x64xf32>
      %249 = vector.broadcast %246 : vector<16x1xf32> to vector<16x64xf32>
      %250 = arith.mulf %248, %249 : vector<16x64xf32>
      %c3_128 = arith.constant 3 : index
      %c0_129 = arith.constant 0 : index
      %c0_130 = arith.constant 0 : index
      %251 = vector.load %arg10[%c3_128, %c0_129, %c0_130] : memref<4x16x1xf32, #tpu.memory_space<vmem>>, vector<1x16x1xf32>
      %252 = vector.shape_cast %251 : vector<1x16x1xf32> to vector<16x1xf32>
      %253 = tpu.reciprocal %252 {approx = true} : vector<16x1xf32> -> vector<16x1xf32>
      %c3_131 = arith.constant 3 : index
      %c0_132 = arith.constant 0 : index
      %c0_133 = arith.constant 0 : index
      %254 = vector.load %arg11[%c3_131, %c0_132, %c0_133] : memref<4x16x64xf32, #tpu.memory_space<vmem>>, vector<1x16x64xf32>
      %255 = vector.shape_cast %254 : vector<1x16x64xf32> to vector<16x64xf32>
      %256 = vector.broadcast %253 : vector<16x1xf32> to vector<16x64xf32>
      %257 = arith.mulf %255, %256 : vector<16x64xf32>
      %258 = tpu.concatenate %236, %243, %250, %257 in 1 : vector<16x64xf32>, vector<16x64xf32>, vector<16x64xf32>, vector<16x64xf32> -> vector<16x256xf32>
      %c0_134 = arith.constant 0 : index
      %c0_135 = arith.constant 0 : index
      %259 = vector.load %arg7[%c0_134, %c0_135] : memref<1x256xf32, #tpu.memory_space<vmem>>, vector<1x256xf32>
      %260 = vector.broadcast %259 : vector<1x256xf32> to vector<16x256xf32>
      %261 = arith.addf %258, %260 : vector<16x256xf32>
      %cst_136 = arith.constant 0.000000e+00 : f32
      %262 = vector.broadcast %cst_136 : f32 to vector<16x256xf32>
      %263 = arith.cmpf ogt, %261, %262 : vector<16x256xf32>
      %cst_137 = arith.constant 0.000000e+00 : f32
      %264 = vector.broadcast %cst_137 : f32 to vector<16x256xf32>
      %265 = arith.minimumf %261, %264 : vector<16x256xf32>
      %266 = math.exp %265 : vector<16x256xf32>
      %cst_138 = arith.constant 1.000000e+00 : f32
      %267 = vector.broadcast %cst_138 : f32 to vector<16x256xf32>
      %268 = arith.subf %266, %267 : vector<16x256xf32>
      %269 = arith.select %263, %261, %268 : vector<16x256xi1>, vector<16x256xf32>
      %270 = arith.truncf %269 : vector<16x256xf32> to vector<16x256xbf16>
      %c0_139 = arith.constant 0 : index
      %c0_140 = arith.constant 0 : index
      %271 = vector.load %arg8[%c0_139, %c0_140] : memref<16x256xbf16, #tpu.memory_space<vmem>>, vector<16x256xbf16>
      tpu.vector_store %arg8[%c0_139, %c0_140], %270 {strides = array<i32>} : memref<16x256xbf16, #tpu.memory_space<vmem>>, vector<16x256xbf16>,
    } else {
    }
    return
  }
  func.func @transform_0(%arg0: i32, %arg1: i32, %arg2: memref<2x1xi32, #tpu.memory_space<smem>>) -> (i32, i32) {
    %0 = arith.index_cast %arg0 : i32 to index
    %1 = arith.index_cast %arg1 : i32 to index
    %2 = memref.load %arg2[%0, %1] : memref<2x1xi32, #tpu.memory_space<smem>>
    %c0_i32 = arith.constant 0 : i32
    %c0_i32_0 = arith.constant 0 : i32
    return %2, %c0_i32 : i32, i32
  }
  func.func @transform_1(%arg0: i32, %arg1: i32, %arg2: memref<2x1xi32, #tpu.memory_space<smem>>) -> (i32, i32) {
    %c0_i32 = arith.constant 0 : i32
    %c0_i32_0 = arith.constant 0 : i32
    return %arg0, %c0_i32 : i32, i32
  }
  func.func @transform_2(%arg0: i32, %arg1: i32, %arg2: memref<2x1xi32, #tpu.memory_space<smem>>) -> (i32, i32) {
    %0 = arith.index_cast %arg0 : i32 to index
    %1 = arith.index_cast %arg1 : i32 to index
    %2 = memref.load %arg2[%0, %1] : memref<2x1xi32, #tpu.memory_space<smem>>
    %c0_i32 = arith.constant 0 : i32
    %c0_i32_0 = arith.constant 0 : i32
    return %c0_i32, %2 : i32, i32
  }
  func.func @transform_3(%arg0: i32, %arg1: i32, %arg2: memref<2x1xi32, #tpu.memory_space<smem>>) -> (i32, i32) {
    %c0_i32 = arith.constant 0 : i32
    %c0_i32_0 = arith.constant 0 : i32
    return %arg0, %c0_i32 : i32, i32
  }
  func.func @transform_4(%arg0: i32, %arg1: i32, %arg2: memref<2x1xi32, #tpu.memory_space<smem>>) -> (i32, i32) {
    %c0_i32 = arith.constant 0 : i32
    %c0_i32_0 = arith.constant 0 : i32
    %c0_i32_1 = arith.constant 0 : i32
    return %c0_i32, %c0_i32_0 : i32, i32
  }
  func.func @transform_5(%arg0: i32, %arg1: i32, %arg2: memref<2x1xi32, #tpu.memory_space<smem>>) -> (i32, i32) {
    %c0_i32 = arith.constant 0 : i32
    %c0_i32_0 = arith.constant 0 : i32
    return %arg0, %c0_i32 : i32, i32
  }
}

module attributes {stable_mosaic.version = 11 : i64} {
  func.func @_linear_kernel(%arg0: i32, %arg1: memref<16x256xbf16, #tpu.memory_space<vmem>>, %arg2: memref<256x384xbf16, #tpu.memory_space<vmem>>, %arg3: memref<16x256xbf16, #tpu.memory_space<vmem>>, %arg4: memref<16x128xf32, #tpu.memory_space<vmem>>) attributes {dimension_semantics = [#tpu.dimension_semantics<parallel>], iteration_bounds = array<i64: 2>, scalar_prefetch = 0 : i64, scratch_operands = 0 : i64, tpu.core_type = #tpu.core_type<tc>, window_params = [{transform_indices = @transform_0, window_bounds = array<i64: 16, 256>}, {pipeline_mode = #tpu.pipeline_mode<synchronous>, transform_indices = @transform_1, window_bounds = array<i64: 256, 384>}, {transform_indices = @transform_2, window_bounds = array<i64: 16, 256>}, {transform_indices = @transform_3, window_bounds = array<i64: 16, 128>}]} {
    %c0 = arith.constant 0 : index
    %c0_0 = arith.constant 0 : index
    %0 = vector.load %arg1[%c0, %c0_0] : memref<16x256xbf16, #tpu.memory_space<vmem>>, vector<16x256xbf16>
    %c0_1 = arith.constant 0 : index
    %c0_2 = arith.constant 0 : index
    %1 = vector.load %arg2[%c0_1, %c0_2] : memref<256x384xbf16, #tpu.memory_space<vmem>>, vector<256x384xbf16>
    %cst = arith.constant dense<0.000000e+00> : vector<16x384xf32>
    %2 = tpu.matmul %0, %1, %cst {dimension_numbers = #tpu.dot_dimension_numbers<[1], [0], [0], [1], [0, 0, 1, 1], [], []>} : vector<16x256xbf16>, vector<256x384xbf16>, vector<16x384xf32> -> vector<16x384xf32>
    %3 = vector.extract_strided_slice %2 {offsets = [0, 0], sizes = [16, 256], strides = [1, 1]} : vector<16x384xf32> to vector<16x256xf32>
    %4 = arith.truncf %3 : vector<16x256xf32> to vector<16x256xbf16>
    %c0_3 = arith.constant 0 : index
    %c0_4 = arith.constant 0 : index
    %5 = vector.load %arg3[%c0_3, %c0_4] : memref<16x256xbf16, #tpu.memory_space<vmem>>, vector<16x256xbf16>
    tpu.vector_store %arg3[%c0_3, %c0_4], %4 {strides = array<i32>} : memref<16x256xbf16, #tpu.memory_space<vmem>>, vector<16x256xbf16>,
    %6 = vector.extract_strided_slice %2 {offsets = [0, 256], sizes = [16, 128], strides = [1, 1]} : vector<16x384xf32> to vector<16x128xf32>
    %c0_5 = arith.constant 0 : index
    %c0_6 = arith.constant 0 : index
    %7 = vector.load %arg4[%c0_5, %c0_6] : memref<16x128xf32, #tpu.memory_space<vmem>>, vector<16x128xf32>
    tpu.vector_store %arg4[%c0_5, %c0_6], %6 {strides = array<i32>} : memref<16x128xf32, #tpu.memory_space<vmem>>, vector<16x128xf32>,
    return
  }
  func.func @transform_0(%arg0: i32) -> (i32, i32) {
    %c0_i32 = arith.constant 0 : i32
    %c0_i32_0 = arith.constant 0 : i32
    return %arg0, %c0_i32 : i32, i32
  }
  func.func @transform_1(%arg0: i32) -> (i32, i32) {
    %c0_i32 = arith.constant 0 : i32
    %c0_i32_0 = arith.constant 0 : i32
    %c0_i32_1 = arith.constant 0 : i32
    return %c0_i32, %c0_i32_0 : i32, i32
  }
  func.func @transform_2(%arg0: i32) -> (i32, i32) {
    %c0_i32 = arith.constant 0 : i32
    %c0_i32_0 = arith.constant 0 : i32
    return %arg0, %c0_i32 : i32, i32
  }
  func.func @transform_3(%arg0: i32) -> (i32, i32) {
    %c0_i32 = arith.constant 0 : i32
    %c0_i32_0 = arith.constant 0 : i32
    return %arg0, %c0_i32 : i32, i32
  }
}

module attributes {stable_mosaic.version = 11 : i64} {
  func.func @_linear_kernel(%arg0: i32, %arg1: memref<16x256xbf16, #tpu.memory_space<vmem>>, %arg2: memref<256x256xbf16, #tpu.memory_space<vmem>>, %arg3: memref<16x128xbf16, #tpu.memory_space<vmem>>, %arg4: memref<16x128xf32, #tpu.memory_space<vmem>>) attributes {dimension_semantics = [#tpu.dimension_semantics<parallel>], iteration_bounds = array<i64: 2>, scalar_prefetch = 0 : i64, scratch_operands = 0 : i64, tpu.core_type = #tpu.core_type<tc>, window_params = [{transform_indices = @transform_0, window_bounds = array<i64: 16, 256>}, {pipeline_mode = #tpu.pipeline_mode<synchronous>, transform_indices = @transform_1, window_bounds = array<i64: 256, 256>}, {transform_indices = @transform_2, window_bounds = array<i64: 16, 128>}, {transform_indices = @transform_3, window_bounds = array<i64: 16, 128>}]} {
    %c0 = arith.constant 0 : index
    %c0_0 = arith.constant 0 : index
    %0 = vector.load %arg1[%c0, %c0_0] : memref<16x256xbf16, #tpu.memory_space<vmem>>, vector<16x256xbf16>
    %c0_1 = arith.constant 0 : index
    %c0_2 = arith.constant 0 : index
    %1 = vector.load %arg2[%c0_1, %c0_2] : memref<256x256xbf16, #tpu.memory_space<vmem>>, vector<256x256xbf16>
    %cst = arith.constant dense<0.000000e+00> : vector<16x256xf32>
    %2 = tpu.matmul %0, %1, %cst {dimension_numbers = #tpu.dot_dimension_numbers<[1], [0], [0], [1], [0, 0, 1, 1], [], []>} : vector<16x256xbf16>, vector<256x256xbf16>, vector<16x256xf32> -> vector<16x256xf32>
    %3 = vector.extract_strided_slice %2 {offsets = [0, 0], sizes = [16, 128], strides = [1, 1]} : vector<16x256xf32> to vector<16x128xf32>
    %4 = arith.truncf %3 : vector<16x128xf32> to vector<16x128xbf16>
    %c0_3 = arith.constant 0 : index
    %c0_4 = arith.constant 0 : index
    %5 = vector.load %arg3[%c0_3, %c0_4] : memref<16x128xbf16, #tpu.memory_space<vmem>>, vector<16x128xbf16>
    tpu.vector_store %arg3[%c0_3, %c0_4], %4 {strides = array<i32>} : memref<16x128xbf16, #tpu.memory_space<vmem>>, vector<16x128xbf16>,
    %6 = vector.extract_strided_slice %2 {offsets = [0, 128], sizes = [16, 128], strides = [1, 1]} : vector<16x256xf32> to vector<16x128xf32>
    %c0_5 = arith.constant 0 : index
    %c0_6 = arith.constant 0 : index
    %7 = vector.load %arg4[%c0_5, %c0_6] : memref<16x128xf32, #tpu.memory_space<vmem>>, vector<16x128xf32>
    tpu.vector_store %arg4[%c0_5, %c0_6], %6 {strides = array<i32>} : memref<16x128xf32, #tpu.memory_space<vmem>>, vector<16x128xf32>,
    return
  }
  func.func @transform_0(%arg0: i32) -> (i32, i32) {
    %c0_i32 = arith.constant 0 : i32
    %c0_i32_0 = arith.constant 0 : i32
    return %arg0, %c0_i32 : i32, i32
  }
  func.func @transform_1(%arg0: i32) -> (i32, i32) {
    %c0_i32 = arith.constant 0 : i32
    %c0_i32_0 = arith.constant 0 : i32
    %c0_i32_1 = arith.constant 0 : i32
    return %c0_i32, %c0_i32_0 : i32, i32
  }
  func.func @transform_2(%arg0: i32) -> (i32, i32) {
    %c0_i32 = arith.constant 0 : i32
    %c0_i32_0 = arith.constant 0 : i32
    return %arg0, %c0_i32 : i32, i32
  }
  func.func @transform_3(%arg0: i32) -> (i32, i32) {
    %c0_i32 = arith.constant 0 : i32
    %c0_i32_0 = arith.constant 0 : i32
    return %arg0, %c0_i32 : i32, i32
  }
}

module attributes {stable_mosaic.version = 11 : i64} {
  func.func @_gat_attn_kernel(%arg0: i32, %arg1: i32, %arg2: memref<2x1xi32, #tpu.memory_space<smem>>, %arg3: memref<32x128xbf16, #tpu.memory_space<vmem>>, %arg4: memref<16x128xf32, #tpu.memory_space<vmem>>, %arg5: memref<1x32xf32, #tpu.memory_space<vmem>>, %arg6: memref<16x8xi32, #tpu.memory_space<vmem>>, %arg7: memref<1x128xf32, #tpu.memory_space<vmem>>, %arg8: memref<16x128xf32, #tpu.memory_space<vmem>>, %arg9: memref<1x16x1xf32, #tpu.memory_space<vmem>>, %arg10: memref<1x16x1xf32, #tpu.memory_space<vmem>>, %arg11: memref<1x16x128xf32, #tpu.memory_space<vmem>>) attributes {dimension_semantics = [#tpu.dimension_semantics<parallel>, #tpu.dimension_semantics<arbitrary>], iteration_bounds = array<i64: 2, 1>, scalar_prefetch = 1 : i64, scratch_operands = 3 : i64, tpu.core_type = #tpu.core_type<tc>, window_params = [{transform_indices = @transform_0, window_bounds = array<i64: 32, 128>}, {transform_indices = @transform_1, window_bounds = array<i64: 16, 128>}, {transform_indices = @transform_2, window_bounds = array<i64: 1, 32>}, {transform_indices = @transform_3, window_bounds = array<i64: 16, 8>}, {pipeline_mode = #tpu.pipeline_mode<synchronous>, transform_indices = @transform_4, window_bounds = array<i64: 1, 128>}, {transform_indices = @transform_5, window_bounds = array<i64: 16, 128>}]} {
    %c0_i32 = arith.constant 0 : i32
    %0 = arith.cmpi eq, %arg1, %c0_i32 : i32
    %1 = arith.extui %0 : i1 to i32
    %c0_i32_0 = arith.constant 0 : i32
    %2 = arith.cmpi ne, %1, %c0_i32_0 : i32
    scf.if %2 {
      %cst_39 = arith.constant -1.000000e+30 : f32
      %93 = vector.broadcast %cst_39 : f32 to vector<1x16x1xf32>
      %c0_40 = arith.constant 0 : index
      %c0_41 = arith.constant 0 : index
      %c0_42 = arith.constant 0 : index
      %94 = vector.load %arg9[%c0_40, %c0_41, %c0_42] : memref<1x16x1xf32, #tpu.memory_space<vmem>>, vector<1x16x1xf32>
      tpu.vector_store %arg9[%c0_40, %c0_41, %c0_42], %93 {strides = array<i32>} : memref<1x16x1xf32, #tpu.memory_space<vmem>>, vector<1x16x1xf32>,
      %cst_43 = arith.constant 0.000000e+00 : f32
      %95 = vector.broadcast %cst_43 : f32 to vector<1x16x1xf32>
      %c0_44 = arith.constant 0 : index
      %c0_45 = arith.constant 0 : index
      %c0_46 = arith.constant 0 : index
      %96 = vector.load %arg10[%c0_44, %c0_45, %c0_46] : memref<1x16x1xf32, #tpu.memory_space<vmem>>, vector<1x16x1xf32>
      tpu.vector_store %arg10[%c0_44, %c0_45, %c0_46], %95 {strides = array<i32>} : memref<1x16x1xf32, #tpu.memory_space<vmem>>, vector<1x16x1xf32>,
      %cst_47 = arith.constant 0.000000e+00 : f32
      %97 = vector.broadcast %cst_47 : f32 to vector<1x16x128xf32>
      %c0_48 = arith.constant 0 : index
      %c0_49 = arith.constant 0 : index
      %c0_50 = arith.constant 0 : index
      %98 = vector.load %arg11[%c0_48, %c0_49, %c0_50] : memref<1x16x128xf32, #tpu.memory_space<vmem>>, vector<1x16x128xf32>
      tpu.vector_store %arg11[%c0_48, %c0_49, %c0_50], %97 {strides = array<i32>} : memref<1x16x128xf32, #tpu.memory_space<vmem>>, vector<1x16x128xf32>,
    } else {
    }
    %3 = arith.index_cast %arg0 : i32 to index
    %4 = arith.index_cast %arg1 : i32 to index
    %5 = memref.load %arg2[%3, %4] : memref<2x1xi32, #tpu.memory_space<smem>>
    %6 = tpu.iota {dimensions = array<i32: 0>} : vector<16x32xi32>
    %c16_i32 = arith.constant 16 : i32
    %7 = arith.muli %arg0, %c16_i32 : i32
    %8 = vector.broadcast %7 : i32 to vector<16x32xi32>
    %9 = arith.addi %6, %8 : vector<16x32xi32>
    %10 = tpu.iota {dimensions = array<i32: 1>} : vector<16x32xi32>
    %c32_i32 = arith.constant 32 : i32
    %11 = arith.muli %5, %c32_i32 : i32
    %12 = vector.broadcast %11 : i32 to vector<16x32xi32>
    %13 = arith.addi %10, %12 : vector<16x32xi32>
    %14 = arith.subi %13, %9 : vector<16x32xi32>
    %c0 = arith.constant 0 : index
    %c0_1 = arith.constant 0 : index
    %15 = vector.load %arg6[%c0, %c0_1] : memref<16x8xi32, #tpu.memory_space<vmem>>, vector<16x1xi32>
    %c0_i32_2 = arith.constant 0 : i32
    %16 = vector.broadcast %c0_i32_2 : i32 to vector<16x1xi32>
    %17 = arith.cmpi sgt, %15, %16 : vector<16x1xi32>
    %c0_3 = arith.constant 0 : index
    %c1 = arith.constant 1 : index
    %18 = vector.load %arg6[%c0_3, %c1] : memref<16x8xi32, #tpu.memory_space<vmem>>, vector<16x1xi32>
    %c0_i32_4 = arith.constant 0 : i32
    %19 = vector.broadcast %c0_i32_4 : i32 to vector<16x1xi32>
    %20 = arith.cmpi sgt, %18, %19 : vector<16x1xi32>
    %c0_5 = arith.constant 0 : index
    %c2 = arith.constant 2 : index
    %21 = vector.load %arg6[%c0_5, %c2] : memref<16x8xi32, #tpu.memory_space<vmem>>, vector<16x1xi32>
    %c0_i32_6 = arith.constant 0 : i32
    %22 = vector.broadcast %c0_i32_6 : i32 to vector<16x1xi32>
    %23 = arith.cmpi sgt, %21, %22 : vector<16x1xi32>
    %c0_i32_7 = arith.constant 0 : i32
    %24 = vector.broadcast %c0_i32_7 : i32 to vector<16x32xi32>
    %25 = arith.cmpi eq, %14, %24 : vector<16x32xi32>
    %c-1_i32 = arith.constant -1 : i32
    %26 = vector.broadcast %c-1_i32 : i32 to vector<16x32xi32>
    %27 = arith.cmpi eq, %14, %26 : vector<16x32xi32>
    %28 = arith.ori %25, %27 : vector<16x32xi1>
    %c1_i32 = arith.constant 1 : i32
    %29 = vector.broadcast %c1_i32 : i32 to vector<16x32xi32>
    %30 = arith.cmpi eq, %14, %29 : vector<16x32xi32>
    %31 = vector.broadcast %17 : vector<16x1xi1> to vector<16x32xi1>
    %32 = arith.andi %30, %31 : vector<16x32xi1>
    %33 = arith.ori %28, %32 : vector<16x32xi1>
    %c4_i32 = arith.constant 4 : i32
    %34 = vector.broadcast %c4_i32 : i32 to vector<16x32xi32>
    %35 = arith.cmpi eq, %14, %34 : vector<16x32xi32>
    %36 = vector.broadcast %20 : vector<16x1xi1> to vector<16x32xi1>
    %37 = arith.andi %35, %36 : vector<16x32xi1>
    %38 = arith.ori %33, %37 : vector<16x32xi1>
    %c-4_i32 = arith.constant -4 : i32
    %39 = vector.broadcast %c-4_i32 : i32 to vector<16x32xi32>
    %40 = arith.cmpi eq, %14, %39 : vector<16x32xi32>
    %41 = vector.broadcast %23 : vector<16x1xi1> to vector<16x32xi1>
    %42 = arith.andi %40, %41 : vector<16x32xi1>
    %43 = arith.ori %38, %42 : vector<16x32xi1>
    %c0_8 = arith.constant 0 : index
    %c0_9 = arith.constant 0 : index
    %44 = vector.load %arg3[%c0_8, %c0_9] : memref<32x128xbf16, #tpu.memory_space<vmem>>, vector<32x128xbf16>
    %c0_10 = arith.constant 0 : index
    %c0_11 = arith.constant 0 : index
    %45 = vector.load %arg4[%c0_10, %c0_11] : memref<16x128xf32, #tpu.memory_space<vmem>>, vector<16x128xf32>
    %c0_12 = arith.constant 0 : index
    %c0_13 = arith.constant 0 : index
    %46 = vector.load %arg5[%c0_12, %c0_13] : memref<1x32xf32, #tpu.memory_space<vmem>>, vector<1x32xf32>
    %47 = vector.extract_strided_slice %45 {offsets = [0, 1], sizes = [16, 1], strides = [1, 1]} : vector<16x128xf32> to vector<16x1xf32>
    %48 = vector.broadcast %47 : vector<16x1xf32> to vector<16x32xf32>
    %49 = vector.broadcast %46 : vector<1x32xf32> to vector<16x32xf32>
    %50 = arith.addf %48, %49 : vector<16x32xf32>
    %cst = arith.constant 2.000000e-01 : f32
    %51 = vector.broadcast %cst : f32 to vector<16x32xf32>
    %52 = arith.mulf %51, %50 : vector<16x32xf32>
    %53 = arith.maximumf %50, %52 : vector<16x32xf32>
    %cst_14 = arith.constant -1.000000e+30 : f32
    %54 = vector.broadcast %cst_14 : f32 to vector<16x32xf32>
    %55 = arith.select %43, %53, %54 : vector<16x32xi1>, vector<16x32xf32>
    %c0_15 = arith.constant 0 : index
    %c0_16 = arith.constant 0 : index
    %c0_17 = arith.constant 0 : index
    %56 = vector.load %arg9[%c0_15, %c0_16, %c0_17] : memref<1x16x1xf32, #tpu.memory_space<vmem>>, vector<1x16x1xf32>
    %57 = vector.shape_cast %56 : vector<1x16x1xf32> to vector<16x1xf32>
    %cst_18 = arith.constant dense<0xFF800000> : vector<16xf32>
    %58 = vector.multi_reduction <maximumf>, %55, %cst_18 [1] : vector<16x32xf32> to vector<16xf32>
    %59 = vector.shape_cast %58 : vector<16xf32> to vector<16x1xf32>
    %60 = arith.maximumf %57, %59 : vector<16x1xf32>
    %61 = arith.subf %57, %60 : vector<16x1xf32>
    %62 = math.exp %61 : vector<16x1xf32>
    %63 = vector.broadcast %60 : vector<16x1xf32> to vector<16x32xf32>
    %64 = arith.subf %55, %63 : vector<16x32xf32>
    %65 = math.exp %64 : vector<16x32xf32>
    %cst_19 = arith.constant 0.000000e+00 : f32
    %66 = vector.broadcast %cst_19 : f32 to vector<16x32xf32>
    %67 = arith.select %43, %65, %66 : vector<16x32xi1>, vector<16x32xf32>
    %c0_20 = arith.constant 0 : index
    %c0_21 = arith.constant 0 : index
    %c0_22 = arith.constant 0 : index
    %68 = vector.load %arg10[%c0_20, %c0_21, %c0_22] : memref<1x16x1xf32, #tpu.memory_space<vmem>>, vector<1x16x1xf32>
    %69 = vector.shape_cast %68 : vector<1x16x1xf32> to vector<16x1xf32>
    %70 = arith.mulf %62, %69 : vector<16x1xf32>
    %cst_23 = arith.constant dense<0.000000e+00> : vector<16xf32>
    %71 = vector.multi_reduction <add>, %67, %cst_23 [1] : vector<16x32xf32> to vector<16xf32>
    %72 = vector.shape_cast %71 : vector<16xf32> to vector<16x1xf32>
    %73 = arith.addf %70, %72 : vector<16x1xf32>
    %c0_24 = arith.constant 0 : index
    %c0_25 = arith.constant 0 : index
    %c0_26 = arith.constant 0 : index
    %74 = vector.load %arg10[%c0_24, %c0_25, %c0_26] : memref<1x16x1xf32, #tpu.memory_space<vmem>>, vector<1x16x1xf32>
    %75 = vector.shape_cast %74 : vector<1x16x1xf32> to vector<16x1xf32>
    %76 = vector.shape_cast %73 : vector<16x1xf32> to vector<1x16x1xf32>
    tpu.vector_store %arg10[%c0_24, %c0_25, %c0_26], %76 {strides = array<i32>} : memref<1x16x1xf32, #tpu.memory_space<vmem>>, vector<1x16x1xf32>,
    %77 = arith.truncf %67 : vector<16x32xf32> to vector<16x32xbf16>
    %cst_27 = arith.constant dense<0.000000e+00> : vector<16x128xf32>
    %78 = tpu.matmul %77, %44, %cst_27 {dimension_numbers = #tpu.dot_dimension_numbers<[1], [0], [0], [1], [0, 0, 1, 1], [], []>} : vector<16x32xbf16>, vector<32x128xbf16>, vector<16x128xf32> -> vector<16x128xf32>
    %c0_28 = arith.constant 0 : index
    %c0_29 = arith.constant 0 : index
    %c0_30 = arith.constant 0 : index
    %79 = vector.load %arg11[%c0_28, %c0_29, %c0_30] : memref<1x16x128xf32, #tpu.memory_space<vmem>>, vector<1x16x128xf32>
    %80 = vector.shape_cast %79 : vector<1x16x128xf32> to vector<16x128xf32>
    %81 = vector.broadcast %62 : vector<16x1xf32> to vector<16x128xf32>
    %82 = arith.mulf %81, %80 : vector<16x128xf32>
    %83 = arith.addf %82, %78 : vector<16x128xf32>
    %c0_31 = arith.constant 0 : index
    %c0_32 = arith.constant 0 : index
    %c0_33 = arith.constant 0 : index
    %84 = vector.load %arg11[%c0_31, %c0_32, %c0_33] : memref<1x16x128xf32, #tpu.memory_space<vmem>>, vector<1x16x128xf32>
    %85 = vector.shape_cast %84 : vector<1x16x128xf32> to vector<16x128xf32>
    %86 = vector.shape_cast %83 : vector<16x128xf32> to vector<1x16x128xf32>
    tpu.vector_store %arg11[%c0_31, %c0_32, %c0_33], %86 {strides = array<i32>} : memref<1x16x128xf32, #tpu.memory_space<vmem>>, vector<1x16x128xf32>,
    %c0_34 = arith.constant 0 : index
    %c0_35 = arith.constant 0 : index
    %c0_36 = arith.constant 0 : index
    %87 = vector.load %arg9[%c0_34, %c0_35, %c0_36] : memref<1x16x1xf32, #tpu.memory_space<vmem>>, vector<1x16x1xf32>
    %88 = vector.shape_cast %87 : vector<1x16x1xf32> to vector<16x1xf32>
    %89 = vector.shape_cast %60 : vector<16x1xf32> to vector<1x16x1xf32>
    tpu.vector_store %arg9[%c0_34, %c0_35, %c0_36], %89 {strides = array<i32>} : memref<1x16x1xf32, #tpu.memory_space<vmem>>, vector<1x16x1xf32>,
    %c0_i32_37 = arith.constant 0 : i32
    %90 = arith.cmpi eq, %arg1, %c0_i32_37 : i32
    %91 = arith.extui %90 : i1 to i32
    %c0_i32_38 = arith.constant 0 : i32
    %92 = arith.cmpi ne, %91, %c0_i32_38 : i32
    scf.if %92 {
      %c0_39 = arith.constant 0 : index
      %c0_40 = arith.constant 0 : index
      %c0_41 = arith.constant 0 : index
      %93 = vector.load %arg10[%c0_39, %c0_40, %c0_41] : memref<1x16x1xf32, #tpu.memory_space<vmem>>, vector<1x16x1xf32>
      %94 = vector.shape_cast %93 : vector<1x16x1xf32> to vector<16x1xf32>
      %95 = tpu.reciprocal %94 {approx = true} : vector<16x1xf32> -> vector<16x1xf32>
      %c0_42 = arith.constant 0 : index
      %c0_43 = arith.constant 0 : index
      %c0_44 = arith.constant 0 : index
      %96 = vector.load %arg11[%c0_42, %c0_43, %c0_44] : memref<1x16x128xf32, #tpu.memory_space<vmem>>, vector<1x16x128xf32>
      %97 = vector.shape_cast %96 : vector<1x16x128xf32> to vector<16x128xf32>
      %98 = vector.broadcast %95 : vector<16x1xf32> to vector<16x128xf32>
      %99 = arith.mulf %97, %98 : vector<16x128xf32>
      %c0_45 = arith.constant 0 : index
      %c0_46 = arith.constant 0 : index
      %100 = vector.load %arg7[%c0_45, %c0_46] : memref<1x128xf32, #tpu.memory_space<vmem>>, vector<1x128xf32>
      %101 = vector.broadcast %100 : vector<1x128xf32> to vector<16x128xf32>
      %102 = arith.addf %99, %101 : vector<16x128xf32>
      %c0_47 = arith.constant 0 : index
      %c0_48 = arith.constant 0 : index
      %103 = vector.load %arg8[%c0_47, %c0_48] : memref<16x128xf32, #tpu.memory_space<vmem>>, vector<16x128xf32>
      tpu.vector_store %arg8[%c0_47, %c0_48], %102 {strides = array<i32>} : memref<16x128xf32, #tpu.memory_space<vmem>>, vector<16x128xf32>,
    } else {
    }
    return
  }
  func.func @transform_0(%arg0: i32, %arg1: i32, %arg2: memref<2x1xi32, #tpu.memory_space<smem>>) -> (i32, i32) {
    %0 = arith.index_cast %arg0 : i32 to index
    %1 = arith.index_cast %arg1 : i32 to index
    %2 = memref.load %arg2[%0, %1] : memref<2x1xi32, #tpu.memory_space<smem>>
    %c0_i32 = arith.constant 0 : i32
    %c0_i32_0 = arith.constant 0 : i32
    return %2, %c0_i32 : i32, i32
  }
  func.func @transform_1(%arg0: i32, %arg1: i32, %arg2: memref<2x1xi32, #tpu.memory_space<smem>>) -> (i32, i32) {
    %c0_i32 = arith.constant 0 : i32
    %c0_i32_0 = arith.constant 0 : i32
    return %arg0, %c0_i32 : i32, i32
  }
  func.func @transform_2(%arg0: i32, %arg1: i32, %arg2: memref<2x1xi32, #tpu.memory_space<smem>>) -> (i32, i32) {
    %0 = arith.index_cast %arg0 : i32 to index
    %1 = arith.index_cast %arg1 : i32 to index
    %2 = memref.load %arg2[%0, %1] : memref<2x1xi32, #tpu.memory_space<smem>>
    %c0_i32 = arith.constant 0 : i32
    %c0_i32_0 = arith.constant 0 : i32
    return %c0_i32, %2 : i32, i32
  }
  func.func @transform_3(%arg0: i32, %arg1: i32, %arg2: memref<2x1xi32, #tpu.memory_space<smem>>) -> (i32, i32) {
    %c0_i32 = arith.constant 0 : i32
    %c0_i32_0 = arith.constant 0 : i32
    return %arg0, %c0_i32 : i32, i32
  }
  func.func @transform_4(%arg0: i32, %arg1: i32, %arg2: memref<2x1xi32, #tpu.memory_space<smem>>) -> (i32, i32) {
    %c0_i32 = arith.constant 0 : i32
    %c0_i32_0 = arith.constant 0 : i32
    %c0_i32_1 = arith.constant 0 : i32
    return %c0_i32, %c0_i32_0 : i32, i32
  }
  func.func @transform_5(%arg0: i32, %arg1: i32, %arg2: memref<2x1xi32, #tpu.memory_space<smem>>) -> (i32, i32) {
    %c0_i32 = arith.constant 0 : i32
    %c0_i32_0 = arith.constant 0 : i32
    return %arg0, %c0_i32 : i32, i32
  }
}

</mosaic_0001>

<llo_original>
// kernel: _gat_stack.6
$region0: #{_gat_stack.6}
  #allocation0 [shape = 'u32[]', space=smem, size = 0x4, offset = 0x4, fixed_abs, tag = 'smem constant byte address 0x4 - core index']
  #allocation1 [shape = 'u32[144,128]{1,0:T(1,128)}', space=vmem, size = 0x12000, scoped, tag = 'internal scratch']
  %s0 = inlined_call_operand.vmem [shape: bf16[32,256], index: 0, kind: input, shape index: {}]
  %s1 = inlined_call_operand.hbm [shape: bf16[256,384], index: 1, kind: input, shape index: {}]
  %s2 = inlined_call_operand.vmem [shape: bf16[32,256], index: 2, kind: output, shape index: {0}]
  %s3 = inlined_call_operand.vmem [shape: f32[32,128], index: 3, kind: output, shape index: {1}]
  %4 = xla_tuple %s2, %s3
  %s5 = sld [smem:[#allocation0]]
  $region53: #{_gat_stack.6} parent=0
    _
  %s7 = ssub.s32 1, %s5
  %s8 = scalar_select 0, %s7, %s5
  $region1: #{_gat_stack.6} parent=0
    #allocation2 [shape = 'u8[196608]{0}', space=vmem, size = 0x30000, scoped, tag = 'input window, operand 1, single buffered']
    #allocation3 [shape = 's32[2]{0}', space=sflag, size = 0x8, scoped, tag = 'scoped memory for _gat_stack.6']
    %9 = vsyncpa [#allocation3], 0
    loop: start=0, step=1, limit=4
    $region2: #{_gat_stack.6} parent=1 // loop_pre_header
      _
    $region3: #{_gat_stack.6} parent=1 // loop_header
      %s11 = sphi 0, %s15
      %p12 = scmp.ge.s32.totalorder %s11, 4
      %s21 = sphi 0, %s23
      %s24 = sphi 0, %s21
      %s25 = sphi 0, %s24
      %s41 = sphi 0, %s25
      %s45 = sphi 0, %s45
      %s47 = sphi 0, %s45
      %s48 = sphi 0, %s47
      %s62 = sphi 0, %s48
      %s68 = sphi 0, %s70
      %s71 = sphi 0, %s68
      %s72 = sphi 0, %s71
      %s88 = sphi 0, %s72
      %s94 = sphi 0, %s96
      %s97 = sphi 0, %s94
      %s98 = sphi 0, %s97
      %s114 = sphi 0, %s98
    $region4: #{_gat_stack.6} parent=1 // loop_header_branch
      %14 = sbr.rel (%p12) target = $region8
    $region5: #{_gat_stack.6} parent=1 // loop_body
      %s16 = ssub.s32 %s11, 1
      %s17 = ssub.s32 %s11, 2
      %s18 = sadd.s32 %s11, 1
      %s19 = ssub.s32 %s11, %s18
      %p20 = scmp.eq.s32.totalorder %s19, 0
      %s22 = sadd.s32 %s21, 1
      %s23 = scalar_select %p20, %s21, %s22
      %p26 = pneg %p20
      %p27 = scmp.eq.s32.totalorder %s11, 1
      %p28 = por %p26, %p27
      %p29 = scmp.ne.s32.totalorder %s21, %s24
      %p30 = scmp.eq.s32.totalorder %s11, 0
      %p31 = por %p29, %p30
      %p32 = scmp.ne.s32.totalorder %s21, %s24
      %p33 = scmp.eq.s32.totalorder %s16, 1
      %p34 = por %p32, %p33
      %p35 = scmp.ne.s32.totalorder %s24, %s25
      %p36 = scmp.eq.s32.totalorder %s16, 0
      %p37 = por %p35, %p36
      %p38 = scmp.ne.s32.totalorder %s24, %s25
      %p39 = scmp.eq.s32.totalorder %s17, 1
      %p40 = por %p38, %p39
      %p42 = scmp.ne.s32.totalorder %s25, %s41
      %p43 = scmp.eq.s32.totalorder %s17, 0
      %p44 = por %p42, %p43
      %s46 = sadd.s32 %s45, 1
      %p49 = scmp.eq.s32.totalorder %s11, 1
      %p50 = scmp.ne.s32.totalorder %s45, %s47
      %p51 = scmp.eq.s32.totalorder %s11, 0
      %p52 = por %p50, %p51
      %p53 = scmp.ne.s32.totalorder %s45, %s47
      %p54 = scmp.eq.s32.totalorder %s16, 1
      %p55 = por %p53, %p54
      %p56 = scmp.ne.s32.totalorder %s47, %s48
      %p57 = scmp.eq.s32.totalorder %s16, 0
      %p58 = por %p56, %p57
      %p59 = scmp.ne.s32.totalorder %s47, %s48
      %p60 = scmp.eq.s32.totalorder %s17, 1
      %p61 = por %p59, %p60
      %p63 = scmp.ne.s32.totalorder %s48, %s62
      %p64 = scmp.eq.s32.totalorder %s17, 0
      %p65 = por %p63, %p64
      %s66 = ssub.s32 %s11, %s18
      %p67 = scmp.eq.s32.totalorder %s66, 0
      %s69 = sadd.s32 %s68, 1
      %s70 = scalar_select %p67, %s68, %s69
      %p73 = pneg %p67
      %p74 = scmp.eq.s32.totalorder %s11, 1
      %p75 = por %p73, %p74
      %p76 = scmp.ne.s32.totalorder %s68, %s71
      %p77 = scmp.eq.s32.totalorder %s11, 0
      %p78 = por %p76, %p77
      %p79 = scmp.ne.s32.totalorder %s68, %s71
      %p80 = scmp.eq.s32.totalorder %s16, 1
      %p81 = por %p79, %p80
      %p82 = scmp.ne.s32.totalorder %s71, %s72
      %p83 = scmp.eq.s32.totalorder %s16, 0
      %p84 = por %p82, %p83
      %p85 = scmp.ne.s32.totalorder %s71, %s72
      %p86 = scmp.eq.s32.totalorder %s17, 1
      %p87 = por %p85, %p86
      %p89 = scmp.ne.s32.totalorder %s72, %s88
      %p90 = scmp.eq.s32.totalorder %s17, 0
      %p91 = por %p89, %p90
      %s92 = ssub.s32 %s11, %s18
      %p93 = scmp.eq.s32.totalorder %s92, 0
      %s95 = sadd.s32 %s94, 1
      %s96 = scalar_select %p93, %s94, %s95
      %p99 = pneg %p93
      %p100 = scmp.eq.s32.totalorder %s11, 1
      %p101 = por %p99, %p100
      %p102 = scmp.ne.s32.totalorder %s94, %s97
      %p103 = scmp.eq.s32.totalorder %s11, 0
      %p104 = por %p102, %p103
      %p105 = scmp.ne.s32.totalorder %s94, %s97
      %p106 = scmp.eq.s32.totalorder %s16, 1
      %p107 = por %p105, %p106
      %p108 = scmp.ne.s32.totalorder %s97, %s98
      %p109 = scmp.eq.s32.totalorder %s16, 0
      %p110 = por %p108, %p109
      %p111 = scmp.ne.s32.totalorder %s97, %s98
      %p112 = scmp.eq.s32.totalorder %s17, 1
      %p113 = por %p111, %p112
      %p115 = scmp.ne.s32.totalorder %s98, %s114
      %p116 = scmp.eq.s32.totalorder %s17, 0
      %p117 = por %p115, %p116
      %p118 = scmp.le.s32.totalorder 1, %s11
      %p119 = scmp.lt.s32.totalorder %s11, 3
      %p120 = pnand %p118, %p119
      %p121 = pneg %p120
      // Predicated region
      $region9: #{_gat_stack.6} parent=5 // pred_check
        _
      $region10: #{_gat_stack.6} parent=5 // pred_check_branch
        %123 = sbr.rel (%p120) target = $region12
      $region11: #{_gat_stack.6} parent=5 // pred_region
        %s124 = ssub.s32 %s11, 1
        // Predicated region
        $region13: #{_gat_stack.6} parent=11 // pred_check
          %p125 = pneg %p58
        $region14: #{_gat_stack.6} parent=11 // pred_check_branch
          %127 = sbr.rel (%p125) target = $region16
        $region15: #{_gat_stack.6} parent=11 // pred_region
          %s129 = ssub.s32 6144, 6144
          %130 = vsyncadd [#allocation3], %s129
          %s131 = sshll.u32 [#allocation2], 4
          %s132 = int_to_ptr.vmem [resolvable:$true] %s131
          %137 = dma.hbm_to_vmem [thread:$0]  %s1, 6144, %s132, [#allocation3], 192, 192, 12
        $region16: #{_gat_stack.6} parent=11 // pred_fallthru
          _
      $region12: #{_gat_stack.6} parent=5 // pred_fallthru
        _
      %p138 = scmp.lt.s32.totalorder %s11, 2
      // Predicated region
      $region17: #{_gat_stack.6} parent=5 // pred_check
        %p139 = pneg %p138
      $region18: #{_gat_stack.6} parent=5 // pred_check_branch
        %141 = sbr.rel (%p139) target = $region20
      $region19: #{_gat_stack.6} parent=5 // pred_region
        // Predicated region
        $region21: #{_gat_stack.6} parent=19 // pred_check
          %p142 = pneg %p31
        $region22: #{_gat_stack.6} parent=19 // pred_check_branch
          %144 = sbr.rel (%p142) target = $region24
        $region23: #{_gat_stack.6} parent=19 // pred_region
          %s145 = smul.u32 2, %s11
          %p146 = scmp.lt.s32.totalorder %s145, 3
          %s147 = scalar_select %p146, %s145, 3
          %s148 = smul.addr %s147, 2
          %s149 = smul.addr %s148, 4
          %s150 = scalar_lea.vmem %s0, %s149
          %s151 = smul.u32 2, %s11
        $region24: #{_gat_stack.6} parent=19 // pred_fallthru
          _
      $region20: #{_gat_stack.6} parent=5 // pred_fallthru
        _
      %p152 = scmp.le.s32.totalorder 1, %s11
      %p153 = scmp.lt.s32.totalorder %s11, 3
      %p154 = pnand %p152, %p153
      %p155 = pneg %p154
      // Predicated region
      $region25: #{_gat_stack.6} parent=5 // pred_check
        _
      $region26: #{_gat_stack.6} parent=5 // pred_check_branch
        %157 = sbr.rel (%p154) target = $region28
      $region27: #{_gat_stack.6} parent=5 // pred_region
        %s158 = ssub.s32 %s11, 1
        // Predicated region
        $region29: #{_gat_stack.6} parent=27 // pred_check
          %p159 = pneg %p58
        $region30: #{_gat_stack.6} parent=27 // pred_check_branch
          %161 = sbr.rel (%p159) target = $region32
        $region31: #{_gat_stack.6} parent=27 // pred_region
          %162 = dma.done [#allocation3], 6144
        $region32: #{_gat_stack.6} parent=27 // pred_fallthru
          _
        %s163 = smul.u32 2, %s16
        %p164 = scmp.lt.s32.totalorder %s163, 3
        %s165 = scalar_select %p164, %s163, 3
        %s166 = smul.addr %s165, 2
        %s167 = smul.addr %s166, 4
        %s168 = scalar_lea.vmem %s0, %s167
        %p169 = pneg %p37
        %p170 = pneg %p34
        %p171 = pneg %p58
        %p172 = pneg %p55
        %p173 = pneg %p84
        %p174 = pneg %p81
        %s175 = smul.u32 2, %s16
        %p176 = scmp.lt.s32.totalorder %s175, 3
        %s177 = scalar_select %p176, %s175, 3
        %s178 = smul.addr %s177, 2
        %s179 = smul.addr %s178, 4
        %s180 = scalar_lea.vmem %s2, %s179
        %p181 = pneg %p110
        %p182 = pneg %p107
        %s183 = smul.u32 2, %s16
        %p184 = scmp.lt.s32.totalorder %s183, 3
        %s185 = scalar_select %p184, %s183, 3
        %s186 = smul.addr %s185, 8
        %s187 = scalar_lea.vmem %s3, %s186
        %s188 = smul.u32 2, %s16
        %p189 = scmp.lt.s32.totalorder %s188, 3
        %s190 = scalar_select %p189, %s188, 3
        %s191 = smul.addr %s190, 2
        %s192 = smul.addr %s191, 4
        %s193 = scalar_lea.vmem %s0, %s192
        %s194 = smul.u32 2, %s16
        %s195 = smul.u32 2, %s16
        %p196 = scmp.lt.s32.totalorder %s195, 3
        %s197 = scalar_select %p196, %s195, 3
        %s198 = smul.addr %s197, 2
        %s199 = smul.addr %s198, 4
        %s200 = scalar_lea.vmem %s2, %s199
        %s201 = smul.u32 2, %s16
        %s202 = smul.u32 2, %s16
        %p203 = scmp.lt.s32.totalorder %s202, 3
        %s204 = scalar_select %p203, %s202, 3
        %s205 = smul.addr %s204, 8
        %s206 = scalar_lea.vmem %s3, %s205
        %s207 = smul.u32 2, %s16
        %v209 = vld [vmem:[%s193] sm:$0xff]
        %v210 = vld [vmem:[%s193 + $0x8] sm:$0xff]
        %v211 = vld [vmem:[#allocation2] sm:$0xff]
        %v212 = vld [vmem:[#allocation2 + $0x8] sm:$0xf]
        %v213 = vld [vmem:[#allocation2 + $0xc] sm:$0xff]
        %v214 = vld [vmem:[#allocation2 + $0x14] sm:$0xf]
        %v215 = vld [vmem:[#allocation2 + $0x18] sm:$0xff]
        %v216 = vld [vmem:[#allocation2 + $0x20] sm:$0xf]
        %v217 = vld [vmem:[#allocation2 + $0x24] sm:$0xff]
        %v218 = vld [vmem:[#allocation2 + $0x2c] sm:$0xf]
        %v219 = vld [vmem:[#allocation2 + $0x30] sm:$0xff]
        %v220 = vld [vmem:[#allocation2 + $0x38] sm:$0xf]
        %v221 = vld [vmem:[#allocation2 + $0x3c] sm:$0xff]
        %v222 = vld [vmem:[#allocation2 + $0x44] sm:$0xf]
        %v223 = vld [vmem:[#allocation2 + $0x48] sm:$0xff]
        %v224 = vld [vmem:[#allocation2 + $0x50] sm:$0xf]
        %v225 = vld [vmem:[#allocation2 + $0x54] sm:$0xff]
        %v226 = vld [vmem:[#allocation2 + $0x5c] sm:$0xf]
        %v227 = vld [vmem:[#allocation2 + $0x60] sm:$0xff]
        %v228 = vld [vmem:[#allocation2 + $0x68] sm:$0xf]
        %v229 = vld [vmem:[#allocation2 + $0x6c] sm:$0xff]
        %v230 = vld [vmem:[#allocation2 + $0x74] sm:$0xf]
        %v231 = vld [vmem:[#allocation2 + $0x78] sm:$0xff]
        %v232 = vld [vmem:[#allocation2 + $0x80] sm:$0xf]
        %v233 = vld [vmem:[#allocation2 + $0x84] sm:$0xff]
        %v234 = vld [vmem:[#allocation2 + $0x8c] sm:$0xf]
        %v235 = vld [vmem:[#allocation2 + $0x90] sm:$0xff]
        %v236 = vld [vmem:[#allocation2 + $0x98] sm:$0xf]
        %v237 = vld [vmem:[#allocation2 + $0x9c] sm:$0xff]
        %v238 = vld [vmem:[#allocation2 + $0xa4] sm:$0xf]
        %v239 = vld [vmem:[#allocation2 + $0xa8] sm:$0xff]
        %v240 = vld [vmem:[#allocation2 + $0xb0] sm:$0xf]
        %v241 = vld [vmem:[#allocation2 + $0xb4] sm:$0xff]
        %v242 = vld [vmem:[#allocation2 + $0xbc] sm:$0xf]
        %v243 = vld [vmem:[#allocation2 + $0xc0] sm:$0xff]
        %v244 = vld [vmem:[#allocation2 + $0xc8] sm:$0xf]
        %v245 = vld [vmem:[#allocation2 + $0xcc] sm:$0xff]
        %v246 = vld [vmem:[#allocation2 + $0xd4] sm:$0xf]
        %v247 = vld [vmem:[#allocation2 + $0xd8] sm:$0xff]
        %v248 = vld [vmem:[#allocation2 + $0xe0] sm:$0xf]
        %v249 = vld [vmem:[#allocation2 + $0xe4] sm:$0xff]
        %v250 = vld [vmem:[#allocation2 + $0xec] sm:$0xf]
        %v251 = vld [vmem:[#allocation2 + $0xf0] sm:$0xff]
        %v252 = vld [vmem:[#allocation2 + $0xf8] sm:$0xf]
        %v253 = vld [vmem:[#allocation2 + $0xfc] sm:$0xff]
        %v254 = vld [vmem:[#allocation2 + $0x104] sm:$0xf]
        %v255 = vld [vmem:[#allocation2 + $0x108] sm:$0xff]
        %v256 = vld [vmem:[#allocation2 + $0x110] sm:$0xf]
        %v257 = vld [vmem:[#allocation2 + $0x114] sm:$0xff]
        %v258 = vld [vmem:[#allocation2 + $0x11c] sm:$0xf]
        %v259 = vld [vmem:[#allocation2 + $0x120] sm:$0xff]
        %v260 = vld [vmem:[#allocation2 + $0x128] sm:$0xf]
        %v261 = vld [vmem:[#allocation2 + $0x12c] sm:$0xff]
        %v262 = vld [vmem:[#allocation2 + $0x134] sm:$0xf]
        %v263 = vld [vmem:[#allocation2 + $0x138] sm:$0xff]
        %v264 = vld [vmem:[#allocation2 + $0x140] sm:$0xf]
        %v265 = vld [vmem:[#allocation2 + $0x144] sm:$0xff]
        %v266 = vld [vmem:[#allocation2 + $0x14c] sm:$0xf]
        %v267 = vld [vmem:[#allocation2 + $0x150] sm:$0xff]
        %v268 = vld [vmem:[#allocation2 + $0x158] sm:$0xf]
        %v269 = vld [vmem:[#allocation2 + $0x15c] sm:$0xff]
        %v270 = vld [vmem:[#allocation2 + $0x164] sm:$0xf]
        %v271 = vld [vmem:[#allocation2 + $0x168] sm:$0xff]
        %v272 = vld [vmem:[#allocation2 + $0x170] sm:$0xf]
        %v273 = vld [vmem:[#allocation2 + $0x174] sm:$0xff]
        %v274 = vld [vmem:[#allocation2 + $0x17c] sm:$0xf]
        %v277 = vunpack.c.l.b16 %v209
        %v278 = vunpack.c.h.b16 %v209
        %v279 = vunpack.c.l.b16 %v210
        %v280 = vunpack.c.h.b16 %v210
        %v281 = vpack.c.b16 %v279, %v277
        %v282 = vpack.c.b16 %v280, %v278
        %v349 = vunpack.c.l.b16 %v211
        %v350 = vunpack.c.h.b16 %v211
        %v351 = vunpack.c.l.b16 %v212
        %v352 = vunpack.c.l.b16 %v213
        %v353 = vunpack.c.h.b16 %v213
        %v354 = vunpack.c.l.b16 %v214
        %v355 = vunpack.c.l.b16 %v215
        %v356 = vunpack.c.h.b16 %v215
        %v357 = vunpack.c.l.b16 %v216
        %v358 = vunpack.c.l.b16 %v217
        %v359 = vunpack.c.h.b16 %v217
        %v360 = vunpack.c.l.b16 %v218
        %v361 = vunpack.c.l.b16 %v219
        %v362 = vunpack.c.h.b16 %v219
        %v363 = vunpack.c.l.b16 %v220
        %v364 = vunpack.c.l.b16 %v221
        %v365 = vunpack.c.h.b16 %v221
        %v366 = vunpack.c.l.b16 %v222
        %v367 = vunpack.c.l.b16 %v223
        %v368 = vunpack.c.h.b16 %v223
        %v369 = vunpack.c.l.b16 %v224
        %v370 = vunpack.c.l.b16 %v225
        %v371 = vunpack.c.h.b16 %v225
        %v372 = vunpack.c.l.b16 %v226
        %v373 = vunpack.c.l.b16 %v227
        %v374 = vunpack.c.h.b16 %v227
        %v375 = vunpack.c.l.b16 %v228
        %v376 = vunpack.c.l.b16 %v229
        %v377 = vunpack.c.h.b16 %v229
        %v378 = vunpack.c.l.b16 %v230
        %v379 = vunpack.c.l.b16 %v231
        %v380 = vunpack.c.h.b16 %v231
        %v381 = vunpack.c.l.b16 %v232
        %v382 = vunpack.c.l.b16 %v233
        %v383 = vunpack.c.h.b16 %v233
        %v384 = vunpack.c.l.b16 %v234
        %v385 = vunpack.c.l.b16 %v235
        %v386 = vunpack.c.h.b16 %v235
        %v387 = vunpack.c.l.b16 %v236
        %v388 = vunpack.c.l.b16 %v237
        %v389 = vunpack.c.h.b16 %v237
        %v390 = vunpack.c.l.b16 %v238
        %v391 = vunpack.c.l.b16 %v239
        %v392 = vunpack.c.h.b16 %v239
        %v393 = vunpack.c.l.b16 %v240
        %v394 = vunpack.c.l.b16 %v241
        %v395 = vunpack.c.h.b16 %v241
        %v396 = vunpack.c.l.b16 %v242
        %v397 = vunpack.c.l.b16 %v243
        %v398 = vunpack.c.h.b16 %v243
        %v399 = vunpack.c.l.b16 %v244
        %v400 = vunpack.c.l.b16 %v245
        %v401 = vunpack.c.h.b16 %v245
        %v402 = vunpack.c.l.b16 %v246
        %v403 = vunpack.c.l.b16 %v247
        %v404 = vunpack.c.h.b16 %v247
        %v405 = vunpack.c.l.b16 %v248
        %v406 = vunpack.c.l.b16 %v249
        %v407 = vunpack.c.h.b16 %v249
        %v408 = vunpack.c.l.b16 %v250
        %v409 = vunpack.c.l.b16 %v251
        %v410 = vunpack.c.h.b16 %v251
        %v411 = vunpack.c.l.b16 %v252
        %v412 = vunpack.c.l.b16 %v253
        %v413 = vunpack.c.h.b16 %v253
        %v414 = vunpack.c.l.b16 %v254
        %v415 = vunpack.c.l.b16 %v255
        %v416 = vunpack.c.h.b16 %v255
        %v417 = vunpack.c.l.b16 %v256
        %v418 = vunpack.c.l.b16 %v257
        %v419 = vunpack.c.h.b16 %v257
        %v420 = vunpack.c.l.b16 %v258
        %v421 = vunpack.c.l.b16 %v259
        %v422 = vunpack.c.h.b16 %v259
        %v423 = vunpack.c.l.b16 %v260
        %v424 = vunpack.c.l.b16 %v261
        %v425 = vunpack.c.h.b16 %v261
        %v426 = vunpack.c.l.b16 %v262
        %v427 = vunpack.c.l.b16 %v263
        %v428 = vunpack.c.h.b16 %v263
        %v429 = vunpack.c.l.b16 %v264
        %v430 = vunpack.c.l.b16 %v265
        %v431 = vunpack.c.h.b16 %v265
        %v432 = vunpack.c.l.b16 %v266
        %v433 = vunpack.c.l.b16 %v267
        %v434 = vunpack.c.h.b16 %v267
        %v435 = vunpack.c.l.b16 %v268
        %v436 = vunpack.c.l.b16 %v269
        %v437 = vunpack.c.h.b16 %v269
        %v438 = vunpack.c.l.b16 %v270
        %v439 = vunpack.c.l.b16 %v271
        %v440 = vunpack.c.h.b16 %v271
        %v441 = vunpack.c.l.b16 %v272
        %v442 = vunpack.c.l.b16 %v273
        %v443 = vunpack.c.h.b16 %v273
        %v444 = vunpack.c.l.b16 %v274
        %v445 = vpack.c.b16 %v352, %v349
        %v446 = vpack.c.b16 %v353, %v350
        %v447 = vpack.c.b16 %v354, %v351
        %v448 = vpack.c.b16 %v358, %v355
        %v449 = vpack.c.b16 %v359, %v356
        %v450 = vpack.c.b16 %v360, %v357
        %v451 = vpack.c.b16 %v364, %v361
        %v452 = vpack.c.b16 %v365, %v362
        %v453 = vpack.c.b16 %v366, %v363
        %v454 = vpack.c.b16 %v370, %v367
        %v455 = vpack.c.b16 %v371, %v368
        %v456 = vpack.c.b16 %v372, %v369
        %v457 = vpack.c.b16 %v376, %v373
        %v458 = vpack.c.b16 %v377, %v374
        %v459 = vpack.c.b16 %v378, %v375
        %v460 = vpack.c.b16 %v382, %v379
        %v461 = vpack.c.b16 %v383, %v380
        %v462 = vpack.c.b16 %v384, %v381
        %v463 = vpack.c.b16 %v388, %v385
        %v464 = vpack.c.b16 %v389, %v386
        %v465 = vpack.c.b16 %v390, %v387
        %v466 = vpack.c.b16 %v394, %v391
        %v467 = vpack.c.b16 %v395, %v392
        %v468 = vpack.c.b16 %v396, %v393
        %v469 = vpack.c.b16 %v400, %v397
        %v470 = vpack.c.b16 %v401, %v398
        %v471 = vpack.c.b16 %v402, %v399
        %v472 = vpack.c.b16 %v406, %v403
        %v473 = vpack.c.b16 %v407, %v404
        %v474 = vpack.c.b16 %v408, %v405
        %v475 = vpack.c.b16 %v412, %v409
        %v476 = vpack.c.b16 %v413, %v410
        %v477 = vpack.c.b16 %v414, %v411
        %v478 = vpack.c.b16 %v418, %v415
        %v479 = vpack.c.b16 %v419, %v416
        %v480 = vpack.c.b16 %v420, %v417
        %v481 = vpack.c.b16 %v424, %v421
        %v482 = vpack.c.b16 %v425, %v422
        %v483 = vpack.c.b16 %v426, %v423
        %v484 = vpack.c.b16 %v430, %v427
        %v485 = vpack.c.b16 %v431, %v428
        %v486 = vpack.c.b16 %v432, %v429
        %v487 = vpack.c.b16 %v436, %v433
        %v488 = vpack.c.b16 %v437, %v434
        %v489 = vpack.c.b16 %v438, %v435
        %v490 = vpack.c.b16 %v442, %v439
        %v491 = vpack.c.b16 %v443, %v440
        %v492 = vpack.c.b16 %v444, %v441
        %541 = vmatprep.subr.bf16.mxu0 %v446
        %542 = vmatpush1.bf16.msra.mxu0 %v445
        %543 = vmatprep.subr.bf16.mxu0 %v449
        %544 = vmatpush1.bf16.msra.mxu0 %v448
        %545 = vmatprep.subr.bf16.mxu0 %v452
        %546 = vmatpush1.bf16.msra.mxu0 %v451
        %547 = vmatprep.subr.bf16.mxu0 %v455
        %548 = vmatpush1.bf16.msra.mxu0 %v454
        %549 = vmatprep.subr.bf16.mxu0 %v458
        %550 = vmatpush1.bf16.msra.mxu0 %v457
        %551 = vmatprep.subr.bf16.mxu0 %v461
        %552 = vmatpush1.bf16.msra.mxu0 %v460
        %553 = vmatprep.subr.bf16.mxu0 %v464
        %554 = vmatpush1.bf16.msra.mxu0 %v463
        %555 = vmatprep.subr.bf16.mxu0 %v467
        %556 = vmatpush1.bf16.msra.mxu0 %v466
        %557 = vmatprep.subr.bf16.mxu0 %v470
        %558 = vmatpush1.bf16.msra.mxu0 %v469
        %559 = vmatprep.subr.bf16.mxu0 %v473
        %560 = vmatpush1.bf16.msra.mxu0 %v472
        %561 = vmatprep.subr.bf16.mxu0 %v476
        %562 = vmatpush1.bf16.msra.mxu0 %v475
        %563 = vmatprep.subr.bf16.mxu0 %v479
        %564 = vmatpush1.bf16.msra.mxu0 %v478
        %565 = vmatprep.subr.bf16.mxu0 %v482
        %566 = vmatpush1.bf16.msra.mxu0 %v481
        %567 = vmatprep.subr.bf16.mxu0 %v485
        %568 = vmatpush1.bf16.msra.mxu0 %v484
        %569 = vmatprep.subr.bf16.mxu0 %v488
        %570 = vmatpush1.bf16.msra.mxu0 %v487
        %571 = vmatprep.subr.bf16.mxu0 %v491
        %572 = vmatpush1.bf16.msra.mxu0 %v490
        %573 = vmatprep.mubr.bf16.mxu0 %v282
        %574 = vmatmul.mubr.bf16.gmra.mrb[0].mxu0 %v281
        %v575 = vpop.f32.mrb[0].mxu0
        %v576 = vadd.f32 0.0, %v575
        %v577 = vpop.f32.mrb[0].mxu0
        %v578 = vadd.f32 0.0, %v577
        %v579 = vpop.f32.mrb[0].mxu0
        %v580 = vadd.f32 0.0, %v579
        %v581 = vpop.f32.mrb[0].mxu0
        %v582 = vadd.f32 0.0, %v581
        %583 = vdwg.mxu0
        %584 = vmatprep.subr.bf16.mxu0 0
        %585 = vmatpush1.bf16.msra.mxu0 %v447
        %586 = vmatprep.subr.bf16.mxu0 0
        %587 = vmatpush1.bf16.msra.mxu0 %v450
        %588 = vmatprep.subr.bf16.mxu0 0
        %589 = vmatpush1.bf16.msra.mxu0 %v453
        %590 = vmatprep.subr.bf16.mxu0 0
        %591 = vmatpush1.bf16.msra.mxu0 %v456
        %592 = vmatprep.subr.bf16.mxu0 0
        %593 = vmatpush1.bf16.msra.mxu0 %v459
        %594 = vmatprep.subr.bf16.mxu0 0
        %595 = vmatpush1.bf16.msra.mxu0 %v462
        %596 = vmatprep.subr.bf16.mxu0 0
        %597 = vmatpush1.bf16.msra.mxu0 %v465
        %598 = vmatprep.subr.bf16.mxu0 0
        %599 = vmatpush1.bf16.msra.mxu0 %v468
        %600 = vmatprep.subr.bf16.mxu0 0
        %601 = vmatpush1.bf16.msra.mxu0 %v471
        %602 = vmatprep.subr.bf16.mxu0 0
        %603 = vmatpush1.bf16.msra.mxu0 %v474
        %604 = vmatprep.subr.bf16.mxu0 0
        %605 = vmatpush1.bf16.msra.mxu0 %v477
        %606 = vmatprep.subr.bf16.mxu0 0
        %607 = vmatpush1.bf16.msra.mxu0 %v480
        %608 = vmatprep.subr.bf16.mxu0 0
        %609 = vmatpush1.bf16.msra.mxu0 %v483
        %610 = vmatprep.subr.bf16.mxu0 0
        %611 = vmatpush1.bf16.msra.mxu0 %v486
        %612 = vmatprep.subr.bf16.mxu0 0
        %613 = vmatpush1.bf16.msra.mxu0 %v489
        %614 = vmatprep.subr.bf16.mxu0 0
        %615 = vmatpush1.bf16.msra.mxu0 %v492
        %616 = vmatprep.mubr.bf16.mxu0 %v282
        %617 = vmatmul.mubr.bf16.gmra.mrb[0].mxu0 %v281
        %v618 = vpop.f32.mrb[0].mxu0
        %v619 = vadd.f32 0.0, %v618
        %v620 = vpop.f32.mrb[0].mxu0
        %v621 = vpop.f32.mrb[0].mxu0
        %v622 = vadd.f32 0.0, %v621
        %v623 = vpop.f32.mrb[0].mxu0
        %624 = vdwg.mxu0
        %v625 = vpack.c.bf16 %v580, %v576
        %v626 = vpack.c.bf16 %v582, %v578
        %v629 = vunpack.c.l.b16 %v625
        %v630 = vunpack.c.l.b16 %v626
        %v631 = vunpack.c.h.b16 %v625
        %v632 = vunpack.c.h.b16 %v626
        %v633 = vpack.c.b16 %v630, %v629
        %v634 = vpack.c.b16 %v632, %v631
        %637 = vst [vmem:[%s200] sm:$0xff] %v633
        %638 = vst [vmem:[%s200 + $0x8] sm:$0xff] %v634
        %639 = vst [vmem:[%s206] sm:$0xff] %v619
        %640 = vst [vmem:[%s206 + $0x8] sm:$0xff] %v622
        %s641 = smul.u32 2, %s16
        %p642 = scmp.lt.s32.totalorder %s641, 3
        %s643 = scalar_select %p642, %s641, 3
        %s644 = smul.addr %s643, 2
        %s645 = smul.addr %s644, 4
        %s646 = scalar_lea.vmem %s2, %s645
        %s647 = smul.u32 2, %s16
        %p648 = scmp.lt.s32.totalorder %s647, 3
        %s649 = scalar_select %p648, %s647, 3
        %s650 = smul.addr %s649, 8
        %s651 = scalar_lea.vmem %s3, %s650
        // Predicated region
        $region33: #{_gat_stack.6} parent=27 // pred_check
          %p652 = pneg %p81
        $region34: #{_gat_stack.6} parent=27 // pred_check_branch
          %654 = sbr.rel (%p652) target = $region36
        $region35: #{_gat_stack.6} parent=27 // pred_region
          %s655 = smul.u32 2, %s16
        $region36: #{_gat_stack.6} parent=27 // pred_fallthru
          _
        // Predicated region
        $region37: #{_gat_stack.6} parent=27 // pred_check
          %p656 = pneg %p107
        $region38: #{_gat_stack.6} parent=27 // pred_check_branch
          %658 = sbr.rel (%p656) target = $region40
        $region39: #{_gat_stack.6} parent=27 // pred_region
          %s659 = smul.u32 2, %s16
        $region40: #{_gat_stack.6} parent=27 // pred_fallthru
          _
      $region28: #{_gat_stack.6} parent=5 // pred_fallthru
        _
      %p660 = scmp.le.s32.totalorder 2, %s11
      // Predicated region
      $region41: #{_gat_stack.6} parent=5 // pred_check
        %p661 = pneg %p660
      $region42: #{_gat_stack.6} parent=5 // pred_check_branch
        %663 = sbr.rel (%p661) target = $region44
      $region43: #{_gat_stack.6} parent=5 // pred_region
        %s664 = ssub.s32 %s11, 2
        // Predicated region
        $region45: #{_gat_stack.6} parent=43 // pred_check
          %p665 = pneg %p87
        $region46: #{_gat_stack.6} parent=43 // pred_check_branch
          %667 = sbr.rel (%p665) target = $region48
        $region47: #{_gat_stack.6} parent=43 // pred_region
          %s668 = smul.u32 2, %s17
          %p669 = scmp.lt.s32.totalorder %s668, 3
          %s670 = scalar_select %p669, %s668, 3
          %s671 = smul.addr %s670, 2
          %s672 = smul.addr %s671, 4
          %s673 = scalar_lea.vmem %s2, %s672
        $region48: #{_gat_stack.6} parent=43 // pred_fallthru
          _
        // Predicated region
        $region49: #{_gat_stack.6} parent=43 // pred_check
          %p674 = pneg %p113
        $region50: #{_gat_stack.6} parent=43 // pred_check_branch
          %676 = sbr.rel (%p674) target = $region52
        $region51: #{_gat_stack.6} parent=43 // pred_region
          %s677 = smul.u32 2, %s17
          %p678 = scmp.lt.s32.totalorder %s677, 3
          %s679 = scalar_select %p678, %s677, 3
          %s680 = smul.addr %s679, 8
          %s681 = scalar_lea.vmem %s3, %s680
        $region52: #{_gat_stack.6} parent=43 // pred_fallthru
          _
      $region44: #{_gat_stack.6} parent=5 // pred_fallthru
        _
    $region6: #{_gat_stack.6} parent=1 // loop_footer
      %s15 = sadd.s32 1, %s11
    $region7: #{_gat_stack.6} parent=1 // loop_footer_branch
      %10 = sbr.rel target = $region3
    $region8: #{_gat_stack.6} parent=1 // loop_exit
      _
    %682 = vsyncpa [#allocation3], 1
    %s683 = scalar_lea.sflag [#allocation3], 1
    %684 = vsyncpa %s683, 1

// kernel: _gat_stack.10
$region0: #{_gat_stack.10}
  #allocation0 [shape = 'u32[]', space=smem, size = 0x4, offset = 0x4, fixed_abs, tag = 'smem constant byte address 0x4 - core index']
  #allocation1 [shape = 'u32[144,128]{1,0:T(1,128)}', space=vmem, size = 0x12000, scoped, tag = 'internal scratch']
  %s0 = inlined_call_operand.vmem [shape: bf16[32,256], index: 0, kind: input, shape index: {}]
  %s1 = inlined_call_operand.vmem [shape: bf16[256,256], index: 1, kind: input, shape index: {}]
  %s2 = inlined_call_operand.vmem [shape: bf16[32,128], index: 2, kind: output, shape index: {0}]
  %s3 = inlined_call_operand.vmem [shape: f32[32,128], index: 3, kind: output, shape index: {1}]
  %4 = xla_tuple %s2, %s3
  %s5 = sld [smem:[#allocation0]]
  $region49: #{_gat_stack.10} parent=0
    _
  %s7 = ssub.s32 1, %s5
  %s8 = scalar_select 0, %s7, %s5
  loop: start=0, step=1, limit=4
  $region2: #{_gat_stack.10} parent=0 // loop_pre_header
    _
  $region3: #{_gat_stack.10} parent=0 // loop_header
    %s10 = sphi 0, %s14
    %p11 = scmp.ge.s32.totalorder %s10, 4
    %s20 = sphi 0, %s22
    %s23 = sphi 0, %s20
    %s24 = sphi 0, %s23
    %s40 = sphi 0, %s24
    %s44 = sphi 0, %s44
    %s46 = sphi 0, %s44
    %s47 = sphi 0, %s46
    %s61 = sphi 0, %s47
    %s67 = sphi 0, %s69
    %s70 = sphi 0, %s67
    %s71 = sphi 0, %s70
    %s87 = sphi 0, %s71
    %s93 = sphi 0, %s95
    %s96 = sphi 0, %s93
    %s97 = sphi 0, %s96
    %s113 = sphi 0, %s97
  $region4: #{_gat_stack.10} parent=0 // loop_header_branch
    %13 = sbr.rel (%p11) target = $region8
  $region5: #{_gat_stack.10} parent=0 // loop_body
    %s15 = ssub.s32 %s10, 1
    %s16 = ssub.s32 %s10, 2
    %s17 = sadd.s32 %s10, 1
    %s18 = ssub.s32 %s10, %s17
    %p19 = scmp.eq.s32.totalorder %s18, 0
    %s21 = sadd.s32 %s20, 1
    %s22 = scalar_select %p19, %s20, %s21
    %p25 = pneg %p19
    %p26 = scmp.eq.s32.totalorder %s10, 1
    %p27 = por %p25, %p26
    %p28 = scmp.ne.s32.totalorder %s20, %s23
    %p29 = scmp.eq.s32.totalorder %s10, 0
    %p30 = por %p28, %p29
    %p31 = scmp.ne.s32.totalorder %s20, %s23
    %p32 = scmp.eq.s32.totalorder %s15, 1
    %p33 = por %p31, %p32
    %p34 = scmp.ne.s32.totalorder %s23, %s24
    %p35 = scmp.eq.s32.totalorder %s15, 0
    %p36 = por %p34, %p35
    %p37 = scmp.ne.s32.totalorder %s23, %s24
    %p38 = scmp.eq.s32.totalorder %s16, 1
    %p39 = por %p37, %p38
    %p41 = scmp.ne.s32.totalorder %s24, %s40
    %p42 = scmp.eq.s32.totalorder %s16, 0
    %p43 = por %p41, %p42
    %s45 = sadd.s32 %s44, 1
    %p48 = scmp.eq.s32.totalorder %s10, 1
    %p49 = scmp.ne.s32.totalorder %s44, %s46
    %p50 = scmp.eq.s32.totalorder %s10, 0
    %p51 = por %p49, %p50
    %p52 = scmp.ne.s32.totalorder %s44, %s46
    %p53 = scmp.eq.s32.totalorder %s15, 1
    %p54 = por %p52, %p53
    %p55 = scmp.ne.s32.totalorder %s46, %s47
    %p56 = scmp.eq.s32.totalorder %s15, 0
    %p57 = por %p55, %p56
    %p58 = scmp.ne.s32.totalorder %s46, %s47
    %p59 = scmp.eq.s32.totalorder %s16, 1
    %p60 = por %p58, %p59
    %p62 = scmp.ne.s32.totalorder %s47, %s61
    %p63 = scmp.eq.s32.totalorder %s16, 0
    %p64 = por %p62, %p63
    %s65 = ssub.s32 %s10, %s17
    %p66 = scmp.eq.s32.totalorder %s65, 0
    %s68 = sadd.s32 %s67, 1
    %s69 = scalar_select %p66, %s67, %s68
    %p72 = pneg %p66
    %p73 = scmp.eq.s32.totalorder %s10, 1
    %p74 = por %p72, %p73
    %p75 = scmp.ne.s32.totalorder %s67, %s70
    %p76 = scmp.eq.s32.totalorder %s10, 0
    %p77 = por %p75, %p76
    %p78 = scmp.ne.s32.totalorder %s67, %s70
    %p79 = scmp.eq.s32.totalorder %s15, 1
    %p80 = por %p78, %p79
    %p81 = scmp.ne.s32.totalorder %s70, %s71
    %p82 = scmp.eq.s32.totalorder %s15, 0
    %p83 = por %p81, %p82
    %p84 = scmp.ne.s32.totalorder %s70, %s71
    %p85 = scmp.eq.s32.totalorder %s16, 1
    %p86 = por %p84, %p85
    %p88 = scmp.ne.s32.totalorder %s71, %s87
    %p89 = scmp.eq.s32.totalorder %s16, 0
    %p90 = por %p88, %p89
    %s91 = ssub.s32 %s10, %s17
    %p92 = scmp.eq.s32.totalorder %s91, 0
    %s94 = sadd.s32 %s93, 1
    %s95 = scalar_select %p92, %s93, %s94
    %p98 = pneg %p92
    %p99 = scmp.eq.s32.totalorder %s10, 1
    %p100 = por %p98, %p99
    %p101 = scmp.ne.s32.totalorder %s93, %s96
    %p102 = scmp.eq.s32.totalorder %s10, 0
    %p103 = por %p101, %p102
    %p104 = scmp.ne.s32.totalorder %s93, %s96
    %p105 = scmp.eq.s32.totalorder %s15, 1
    %p106 = por %p104, %p105
    %p107 = scmp.ne.s32.totalorder %s96, %s97
    %p108 = scmp.eq.s32.totalorder %s15, 0
    %p109 = por %p107, %p108
    %p110 = scmp.ne.s32.totalorder %s96, %s97
    %p111 = scmp.eq.s32.totalorder %s16, 1
    %p112 = por %p110, %p111
    %p114 = scmp.ne.s32.totalorder %s97, %s113
    %p115 = scmp.eq.s32.totalorder %s16, 0
    %p116 = por %p114, %p115
    %p117 = scmp.le.s32.totalorder 1, %s10
    %p118 = scmp.lt.s32.totalorder %s10, 3
    %p119 = pnand %p117, %p118
    %p120 = pneg %p119
    // Predicated region
    $region9: #{_gat_stack.10} parent=5 // pred_check
      _
    $region10: #{_gat_stack.10} parent=5 // pred_check_branch
      %122 = sbr.rel (%p119) target = $region12
    $region11: #{_gat_stack.10} parent=5 // pred_region
      %s123 = ssub.s32 %s10, 1
      // Predicated region
      $region13: #{_gat_stack.10} parent=11 // pred_check
        %p124 = pneg %p57
      $region14: #{_gat_stack.10} parent=11 // pred_check_branch
        %126 = sbr.rel (%p124) target = $region16
      $region15: #{_gat_stack.10} parent=11 // pred_region
        _
      $region16: #{_gat_stack.10} parent=11 // pred_fallthru
        _
    $region12: #{_gat_stack.10} parent=5 // pred_fallthru
      _
    %p127 = scmp.lt.s32.totalorder %s10, 2
    // Predicated region
    $region17: #{_gat_stack.10} parent=5 // pred_check
      %p128 = pneg %p127
    $region18: #{_gat_stack.10} parent=5 // pred_check_branch
      %130 = sbr.rel (%p128) target = $region20
    $region19: #{_gat_stack.10} parent=5 // pred_region
      // Predicated region
      $region21: #{_gat_stack.10} parent=19 // pred_check
        %p131 = pneg %p30
      $region22: #{_gat_stack.10} parent=19 // pred_check_branch
        %133 = sbr.rel (%p131) target = $region24
      $region23: #{_gat_stack.10} parent=19 // pred_region
        %s134 = smul.u32 2, %s10
        %p135 = scmp.lt.s32.totalorder %s134, 3
        %s136 = scalar_select %p135, %s134, 3
        %s137 = smul.addr %s136, 2
        %s138 = smul.addr %s137, 4
        %s139 = scalar_lea.vmem %s0, %s138
        %s140 = smul.u32 2, %s10
      $region24: #{_gat_stack.10} parent=19 // pred_fallthru
        _
    $region20: #{_gat_stack.10} parent=5 // pred_fallthru
      _
    %p141 = scmp.le.s32.totalorder 1, %s10
    %p142 = scmp.lt.s32.totalorder %s10, 3
    %p143 = pnand %p141, %p142
    %p144 = pneg %p143
    // Predicated region
    $region25: #{_gat_stack.10} parent=5 // pred_check
      _
    $region26: #{_gat_stack.10} parent=5 // pred_check_branch
      %146 = sbr.rel (%p143) target = $region28
    $region27: #{_gat_stack.10} parent=5 // pred_region
      %s147 = ssub.s32 %s10, 1
      %s148 = smul.u32 2, %s15
      %p149 = scmp.lt.s32.totalorder %s148, 3
      %s150 = scalar_select %p149, %s148, 3
      %s151 = smul.addr %s150, 2
      %s152 = smul.addr %s151, 4
      %s153 = scalar_lea.vmem %s0, %s152
      %p154 = pneg %p36
      %p155 = pneg %p33
      %p156 = pneg %p57
      %p157 = pneg %p54
      %p158 = pneg %p83
      %p159 = pneg %p80
      %s160 = smul.u32 2, %s15
      %p161 = scmp.lt.s32.totalorder %s160, 3
      %s162 = scalar_select %p161, %s160, 3
      %s163 = smul.addr %s162, 4
      %s164 = scalar_lea.vmem %s2, %s163
      %p165 = pneg %p109
      %p166 = pneg %p106
      %s167 = smul.u32 2, %s15
      %p168 = scmp.lt.s32.totalorder %s167, 3
      %s169 = scalar_select %p168, %s167, 3
      %s170 = smul.addr %s169, 8
      %s171 = scalar_lea.vmem %s3, %s170
      %s172 = smul.u32 2, %s15
      %p173 = scmp.lt.s32.totalorder %s172, 3
      %s174 = scalar_select %p173, %s172, 3
      %s175 = smul.addr %s174, 2
      %s176 = smul.addr %s175, 4
      %s177 = scalar_lea.vmem %s0, %s176
      %s178 = smul.u32 2, %s15
      %s179 = smul.u32 2, %s15
      %p180 = scmp.lt.s32.totalorder %s179, 3
      %s181 = scalar_select %p180, %s179, 3
      %s182 = smul.addr %s181, 4
      %s183 = scalar_lea.vmem %s2, %s182
      %s184 = smul.u32 2, %s15
      %s185 = smul.u32 2, %s15
      %p186 = scmp.lt.s32.totalorder %s185, 3
      %s187 = scalar_select %p186, %s185, 3
      %s188 = smul.addr %s187, 8
      %s189 = scalar_lea.vmem %s3, %s188
      %s190 = smul.u32 2, %s15
      %v191 = vld [vmem:[%s177] sm:$0xff]
      %v192 = vld [vmem:[%s177 + $0x8] sm:$0xff]
      %v193 = vld [vmem:[%s1] sm:$0xff]
      %v194 = vld [vmem:[%s1 + $0x8] sm:$0xff]
      %v195 = vld [vmem:[%s1 + $0x10] sm:$0xff]
      %v196 = vld [vmem:[%s1 + $0x18] sm:$0xff]
      %v197 = vld [vmem:[%s1 + $0x20] sm:$0xff]
      %v198 = vld [vmem:[%s1 + $0x28] sm:$0xff]
      %v199 = vld [vmem:[%s1 + $0x30] sm:$0xff]
      %v200 = vld [vmem:[%s1 + $0x38] sm:$0xff]
      %v201 = vld [vmem:[%s1 + $0x40] sm:$0xff]
      %v202 = vld [vmem:[%s1 + $0x48] sm:$0xff]
      %v203 = vld [vmem:[%s1 + $0x50] sm:$0xff]
      %v204 = vld [vmem:[%s1 + $0x58] sm:$0xff]
      %v205 = vld [vmem:[%s1 + $0x60] sm:$0xff]
      %v206 = vld [vmem:[%s1 + $0x68] sm:$0xff]
      %v207 = vld [vmem:[%s1 + $0x70] sm:$0xff]
      %v208 = vld [vmem:[%s1 + $0x78] sm:$0xff]
      %v209 = vld [vmem:[%s1 + $0x80] sm:$0xff]
      %v210 = vld [vmem:[%s1 + $0x88] sm:$0xff]
      %v211 = vld [vmem:[%s1 + $0x90] sm:$0xff]
      %v212 = vld [vmem:[%s1 + $0x98] sm:$0xff]
      %v213 = vld [vmem:[%s1 + $0xa0] sm:$0xff]
      %v214 = vld [vmem:[%s1 + $0xa8] sm:$0xff]
      %v215 = vld [vmem:[%s1 + $0xb0] sm:$0xff]
      %v216 = vld [vmem:[%s1 + $0xb8] sm:$0xff]
      %v217 = vld [vmem:[%s1 + $0xc0] sm:$0xff]
      %v218 = vld [vmem:[%s1 + $0xc8] sm:$0xff]
      %v219 = vld [vmem:[%s1 + $0xd0] sm:$0xff]
      %v220 = vld [vmem:[%s1 + $0xd8] sm:$0xff]
      %v221 = vld [vmem:[%s1 + $0xe0] sm:$0xff]
      %v222 = vld [vmem:[%s1 + $0xe8] sm:$0xff]
      %v223 = vld [vmem:[%s1 + $0xf0] sm:$0xff]
      %v224 = vld [vmem:[%s1 + $0xf8] sm:$0xff]
      %v227 = vunpack.c.l.b16 %v191
      %v228 = vunpack.c.h.b16 %v191
      %v229 = vunpack.c.l.b16 %v192
      %v230 = vunpack.c.h.b16 %v192
      %v231 = vpack.c.b16 %v229, %v227
      %v232 = vpack.c.b16 %v230, %v228
      %v267 = vunpack.c.l.b16 %v193
      %v268 = vunpack.c.h.b16 %v193
      %v269 = vunpack.c.l.b16 %v194
      %v270 = vunpack.c.h.b16 %v194
      %v271 = vunpack.c.l.b16 %v195
      %v272 = vunpack.c.h.b16 %v195
      %v273 = vunpack.c.l.b16 %v196
      %v274 = vunpack.c.h.b16 %v196
      %v275 = vunpack.c.l.b16 %v197
      %v276 = vunpack.c.h.b16 %v197
      %v277 = vunpack.c.l.b16 %v198
      %v278 = vunpack.c.h.b16 %v198
      %v279 = vunpack.c.l.b16 %v199
      %v280 = vunpack.c.h.b16 %v199
      %v281 = vunpack.c.l.b16 %v200
      %v282 = vunpack.c.h.b16 %v200
      %v283 = vunpack.c.l.b16 %v201
      %v284 = vunpack.c.h.b16 %v201
      %v285 = vunpack.c.l.b16 %v202
      %v286 = vunpack.c.h.b16 %v202
      %v287 = vunpack.c.l.b16 %v203
      %v288 = vunpack.c.h.b16 %v203
      %v289 = vunpack.c.l.b16 %v204
      %v290 = vunpack.c.h.b16 %v204
      %v291 = vunpack.c.l.b16 %v205
      %v292 = vunpack.c.h.b16 %v205
      %v293 = vunpack.c.l.b16 %v206
      %v294 = vunpack.c.h.b16 %v206
      %v295 = vunpack.c.l.b16 %v207
      %v296 = vunpack.c.h.b16 %v207
      %v297 = vunpack.c.l.b16 %v208
      %v298 = vunpack.c.h.b16 %v208
      %v299 = vunpack.c.l.b16 %v209
      %v300 = vunpack.c.h.b16 %v209
      %v301 = vunpack.c.l.b16 %v210
      %v302 = vunpack.c.h.b16 %v210
      %v303 = vunpack.c.l.b16 %v211
      %v304 = vunpack.c.h.b16 %v211
      %v305 = vunpack.c.l.b16 %v212
      %v306 = vunpack.c.h.b16 %v212
      %v307 = vunpack.c.l.b16 %v213
      %v308 = vunpack.c.h.b16 %v213
      %v309 = vunpack.c.l.b16 %v214
      %v310 = vunpack.c.h.b16 %v214
      %v311 = vunpack.c.l.b16 %v215
      %v312 = vunpack.c.h.b16 %v215
      %v313 = vunpack.c.l.b16 %v216
      %v314 = vunpack.c.h.b16 %v216
      %v315 = vunpack.c.l.b16 %v217
      %v316 = vunpack.c.h.b16 %v217
      %v317 = vunpack.c.l.b16 %v218
      %v318 = vunpack.c.h.b16 %v218
      %v319 = vunpack.c.l.b16 %v219
      %v320 = vunpack.c.h.b16 %v219
      %v321 = vunpack.c.l.b16 %v220
      %v322 = vunpack.c.h.b16 %v220
      %v323 = vunpack.c.l.b16 %v221
      %v324 = vunpack.c.h.b16 %v221
      %v325 = vunpack.c.l.b16 %v222
      %v326 = vunpack.c.h.b16 %v222
      %v327 = vunpack.c.l.b16 %v223
      %v328 = vunpack.c.h.b16 %v223
      %v329 = vunpack.c.l.b16 %v224
      %v330 = vunpack.c.h.b16 %v224
      %v331 = vpack.c.b16 %v269, %v267
      %v332 = vpack.c.b16 %v270, %v268
      %v333 = vpack.c.b16 %v273, %v271
      %v334 = vpack.c.b16 %v274, %v272
      %v335 = vpack.c.b16 %v277, %v275
      %v336 = vpack.c.b16 %v278, %v276
      %v337 = vpack.c.b16 %v281, %v279
      %v338 = vpack.c.b16 %v282, %v280
      %v339 = vpack.c.b16 %v285, %v283
      %v340 = vpack.c.b16 %v286, %v284
      %v341 = vpack.c.b16 %v289, %v287
      %v342 = vpack.c.b16 %v290, %v288
      %v343 = vpack.c.b16 %v293, %v291
      %v344 = vpack.c.b16 %v294, %v292
      %v345 = vpack.c.b16 %v297, %v295
      %v346 = vpack.c.b16 %v298, %v296
      %v347 = vpack.c.b16 %v301, %v299
      %v348 = vpack.c.b16 %v302, %v300
      %v349 = vpack.c.b16 %v305, %v303
      %v350 = vpack.c.b16 %v306, %v304
      %v351 = vpack.c.b16 %v309, %v307
      %v352 = vpack.c.b16 %v310, %v308
      %v353 = vpack.c.b16 %v313, %v311
      %v354 = vpack.c.b16 %v314, %v312
      %v355 = vpack.c.b16 %v317, %v315
      %v356 = vpack.c.b16 %v318, %v316
      %v357 = vpack.c.b16 %v321, %v319
      %v358 = vpack.c.b16 %v322, %v320
      %v359 = vpack.c.b16 %v325, %v323
      %v360 = vpack.c.b16 %v326, %v324
      %v361 = vpack.c.b16 %v329, %v327
      %v362 = vpack.c.b16 %v330, %v328
      %395 = vmatprep.subr.bf16.mxu0 %v332
      %396 = vmatpush1.bf16.msra.mxu0 %v331
      %397 = vmatprep.subr.bf16.mxu0 %v334
      %398 = vmatpush1.bf16.msra.mxu0 %v333
      %399 = vmatprep.subr.bf16.mxu0 %v336
      %400 = vmatpush1.bf16.msra.mxu0 %v335
      %401 = vmatprep.subr.bf16.mxu0 %v338
      %402 = vmatpush1.bf16.msra.mxu0 %v337
      %403 = vmatprep.subr.bf16.mxu0 %v340
      %404 = vmatpush1.bf16.msra.mxu0 %v339
      %405 = vmatprep.subr.bf16.mxu0 %v342
      %406 = vmatpush1.bf16.msra.mxu0 %v341
      %407 = vmatprep.subr.bf16.mxu0 %v344
      %408 = vmatpush1.bf16.msra.mxu0 %v343
      %409 = vmatprep.subr.bf16.mxu0 %v346
      %410 = vmatpush1.bf16.msra.mxu0 %v345
      %411 = vmatprep.subr.bf16.mxu0 %v348
      %412 = vmatpush1.bf16.msra.mxu0 %v347
      %413 = vmatprep.subr.bf16.mxu0 %v350
      %414 = vmatpush1.bf16.msra.mxu0 %v349
      %415 = vmatprep.subr.bf16.mxu0 %v352
      %416 = vmatpush1.bf16.msra.mxu0 %v351
      %417 = vmatprep.subr.bf16.mxu0 %v354
      %418 = vmatpush1.bf16.msra.mxu0 %v353
      %419 = vmatprep.subr.bf16.mxu0 %v356
      %420 = vmatpush1.bf16.msra.mxu0 %v355
      %421 = vmatprep.subr.bf16.mxu0 %v358
      %422 = vmatpush1.bf16.msra.mxu0 %v357
      %423 = vmatprep.subr.bf16.mxu0 %v360
      %424 = vmatpush1.bf16.msra.mxu0 %v359
      %425 = vmatprep.subr.bf16.mxu0 %v362
      %426 = vmatpush1.bf16.msra.mxu0 %v361
      %427 = vmatprep.mubr.bf16.mxu0 %v232
      %428 = vmatmul.mubr.bf16.gmra.mrb[0].mxu0 %v231
      %v429 = vpop.f32.mrb[0].mxu0
      %v430 = vadd.f32 0.0, %v429
      %v431 = vpop.f32.mrb[0].mxu0
      %v432 = vadd.f32 0.0, %v431
      %v433 = vpop.f32.mrb[0].mxu0
      %v434 = vadd.f32 0.0, %v433
      %v435 = vpop.f32.mrb[0].mxu0
      %v436 = vadd.f32 0.0, %v435
      %437 = vdwg.mxu0
      %v438 = vpack.c.bf16 %v434, %v430
      %v440 = vunpack.c.l.b16 %v438
      %v441 = vunpack.c.h.b16 %v438
      %v442 = vpack.c.b16 %v440, %v440
      %v443 = vpack.c.b16 %v441, %v441
      %446 = vst [vmem:[%s183] sm:$0xf] %v442
      %447 = vst [vmem:[%s183 + $0x4] sm:$0xf] %v443
      %448 = vst [vmem:[%s189] sm:$0xff] %v432
      %449 = vst [vmem:[%s189 + $0x8] sm:$0xff] %v436
      %s450 = smul.u32 2, %s15
      %p451 = scmp.lt.s32.totalorder %s450, 3
      %s452 = scalar_select %p451, %s450, 3
      %s453 = smul.addr %s452, 4
      %s454 = scalar_lea.vmem %s2, %s453
      %s455 = smul.u32 2, %s15
      %p456 = scmp.lt.s32.totalorder %s455, 3
      %s457 = scalar_select %p456, %s455, 3
      %s458 = smul.addr %s457, 8
      %s459 = scalar_lea.vmem %s3, %s458
      // Predicated region
      $region29: #{_gat_stack.10} parent=27 // pred_check
        %p460 = pneg %p80
      $region30: #{_gat_stack.10} parent=27 // pred_check_branch
        %462 = sbr.rel (%p460) target = $region32
      $region31: #{_gat_stack.10} parent=27 // pred_region
        %s463 = smul.u32 2, %s15
      $region32: #{_gat_stack.10} parent=27 // pred_fallthru
        _
      // Predicated region
      $region33: #{_gat_stack.10} parent=27 // pred_check
        %p464 = pneg %p106
      $region34: #{_gat_stack.10} parent=27 // pred_check_branch
        %466 = sbr.rel (%p464) target = $region36
      $region35: #{_gat_stack.10} parent=27 // pred_region
        %s467 = smul.u32 2, %s15
      $region36: #{_gat_stack.10} parent=27 // pred_fallthru
        _
    $region28: #{_gat_stack.10} parent=5 // pred_fallthru
      _
    %p468 = scmp.le.s32.totalorder 2, %s10
    // Predicated region
    $region37: #{_gat_stack.10} parent=5 // pred_check
      %p469 = pneg %p468
    $region38: #{_gat_stack.10} parent=5 // pred_check_branch
      %471 = sbr.rel (%p469) target = $region40
    $region39: #{_gat_stack.10} parent=5 // pred_region
      %s472 = ssub.s32 %s10, 2
      // Predicated region
      $region41: #{_gat_stack.10} parent=39 // pred_check
        %p473 = pneg %p86
      $region42: #{_gat_stack.10} parent=39 // pred_check_branch
        %475 = sbr.rel (%p473) target = $region44
      $region43: #{_gat_stack.10} parent=39 // pred_region
        %s476 = smul.u32 2, %s16
        %p477 = scmp.lt.s32.totalorder %s476, 3
        %s478 = scalar_select %p477, %s476, 3
        %s479 = smul.addr %s478, 4
        %s480 = scalar_lea.vmem %s2, %s479
      $region44: #{_gat_stack.10} parent=39 // pred_fallthru
        _
      // Predicated region
      $region45: #{_gat_stack.10} parent=39 // pred_check
        %p481 = pneg %p112
      $region46: #{_gat_stack.10} parent=39 // pred_check_branch
        %483 = sbr.rel (%p481) target = $region48
      $region47: #{_gat_stack.10} parent=39 // pred_region
        %s484 = smul.u32 2, %s16
        %p485 = scmp.lt.s32.totalorder %s484, 3
        %s486 = scalar_select %p485, %s484, 3
        %s487 = smul.addr %s486, 8
        %s488 = scalar_lea.vmem %s3, %s487
      $region48: #{_gat_stack.10} parent=39 // pred_fallthru
        _
    $region40: #{_gat_stack.10} parent=5 // pred_fallthru
      _
  $region6: #{_gat_stack.10} parent=0 // loop_footer
    %s14 = sadd.s32 1, %s10
  $region7: #{_gat_stack.10} parent=0 // loop_footer_branch
    %9 = sbr.rel target = $region3
  $region8: #{_gat_stack.10} parent=0 // loop_exit
    _

// kernel: _gat_stack.8
$region0: #{_gat_stack.8}
  #allocation0 [shape = 'u32[]', space=smem, size = 0x4, offset = 0x4, fixed_abs, tag = 'smem constant byte address 0x4 - core index']
  #allocation1 [shape = 'u32[144,128]{1,0:T(1,128)}', space=vmem, size = 0x12000, scoped, tag = 'internal scratch']
  %s0 = inlined_call_operand.vmem [shape: bf16[32,256], index: 0, kind: input, shape index: {}]
  %s1 = inlined_call_operand.vmem [shape: bf16[256,384], index: 1, kind: input, shape index: {}]
  %s2 = inlined_call_operand.vmem [shape: bf16[32,256], index: 2, kind: output, shape index: {0}]
  %s3 = inlined_call_operand.vmem [shape: f32[32,128], index: 3, kind: output, shape index: {1}]
  %4 = xla_tuple %s2, %s3
  %s5 = sld [smem:[#allocation0]]
  $region49: #{_gat_stack.8} parent=0
    _
  %s7 = ssub.s32 1, %s5
  %s8 = scalar_select 0, %s7, %s5
  loop: start=0, step=1, limit=4
  $region2: #{_gat_stack.8} parent=0 // loop_pre_header
    _
  $region3: #{_gat_stack.8} parent=0 // loop_header
    %s10 = sphi 0, %s14
    %p11 = scmp.ge.s32.totalorder %s10, 4
    %s20 = sphi 0, %s22
    %s23 = sphi 0, %s20
    %s24 = sphi 0, %s23
    %s40 = sphi 0, %s24
    %s44 = sphi 0, %s44
    %s46 = sphi 0, %s44
    %s47 = sphi 0, %s46
    %s61 = sphi 0, %s47
    %s67 = sphi 0, %s69
    %s70 = sphi 0, %s67
    %s71 = sphi 0, %s70
    %s87 = sphi 0, %s71
    %s93 = sphi 0, %s95
    %s96 = sphi 0, %s93
    %s97 = sphi 0, %s96
    %s113 = sphi 0, %s97
  $region4: #{_gat_stack.8} parent=0 // loop_header_branch
    %13 = sbr.rel (%p11) target = $region8
  $region5: #{_gat_stack.8} parent=0 // loop_body
    %s15 = ssub.s32 %s10, 1
    %s16 = ssub.s32 %s10, 2
    %s17 = sadd.s32 %s10, 1
    %s18 = ssub.s32 %s10, %s17
    %p19 = scmp.eq.s32.totalorder %s18, 0
    %s21 = sadd.s32 %s20, 1
    %s22 = scalar_select %p19, %s20, %s21
    %p25 = pneg %p19
    %p26 = scmp.eq.s32.totalorder %s10, 1
    %p27 = por %p25, %p26
    %p28 = scmp.ne.s32.totalorder %s20, %s23
    %p29 = scmp.eq.s32.totalorder %s10, 0
    %p30 = por %p28, %p29
    %p31 = scmp.ne.s32.totalorder %s20, %s23
    %p32 = scmp.eq.s32.totalorder %s15, 1
    %p33 = por %p31, %p32
    %p34 = scmp.ne.s32.totalorder %s23, %s24
    %p35 = scmp.eq.s32.totalorder %s15, 0
    %p36 = por %p34, %p35
    %p37 = scmp.ne.s32.totalorder %s23, %s24
    %p38 = scmp.eq.s32.totalorder %s16, 1
    %p39 = por %p37, %p38
    %p41 = scmp.ne.s32.totalorder %s24, %s40
    %p42 = scmp.eq.s32.totalorder %s16, 0
    %p43 = por %p41, %p42
    %s45 = sadd.s32 %s44, 1
    %p48 = scmp.eq.s32.totalorder %s10, 1
    %p49 = scmp.ne.s32.totalorder %s44, %s46
    %p50 = scmp.eq.s32.totalorder %s10, 0
    %p51 = por %p49, %p50
    %p52 = scmp.ne.s32.totalorder %s44, %s46
    %p53 = scmp.eq.s32.totalorder %s15, 1
    %p54 = por %p52, %p53
    %p55 = scmp.ne.s32.totalorder %s46, %s47
    %p56 = scmp.eq.s32.totalorder %s15, 0
    %p57 = por %p55, %p56
    %p58 = scmp.ne.s32.totalorder %s46, %s47
    %p59 = scmp.eq.s32.totalorder %s16, 1
    %p60 = por %p58, %p59
    %p62 = scmp.ne.s32.totalorder %s47, %s61
    %p63 = scmp.eq.s32.totalorder %s16, 0
    %p64 = por %p62, %p63
    %s65 = ssub.s32 %s10, %s17
    %p66 = scmp.eq.s32.totalorder %s65, 0
    %s68 = sadd.s32 %s67, 1
    %s69 = scalar_select %p66, %s67, %s68
    %p72 = pneg %p66
    %p73 = scmp.eq.s32.totalorder %s10, 1
    %p74 = por %p72, %p73
    %p75 = scmp.ne.s32.totalorder %s67, %s70
    %p76 = scmp.eq.s32.totalorder %s10, 0
    %p77 = por %p75, %p76
    %p78 = scmp.ne.s32.totalorder %s67, %s70
    %p79 = scmp.eq.s32.totalorder %s15, 1
    %p80 = por %p78, %p79
    %p81 = scmp.ne.s32.totalorder %s70, %s71
    %p82 = scmp.eq.s32.totalorder %s15, 0
    %p83 = por %p81, %p82
    %p84 = scmp.ne.s32.totalorder %s70, %s71
    %p85 = scmp.eq.s32.totalorder %s16, 1
    %p86 = por %p84, %p85
    %p88 = scmp.ne.s32.totalorder %s71, %s87
    %p89 = scmp.eq.s32.totalorder %s16, 0
    %p90 = por %p88, %p89
    %s91 = ssub.s32 %s10, %s17
    %p92 = scmp.eq.s32.totalorder %s91, 0
    %s94 = sadd.s32 %s93, 1
    %s95 = scalar_select %p92, %s93, %s94
    %p98 = pneg %p92
    %p99 = scmp.eq.s32.totalorder %s10, 1
    %p100 = por %p98, %p99
    %p101 = scmp.ne.s32.totalorder %s93, %s96
    %p102 = scmp.eq.s32.totalorder %s10, 0
    %p103 = por %p101, %p102
    %p104 = scmp.ne.s32.totalorder %s93, %s96
    %p105 = scmp.eq.s32.totalorder %s15, 1
    %p106 = por %p104, %p105
    %p107 = scmp.ne.s32.totalorder %s96, %s97
    %p108 = scmp.eq.s32.totalorder %s15, 0
    %p109 = por %p107, %p108
    %p110 = scmp.ne.s32.totalorder %s96, %s97
    %p111 = scmp.eq.s32.totalorder %s16, 1
    %p112 = por %p110, %p111
    %p114 = scmp.ne.s32.totalorder %s97, %s113
    %p115 = scmp.eq.s32.totalorder %s16, 0
    %p116 = por %p114, %p115
    %p117 = scmp.le.s32.totalorder 1, %s10
    %p118 = scmp.lt.s32.totalorder %s10, 3
    %p119 = pnand %p117, %p118
    %p120 = pneg %p119
    // Predicated region
    $region9: #{_gat_stack.8} parent=5 // pred_check
      _
    $region10: #{_gat_stack.8} parent=5 // pred_check_branch
      %122 = sbr.rel (%p119) target = $region12
    $region11: #{_gat_stack.8} parent=5 // pred_region
      %s123 = ssub.s32 %s10, 1
      // Predicated region
      $region13: #{_gat_stack.8} parent=11 // pred_check
        %p124 = pneg %p57
      $region14: #{_gat_stack.8} parent=11 // pred_check_branch
        %126 = sbr.rel (%p124) target = $region16
      $region15: #{_gat_stack.8} parent=11 // pred_region
        _
      $region16: #{_gat_stack.8} parent=11 // pred_fallthru
        _
    $region12: #{_gat_stack.8} parent=5 // pred_fallthru
      _
    %p127 = scmp.lt.s32.totalorder %s10, 2
    // Predicated region
    $region17: #{_gat_stack.8} parent=5 // pred_check
      %p128 = pneg %p127
    $region18: #{_gat_stack.8} parent=5 // pred_check_branch
      %130 = sbr.rel (%p128) target = $region20
    $region19: #{_gat_stack.8} parent=5 // pred_region
      // Predicated region
      $region21: #{_gat_stack.8} parent=19 // pred_check
        %p131 = pneg %p30
      $region22: #{_gat_stack.8} parent=19 // pred_check_branch
        %133 = sbr.rel (%p131) target = $region24
      $region23: #{_gat_stack.8} parent=19 // pred_region
        %s134 = smul.u32 2, %s10
        %p135 = scmp.lt.s32.totalorder %s134, 3
        %s136 = scalar_select %p135, %s134, 3
        %s137 = smul.addr %s136, 2
        %s138 = smul.addr %s137, 4
        %s139 = scalar_lea.vmem %s0, %s138
        %s140 = smul.u32 2, %s10
      $region24: #{_gat_stack.8} parent=19 // pred_fallthru
        _
    $region20: #{_gat_stack.8} parent=5 // pred_fallthru
      _
    %p141 = scmp.le.s32.totalorder 1, %s10
    %p142 = scmp.lt.s32.totalorder %s10, 3
    %p143 = pnand %p141, %p142
    %p144 = pneg %p143
    // Predicated region
    $region25: #{_gat_stack.8} parent=5 // pred_check
      _
    $region26: #{_gat_stack.8} parent=5 // pred_check_branch
      %146 = sbr.rel (%p143) target = $region28
    $region27: #{_gat_stack.8} parent=5 // pred_region
      %s147 = ssub.s32 %s10, 1
      %s148 = smul.u32 2, %s15
      %p149 = scmp.lt.s32.totalorder %s148, 3
      %s150 = scalar_select %p149, %s148, 3
      %s151 = smul.addr %s150, 2
      %s152 = smul.addr %s151, 4
      %s153 = scalar_lea.vmem %s0, %s152
      %p154 = pneg %p36
      %p155 = pneg %p33
      %p156 = pneg %p57
      %p157 = pneg %p54
      %p158 = pneg %p83
      %p159 = pneg %p80
      %s160 = smul.u32 2, %s15
      %p161 = scmp.lt.s32.totalorder %s160, 3
      %s162 = scalar_select %p161, %s160, 3
      %s163 = smul.addr %s162, 2
      %s164 = smul.addr %s163, 4
      %s165 = scalar_lea.vmem %s2, %s164
      %p166 = pneg %p109
      %p167 = pneg %p106
      %s168 = smul.u32 2, %s15
      %p169 = scmp.lt.s32.totalorder %s168, 3
      %s170 = scalar_select %p169, %s168, 3
      %s171 = smul.addr %s170, 8
      %s172 = scalar_lea.vmem %s3, %s171
      %s173 = smul.u32 2, %s15
      %p174 = scmp.lt.s32.totalorder %s173, 3
      %s175 = scalar_select %p174, %s173, 3
      %s176 = smul.addr %s175, 2
      %s177 = smul.addr %s176, 4
      %s178 = scalar_lea.vmem %s0, %s177
      %s179 = smul.u32 2, %s15
      %s180 = smul.u32 2, %s15
      %p181 = scmp.lt.s32.totalorder %s180, 3
      %s182 = scalar_select %p181, %s180, 3
      %s183 = smul.addr %s182, 2
      %s184 = smul.addr %s183, 4
      %s185 = scalar_lea.vmem %s2, %s184
      %s186 = smul.u32 2, %s15
      %s187 = smul.u32 2, %s15
      %p188 = scmp.lt.s32.totalorder %s187, 3
      %s189 = scalar_select %p188, %s187, 3
      %s190 = smul.addr %s189, 8
      %s191 = scalar_lea.vmem %s3, %s190
      %s192 = smul.u32 2, %s15
      %v194 = vld [vmem:[%s178] sm:$0xff]
      %v195 = vld [vmem:[%s178 + $0x8] sm:$0xff]
      %v196 = vld [vmem:[%s1] sm:$0xff]
      %v197 = vld [vmem:[%s1 + $0x8] sm:$0xf]
      %v198 = vld [vmem:[%s1 + $0xc] sm:$0xff]
      %v199 = vld [vmem:[%s1 + $0x14] sm:$0xf]
      %v200 = vld [vmem:[%s1 + $0x18] sm:$0xff]
      %v201 = vld [vmem:[%s1 + $0x20] sm:$0xf]
      %v202 = vld [vmem:[%s1 + $0x24] sm:$0xff]
      %v203 = vld [vmem:[%s1 + $0x2c] sm:$0xf]
      %v204 = vld [vmem:[%s1 + $0x30] sm:$0xff]
      %v205 = vld [vmem:[%s1 + $0x38] sm:$0xf]
      %v206 = vld [vmem:[%s1 + $0x3c] sm:$0xff]
      %v207 = vld [vmem:[%s1 + $0x44] sm:$0xf]
      %v208 = vld [vmem:[%s1 + $0x48] sm:$0xff]
      %v209 = vld [vmem:[%s1 + $0x50] sm:$0xf]
      %v210 = vld [vmem:[%s1 + $0x54] sm:$0xff]
      %v211 = vld [vmem:[%s1 + $0x5c] sm:$0xf]
      %v212 = vld [vmem:[%s1 + $0x60] sm:$0xff]
      %v213 = vld [vmem:[%s1 + $0x68] sm:$0xf]
      %v214 = vld [vmem:[%s1 + $0x6c] sm:$0xff]
      %v215 = vld [vmem:[%s1 + $0x74] sm:$0xf]
      %v216 = vld [vmem:[%s1 + $0x78] sm:$0xff]
      %v217 = vld [vmem:[%s1 + $0x80] sm:$0xf]
      %v218 = vld [vmem:[%s1 + $0x84] sm:$0xff]
      %v219 = vld [vmem:[%s1 + $0x8c] sm:$0xf]
      %v220 = vld [vmem:[%s1 + $0x90] sm:$0xff]
      %v221 = vld [vmem:[%s1 + $0x98] sm:$0xf]
      %v222 = vld [vmem:[%s1 + $0x9c] sm:$0xff]
      %v223 = vld [vmem:[%s1 + $0xa4] sm:$0xf]
      %v224 = vld [vmem:[%s1 + $0xa8] sm:$0xff]
      %v225 = vld [vmem:[%s1 + $0xb0] sm:$0xf]
      %v226 = vld [vmem:[%s1 + $0xb4] sm:$0xff]
      %v227 = vld [vmem:[%s1 + $0xbc] sm:$0xf]
      %v228 = vld [vmem:[%s1 + $0xc0] sm:$0xff]
      %v229 = vld [vmem:[%s1 + $0xc8] sm:$0xf]
      %v230 = vld [vmem:[%s1 + $0xcc] sm:$0xff]
      %v231 = vld [vmem:[%s1 + $0xd4] sm:$0xf]
      %v232 = vld [vmem:[%s1 + $0xd8] sm:$0xff]
      %v233 = vld [vmem:[%s1 + $0xe0] sm:$0xf]
      %v234 = vld [vmem:[%s1 + $0xe4] sm:$0xff]
      %v235 = vld [vmem:[%s1 + $0xec] sm:$0xf]
      %v236 = vld [vmem:[%s1 + $0xf0] sm:$0xff]
      %v237 = vld [vmem:[%s1 + $0xf8] sm:$0xf]
      %v238 = vld [vmem:[%s1 + $0xfc] sm:$0xff]
      %v239 = vld [vmem:[%s1 + $0x104] sm:$0xf]
      %v240 = vld [vmem:[%s1 + $0x108] sm:$0xff]
      %v241 = vld [vmem:[%s1 + $0x110] sm:$0xf]
      %v242 = vld [vmem:[%s1 + $0x114] sm:$0xff]
      %v243 = vld [vmem:[%s1 + $0x11c] sm:$0xf]
      %v244 = vld [vmem:[%s1 + $0x120] sm:$0xff]
      %v245 = vld [vmem:[%s1 + $0x128] sm:$0xf]
      %v246 = vld [vmem:[%s1 + $0x12c] sm:$0xff]
      %v247 = vld [vmem:[%s1 + $0x134] sm:$0xf]
      %v248 = vld [vmem:[%s1 + $0x138] sm:$0xff]
      %v249 = vld [vmem:[%s1 + $0x140] sm:$0xf]
      %v250 = vld [vmem:[%s1 + $0x144] sm:$0xff]
      %v251 = vld [vmem:[%s1 + $0x14c] sm:$0xf]
      %v252 = vld [vmem:[%s1 + $0x150] sm:$0xff]
      %v253 = vld [vmem:[%s1 + $0x158] sm:$0xf]
      %v254 = vld [vmem:[%s1 + $0x15c] sm:$0xff]
      %v255 = vld [vmem:[%s1 + $0x164] sm:$0xf]
      %v256 = vld [vmem:[%s1 + $0x168] sm:$0xff]
      %v257 = vld [vmem:[%s1 + $0x170] sm:$0xf]
      %v258 = vld [vmem:[%s1 + $0x174] sm:$0xff]
      %v259 = vld [vmem:[%s1 + $0x17c] sm:$0xf]
      %v262 = vunpack.c.l.b16 %v194
      %v263 = vunpack.c.h.b16 %v194
      %v264 = vunpack.c.l.b16 %v195
      %v265 = vunpack.c.h.b16 %v195
      %v266 = vpack.c.b16 %v264, %v262
      %v267 = vpack.c.b16 %v265, %v263
      %v334 = vunpack.c.l.b16 %v196
      %v335 = vunpack.c.h.b16 %v196
      %v336 = vunpack.c.l.b16 %v197
      %v337 = vunpack.c.l.b16 %v198
      %v338 = vunpack.c.h.b16 %v198
      %v339 = vunpack.c.l.b16 %v199
      %v340 = vunpack.c.l.b16 %v200
      %v341 = vunpack.c.h.b16 %v200
      %v342 = vunpack.c.l.b16 %v201
      %v343 = vunpack.c.l.b16 %v202
      %v344 = vunpack.c.h.b16 %v202
      %v345 = vunpack.c.l.b16 %v203
      %v346 = vunpack.c.l.b16 %v204
      %v347 = vunpack.c.h.b16 %v204
      %v348 = vunpack.c.l.b16 %v205
      %v349 = vunpack.c.l.b16 %v206
      %v350 = vunpack.c.h.b16 %v206
      %v351 = vunpack.c.l.b16 %v207
      %v352 = vunpack.c.l.b16 %v208
      %v353 = vunpack.c.h.b16 %v208
      %v354 = vunpack.c.l.b16 %v209
      %v355 = vunpack.c.l.b16 %v210
      %v356 = vunpack.c.h.b16 %v210
      %v357 = vunpack.c.l.b16 %v211
      %v358 = vunpack.c.l.b16 %v212
      %v359 = vunpack.c.h.b16 %v212
      %v360 = vunpack.c.l.b16 %v213
      %v361 = vunpack.c.l.b16 %v214
      %v362 = vunpack.c.h.b16 %v214
      %v363 = vunpack.c.l.b16 %v215
      %v364 = vunpack.c.l.b16 %v216
      %v365 = vunpack.c.h.b16 %v216
      %v366 = vunpack.c.l.b16 %v217
      %v367 = vunpack.c.l.b16 %v218
      %v368 = vunpack.c.h.b16 %v218
      %v369 = vunpack.c.l.b16 %v219
      %v370 = vunpack.c.l.b16 %v220
      %v371 = vunpack.c.h.b16 %v220
      %v372 = vunpack.c.l.b16 %v221
      %v373 = vunpack.c.l.b16 %v222
      %v374 = vunpack.c.h.b16 %v222
      %v375 = vunpack.c.l.b16 %v223
      %v376 = vunpack.c.l.b16 %v224
      %v377 = vunpack.c.h.b16 %v224
      %v378 = vunpack.c.l.b16 %v225
      %v379 = vunpack.c.l.b16 %v226
      %v380 = vunpack.c.h.b16 %v226
      %v381 = vunpack.c.l.b16 %v227
      %v382 = vunpack.c.l.b16 %v228
      %v383 = vunpack.c.h.b16 %v228
      %v384 = vunpack.c.l.b16 %v229
      %v385 = vunpack.c.l.b16 %v230
      %v386 = vunpack.c.h.b16 %v230
      %v387 = vunpack.c.l.b16 %v231
      %v388 = vunpack.c.l.b16 %v232
      %v389 = vunpack.c.h.b16 %v232
      %v390 = vunpack.c.l.b16 %v233
      %v391 = vunpack.c.l.b16 %v234
      %v392 = vunpack.c.h.b16 %v234
      %v393 = vunpack.c.l.b16 %v235
      %v394 = vunpack.c.l.b16 %v236
      %v395 = vunpack.c.h.b16 %v236
      %v396 = vunpack.c.l.b16 %v237
      %v397 = vunpack.c.l.b16 %v238
      %v398 = vunpack.c.h.b16 %v238
      %v399 = vunpack.c.l.b16 %v239
      %v400 = vunpack.c.l.b16 %v240
      %v401 = vunpack.c.h.b16 %v240
      %v402 = vunpack.c.l.b16 %v241
      %v403 = vunpack.c.l.b16 %v242
      %v404 = vunpack.c.h.b16 %v242
      %v405 = vunpack.c.l.b16 %v243
      %v406 = vunpack.c.l.b16 %v244
      %v407 = vunpack.c.h.b16 %v244
      %v408 = vunpack.c.l.b16 %v245
      %v409 = vunpack.c.l.b16 %v246
      %v410 = vunpack.c.h.b16 %v246
      %v411 = vunpack.c.l.b16 %v247
      %v412 = vunpack.c.l.b16 %v248
      %v413 = vunpack.c.h.b16 %v248
      %v414 = vunpack.c.l.b16 %v249
      %v415 = vunpack.c.l.b16 %v250
      %v416 = vunpack.c.h.b16 %v250
      %v417 = vunpack.c.l.b16 %v251
      %v418 = vunpack.c.l.b16 %v252
      %v419 = vunpack.c.h.b16 %v252
      %v420 = vunpack.c.l.b16 %v253
      %v421 = vunpack.c.l.b16 %v254
      %v422 = vunpack.c.h.b16 %v254
      %v423 = vunpack.c.l.b16 %v255
      %v424 = vunpack.c.l.b16 %v256
      %v425 = vunpack.c.h.b16 %v256
      %v426 = vunpack.c.l.b16 %v257
      %v427 = vunpack.c.l.b16 %v258
      %v428 = vunpack.c.h.b16 %v258
      %v429 = vunpack.c.l.b16 %v259
      %v430 = vpack.c.b16 %v337, %v334
      %v431 = vpack.c.b16 %v338, %v335
      %v432 = vpack.c.b16 %v339, %v336
      %v433 = vpack.c.b16 %v343, %v340
      %v434 = vpack.c.b16 %v344, %v341
      %v435 = vpack.c.b16 %v345, %v342
      %v436 = vpack.c.b16 %v349, %v346
      %v437 = vpack.c.b16 %v350, %v347
      %v438 = vpack.c.b16 %v351, %v348
      %v439 = vpack.c.b16 %v355, %v352
      %v440 = vpack.c.b16 %v356, %v353
      %v441 = vpack.c.b16 %v357, %v354
      %v442 = vpack.c.b16 %v361, %v358
      %v443 = vpack.c.b16 %v362, %v359
      %v444 = vpack.c.b16 %v363, %v360
      %v445 = vpack.c.b16 %v367, %v364
      %v446 = vpack.c.b16 %v368, %v365
      %v447 = vpack.c.b16 %v369, %v366
      %v448 = vpack.c.b16 %v373, %v370
      %v449 = vpack.c.b16 %v374, %v371
      %v450 = vpack.c.b16 %v375, %v372
      %v451 = vpack.c.b16 %v379, %v376
      %v452 = vpack.c.b16 %v380, %v377
      %v453 = vpack.c.b16 %v381, %v378
      %v454 = vpack.c.b16 %v385, %v382
      %v455 = vpack.c.b16 %v386, %v383
      %v456 = vpack.c.b16 %v387, %v384
      %v457 = vpack.c.b16 %v391, %v388
      %v458 = vpack.c.b16 %v392, %v389
      %v459 = vpack.c.b16 %v393, %v390
      %v460 = vpack.c.b16 %v397, %v394
      %v461 = vpack.c.b16 %v398, %v395
      %v462 = vpack.c.b16 %v399, %v396
      %v463 = vpack.c.b16 %v403, %v400
      %v464 = vpack.c.b16 %v404, %v401
      %v465 = vpack.c.b16 %v405, %v402
      %v466 = vpack.c.b16 %v409, %v406
      %v467 = vpack.c.b16 %v410, %v407
      %v468 = vpack.c.b16 %v411, %v408
      %v469 = vpack.c.b16 %v415, %v412
      %v470 = vpack.c.b16 %v416, %v413
      %v471 = vpack.c.b16 %v417, %v414
      %v472 = vpack.c.b16 %v421, %v418
      %v473 = vpack.c.b16 %v422, %v419
      %v474 = vpack.c.b16 %v423, %v420
      %v475 = vpack.c.b16 %v427, %v424
      %v476 = vpack.c.b16 %v428, %v425
      %v477 = vpack.c.b16 %v429, %v426
      %526 = vmatprep.subr.bf16.mxu0 %v431
      %527 = vmatpush1.bf16.msra.mxu0 %v430
      %528 = vmatprep.subr.bf16.mxu0 %v434
      %529 = vmatpush1.bf16.msra.mxu0 %v433
      %530 = vmatprep.subr.bf16.mxu0 %v437
      %531 = vmatpush1.bf16.msra.mxu0 %v436
      %532 = vmatprep.subr.bf16.mxu0 %v440
      %533 = vmatpush1.bf16.msra.mxu0 %v439
      %534 = vmatprep.subr.bf16.mxu0 %v443
      %535 = vmatpush1.bf16.msra.mxu0 %v442
      %536 = vmatprep.subr.bf16.mxu0 %v446
      %537 = vmatpush1.bf16.msra.mxu0 %v445
      %538 = vmatprep.subr.bf16.mxu0 %v449
      %539 = vmatpush1.bf16.msra.mxu0 %v448
      %540 = vmatprep.subr.bf16.mxu0 %v452
      %541 = vmatpush1.bf16.msra.mxu0 %v451
      %542 = vmatprep.subr.bf16.mxu0 %v455
      %543 = vmatpush1.bf16.msra.mxu0 %v454
      %544 = vmatprep.subr.bf16.mxu0 %v458
      %545 = vmatpush1.bf16.msra.mxu0 %v457
      %546 = vmatprep.subr.bf16.mxu0 %v461
      %547 = vmatpush1.bf16.msra.mxu0 %v460
      %548 = vmatprep.subr.bf16.mxu0 %v464
      %549 = vmatpush1.bf16.msra.mxu0 %v463
      %550 = vmatprep.subr.bf16.mxu0 %v467
      %551 = vmatpush1.bf16.msra.mxu0 %v466
      %552 = vmatprep.subr.bf16.mxu0 %v470
      %553 = vmatpush1.bf16.msra.mxu0 %v469
      %554 = vmatprep.subr.bf16.mxu0 %v473
      %555 = vmatpush1.bf16.msra.mxu0 %v472
      %556 = vmatprep.subr.bf16.mxu0 %v476
      %557 = vmatpush1.bf16.msra.mxu0 %v475
      %558 = vmatprep.mubr.bf16.mxu0 %v267
      %559 = vmatmul.mubr.bf16.gmra.mrb[0].mxu0 %v266
      %v560 = vpop.f32.mrb[0].mxu0
      %v561 = vadd.f32 0.0, %v560
      %v562 = vpop.f32.mrb[0].mxu0
      %v563 = vadd.f32 0.0, %v562
      %v564 = vpop.f32.mrb[0].mxu0
      %v565 = vadd.f32 0.0, %v564
      %v566 = vpop.f32.mrb[0].mxu0
      %v567 = vadd.f32 0.0, %v566
      %568 = vdwg.mxu0
      %569 = vmatprep.subr.bf16.mxu0 0
      %570 = vmatpush1.bf16.msra.mxu0 %v432
      %571 = vmatprep.subr.bf16.mxu0 0
      %572 = vmatpush1.bf16.msra.mxu0 %v435
      %573 = vmatprep.subr.bf16.mxu0 0
      %574 = vmatpush1.bf16.msra.mxu0 %v438
      %575 = vmatprep.subr.bf16.mxu0 0
      %576 = vmatpush1.bf16.msra.mxu0 %v441
      %577 = vmatprep.subr.bf16.mxu0 0
      %578 = vmatpush1.bf16.msra.mxu0 %v444
      %579 = vmatprep.subr.bf16.mxu0 0
      %580 = vmatpush1.bf16.msra.mxu0 %v447
      %581 = vmatprep.subr.bf16.mxu0 0
      %582 = vmatpush1.bf16.msra.mxu0 %v450
      %583 = vmatprep.subr.bf16.mxu0 0
      %584 = vmatpush1.bf16.msra.mxu0 %v453
      %585 = vmatprep.subr.bf16.mxu0 0
      %586 = vmatpush1.bf16.msra.mxu0 %v456
      %587 = vmatprep.subr.bf16.mxu0 0
      %588 = vmatpush1.bf16.msra.mxu0 %v459
      %589 = vmatprep.subr.bf16.mxu0 0
      %590 = vmatpush1.bf16.msra.mxu0 %v462
      %591 = vmatprep.subr.bf16.mxu0 0
      %592 = vmatpush1.bf16.msra.mxu0 %v465
      %593 = vmatprep.subr.bf16.mxu0 0
      %594 = vmatpush1.bf16.msra.mxu0 %v468
      %595 = vmatprep.subr.bf16.mxu0 0
      %596 = vmatpush1.bf16.msra.mxu0 %v471
      %597 = vmatprep.subr.bf16.mxu0 0
      %598 = vmatpush1.bf16.msra.mxu0 %v474
      %599 = vmatprep.subr.bf16.mxu0 0
      %600 = vmatpush1.bf16.msra.mxu0 %v477
      %601 = vmatprep.mubr.bf16.mxu0 %v267
      %602 = vmatmul.mubr.bf16.gmra.mrb[0].mxu0 %v266
      %v603 = vpop.f32.mrb[0].mxu0
      %v604 = vadd.f32 0.0, %v603
      %v605 = vpop.f32.mrb[0].mxu0
      %v606 = vpop.f32.mrb[0].mxu0
      %v607 = vadd.f32 0.0, %v606
      %v608 = vpop.f32.mrb[0].mxu0
      %609 = vdwg.mxu0
      %v610 = vpack.c.bf16 %v565, %v561
      %v611 = vpack.c.bf16 %v567, %v563
      %v614 = vunpack.c.l.b16 %v610
      %v615 = vunpack.c.l.b16 %v611
      %v616 = vunpack.c.h.b16 %v610
      %v617 = vunpack.c.h.b16 %v611
      %v618 = vpack.c.b16 %v615, %v614
      %v619 = vpack.c.b16 %v617, %v616
      %622 = vst [vmem:[%s185] sm:$0xff] %v618
      %623 = vst [vmem:[%s185 + $0x8] sm:$0xff] %v619
      %624 = vst [vmem:[%s191] sm:$0xff] %v604
      %625 = vst [vmem:[%s191 + $0x8] sm:$0xff] %v607
      %s626 = smul.u32 2, %s15
      %p627 = scmp.lt.s32.totalorder %s626, 3
      %s628 = scalar_select %p627, %s626, 3
      %s629 = smul.addr %s628, 2
      %s630 = smul.addr %s629, 4
      %s631 = scalar_lea.vmem %s2, %s630
      %s632 = smul.u32 2, %s15
      %p633 = scmp.lt.s32.totalorder %s632, 3
      %s634 = scalar_select %p633, %s632, 3
      %s635 = smul.addr %s634, 8
      %s636 = scalar_lea.vmem %s3, %s635
      // Predicated region
      $region29: #{_gat_stack.8} parent=27 // pred_check
        %p637 = pneg %p80
      $region30: #{_gat_stack.8} parent=27 // pred_check_branch
        %639 = sbr.rel (%p637) target = $region32
      $region31: #{_gat_stack.8} parent=27 // pred_region
        %s640 = smul.u32 2, %s15
      $region32: #{_gat_stack.8} parent=27 // pred_fallthru
        _
      // Predicated region
      $region33: #{_gat_stack.8} parent=27 // pred_check
        %p641 = pneg %p106
      $region34: #{_gat_stack.8} parent=27 // pred_check_branch
        %643 = sbr.rel (%p641) target = $region36
      $region35: #{_gat_stack.8} parent=27 // pred_region
        %s644 = smul.u32 2, %s15
      $region36: #{_gat_stack.8} parent=27 // pred_fallthru
        _
    $region28: #{_gat_stack.8} parent=5 // pred_fallthru
      _
    %p645 = scmp.le.s32.totalorder 2, %s10
    // Predicated region
    $region37: #{_gat_stack.8} parent=5 // pred_check
      %p646 = pneg %p645
    $region38: #{_gat_stack.8} parent=5 // pred_check_branch
      %648 = sbr.rel (%p646) target = $region40
    $region39: #{_gat_stack.8} parent=5 // pred_region
      %s649 = ssub.s32 %s10, 2
      // Predicated region
      $region41: #{_gat_stack.8} parent=39 // pred_check
        %p650 = pneg %p86
      $region42: #{_gat_stack.8} parent=39 // pred_check_branch
        %652 = sbr.rel (%p650) target = $region44
      $region43: #{_gat_stack.8} parent=39 // pred_region
        %s653 = smul.u32 2, %s16
        %p654 = scmp.lt.s32.totalorder %s653, 3
        %s655 = scalar_select %p654, %s653, 3
        %s656 = smul.addr %s655, 2
        %s657 = smul.addr %s656, 4
        %s658 = scalar_lea.vmem %s2, %s657
      $region44: #{_gat_stack.8} parent=39 // pred_fallthru
        _
      // Predicated region
      $region45: #{_gat_stack.8} parent=39 // pred_check
        %p659 = pneg %p112
      $region46: #{_gat_stack.8} parent=39 // pred_check_branch
        %661 = sbr.rel (%p659) target = $region48
      $region47: #{_gat_stack.8} parent=39 // pred_region
        %s662 = smul.u32 2, %s16
        %p663 = scmp.lt.s32.totalorder %s662, 3
        %s664 = scalar_select %p663, %s662, 3
        %s665 = smul.addr %s664, 8
        %s666 = scalar_lea.vmem %s3, %s665
      $region48: #{_gat_stack.8} parent=39 // pred_fallthru
        _
    $region40: #{_gat_stack.8} parent=5 // pred_fallthru
      _
  $region6: #{_gat_stack.8} parent=0 // loop_footer
    %s14 = sadd.s32 1, %s10
  $region7: #{_gat_stack.8} parent=0 // loop_footer_branch
    %9 = sbr.rel target = $region3
  $region8: #{_gat_stack.8} parent=0 // loop_exit
    _

// kernel: _gat_stack.7
$region0: #{_gat_stack.7}
  #allocation0 [shape = 'u32[]', space=smem, size = 0x4, offset = 0x4, fixed_abs, tag = 'smem constant byte address 0x4 - core index']
  #allocation1 [shape = 'u32[144,128]{1,0:T(1,128)}', space=vmem, size = 0x12000, scoped, tag = 'internal scratch']
  #allocation2 [shape = 'f32[4,16,1]{2,1,0:T(8,128)}', space=vmem, size = 0x8000, scoped, tag = 'scratch operand']
  #allocation3 [shape = 'f32[4,16,1]{2,1,0:T(8,128)}', space=vmem, size = 0x8000, scoped, tag = 'scratch operand']
  #allocation4 [shape = 'f32[4,16,64]{2,1,0:T(8,128)}', space=vmem, size = 0x8000, scoped, tag = 'scratch operand']
  #allocation5 [shape = 's32[1]{0}', space=sflag, size = 0x4, scoped, tag = 'scoped memory for _gat_stack.7']
  #allocation6 [shape = 'u8[1024]{0}', space=smem, size = 0x400, scoped, tag = 'prefetched SMEM operand 0']
  %s0 = inlined_call_operand.vmem [shape: s32[2,1], index: 0, kind: input, shape index: {}]
  %s1 = inlined_call_operand.vmem [shape: bf16[32,256], index: 1, kind: input, shape index: {}]
  %s2 = inlined_call_operand.vmem [shape: f32[32,128], index: 2, kind: input, shape index: {}]
  %s3 = inlined_call_operand.vmem [shape: f32[4,32], index: 3, kind: input, shape index: {}]
  %s4 = inlined_call_operand.vmem [shape: s32[32,8], index: 4, kind: input, shape index: {}]
  %s5 = inlined_call_operand.vmem [shape: f32[1,256], index: 5, kind: input, shape index: {}]
  %s6 = inlined_call_operand.vmem [shape: bf16[32,256], index: 6, kind: output, shape index: {}]
  %s7 = sld [smem:[#allocation0]]
  $region61: #{_gat_stack.7} parent=0
    _
  %s9 = ssub.s32 1, %s7
  %s10 = scalar_select 0, %s9, %s7
  %s11 = sshll.u32 %s0, 4
  %s12 = int_to_ptr.vmem [resolvable:$true] %s11
  %14 = dma.vmem_to_smem %s12, 32, [#allocation6], [#allocation5]
  %15 = dma.done [#allocation5], 32
  %16 = sfence
  loop: start=0, step=1, limit=4
  $region2: #{_gat_stack.7} parent=0 // loop_pre_header
    _
  $region3: #{_gat_stack.7} parent=0 // loop_header
    %s18 = sphi 0, %s22
    %p19 = scmp.ge.s32.totalorder %s18, 4
    %s25 = sphi 0, %s37
    %s26 = sphi 0, %s33
    %s27 = sphi 0, %s25
    %s28 = sphi 0, %s26
    %s29 = sphi 0, %s27
    %s30 = sphi 0, %s28
    %s56 = sphi 0, %s58
    %s59 = sphi 0, %s56
    %s60 = sphi 0, %s59
    %s76 = sphi 0, %s60
    %s82 = sphi 0, %s84
    %s85 = sphi 0, %s82
    %s86 = sphi 0, %s85
    %s102 = sphi 0, %s86
    %s124 = sphi 0, %s126
    %s127 = sphi 0, %s124
    %s128 = sphi 0, %s127
    %s144 = sphi 0, %s128
    %s150 = sphi 0, %s152
    %s153 = sphi 0, %s150
    %s154 = sphi 0, %s153
    %s170 = sphi 0, %s154
    %s174 = sphi 0, %s174
    %s176 = sphi 0, %s174
    %s177 = sphi 0, %s176
    %s191 = sphi 0, %s177
    %s197 = sphi 0, %s199
    %s200 = sphi 0, %s197
    %s201 = sphi 0, %s200
    %s217 = sphi 0, %s201
  $region4: #{_gat_stack.7} parent=0 // loop_header_branch
    %21 = sbr.rel (%p19) target = $region8
  $region5: #{_gat_stack.7} parent=0 // loop_body
    %s23 = ssub.s32 %s18, 1
    %s24 = ssub.s32 %s18, 2
    %s31 = sadd.s32 1, %s26
    %p32 = scmp.ge.s32.totalorder %s31, 1
    %s33 = scalar_select %p32, 0, %s31
    %s34 = sadd.s32 1, %s25
    %s35 = scalar_select %p32, %s34, %s25
    %p36 = scmp.ge.s32.totalorder %s35, 2
    %s37 = scalar_select %p36, 0, %s35
    %s38 = sshra.s32 %s26, 7
    %s39 = sand.u32 %s26, 127
    %s40 = sadd.s32 %s38, %s25
    %s41 = smul.u32 %s40, 128
    %s42 = sshra.s32 %s26, 7
    %s43 = sand.u32 %s26, 127
    %s44 = sadd.s32 %s41, %s43
    %s45 = sld [smem:[#allocation6 + %s44]]
    %s46 = sshra.s32 %s33, 7
    %s47 = sand.u32 %s33, 127
    %s48 = sadd.s32 %s46, %s37
    %s49 = smul.u32 %s48, 128
    %s50 = sshra.s32 %s33, 7
    %s51 = sand.u32 %s33, 127
    %s52 = sadd.s32 %s49, %s51
    %s53 = sld [smem:[#allocation6 + %s52]]
    %s54 = ssub.s32 %s45, %s53
    %p55 = scmp.eq.s32.totalorder %s54, 0
    %s57 = sadd.s32 %s56, 1
    %s58 = scalar_select %p55, %s56, %s57
    %p61 = pneg %p55
    %p62 = scmp.eq.s32.totalorder %s18, 1
    %p63 = por %p61, %p62
    %p64 = scmp.ne.s32.totalorder %s56, %s59
    %p65 = scmp.eq.s32.totalorder %s18, 0
    %p66 = por %p64, %p65
    %p67 = scmp.ne.s32.totalorder %s56, %s59
    %p68 = scmp.eq.s32.totalorder %s23, 1
    %p69 = por %p67, %p68
    %p70 = scmp.ne.s32.totalorder %s59, %s60
    %p71 = scmp.eq.s32.totalorder %s23, 0
    %p72 = por %p70, %p71
    %p73 = scmp.ne.s32.totalorder %s59, %s60
    %p74 = scmp.eq.s32.totalorder %s24, 1
    %p75 = por %p73, %p74
    %p77 = scmp.ne.s32.totalorder %s60, %s76
    %p78 = scmp.eq.s32.totalorder %s24, 0
    %p79 = por %p77, %p78
    %s80 = ssub.s32 %s25, %s37
    %p81 = scmp.eq.s32.totalorder %s80, 0
    %s83 = sadd.s32 %s82, 1
    %s84 = scalar_select %p81, %s82, %s83
    %p87 = pneg %p81
    %p88 = scmp.eq.s32.totalorder %s18, 1
    %p89 = por %p87, %p88
    %p90 = scmp.ne.s32.totalorder %s82, %s85
    %p91 = scmp.eq.s32.totalorder %s18, 0
    %p92 = por %p90, %p91
    %p93 = scmp.ne.s32.totalorder %s82, %s85
    %p94 = scmp.eq.s32.totalorder %s23, 1
    %p95 = por %p93, %p94
    %p96 = scmp.ne.s32.totalorder %s85, %s86
    %p97 = scmp.eq.s32.totalorder %s23, 0
    %p98 = por %p96, %p97
    %p99 = scmp.ne.s32.totalorder %s85, %s86
    %p100 = scmp.eq.s32.totalorder %s24, 1
    %p101 = por %p99, %p100
    %p103 = scmp.ne.s32.totalorder %s86, %s102
    %p104 = scmp.eq.s32.totalorder %s24, 0
    %p105 = por %p103, %p104
    %s106 = sshra.s32 %s26, 7
    %s107 = sand.u32 %s26, 127
    %s108 = sadd.s32 %s106, %s25
    %s109 = smul.u32 %s108, 128
    %s110 = sshra.s32 %s26, 7
    %s111 = sand.u32 %s26, 127
    %s112 = sadd.s32 %s109, %s111
    %s113 = sld [smem:[#allocation6 + %s112]]
    %s114 = sshra.s32 %s33, 7
    %s115 = sand.u32 %s33, 127
    %s116 = sadd.s32 %s114, %s37
    %s117 = smul.u32 %s116, 128
    %s118 = sshra.s32 %s33, 7
    %s119 = sand.u32 %s33, 127
    %s120 = sadd.s32 %s117, %s119
    %s121 = sld [smem:[#allocation6 + %s120]]
    %s122 = ssub.s32 %s113, %s121
    %p123 = scmp.eq.s32.totalorder %s122, 0
    %s125 = sadd.s32 %s124, 1
    %s126 = scalar_select %p123, %s124, %s125
    %p129 = pneg %p123
    %p130 = scmp.eq.s32.totalorder %s18, 1
    %p131 = por %p129, %p130
    %p132 = scmp.ne.s32.totalorder %s124, %s127
    %p133 = scmp.eq.s32.totalorder %s18, 0
    %p134 = por %p132, %p133
    %p135 = scmp.ne.s32.totalorder %s124, %s127
    %p136 = scmp.eq.s32.totalorder %s23, 1
    %p137 = por %p135, %p136
    %p138 = scmp.ne.s32.totalorder %s127, %s128
    %p139 = scmp.eq.s32.totalorder %s23, 0
    %p140 = por %p138, %p139
    %p141 = scmp.ne.s32.totalorder %s127, %s128
    %p142 = scmp.eq.s32.totalorder %s24, 1
    %p143 = por %p141, %p142
    %p145 = scmp.ne.s32.totalorder %s128, %s144
    %p146 = scmp.eq.s32.totalorder %s24, 0
    %p147 = por %p145, %p146
    %s148 = ssub.s32 %s25, %s37
    %p149 = scmp.eq.s32.totalorder %s148, 0
    %s151 = sadd.s32 %s150, 1
    %s152 = scalar_select %p149, %s150, %s151
    %p155 = pneg %p149
    %p156 = scmp.eq.s32.totalorder %s18, 1
    %p157 = por %p155, %p156
    %p158 = scmp.ne.s32.totalorder %s150, %s153
    %p159 = scmp.eq.s32.totalorder %s18, 0
    %p160 = por %p158, %p159
    %p161 = scmp.ne.s32.totalorder %s150, %s153
    %p162 = scmp.eq.s32.totalorder %s23, 1
    %p163 = por %p161, %p162
    %p164 = scmp.ne.s32.totalorder %s153, %s154
    %p165 = scmp.eq.s32.totalorder %s23, 0
    %p166 = por %p164, %p165
    %p167 = scmp.ne.s32.totalorder %s153, %s154
    %p168 = scmp.eq.s32.totalorder %s24, 1
    %p169 = por %p167, %p168
    %p171 = scmp.ne.s32.totalorder %s154, %s170
    %p172 = scmp.eq.s32.totalorder %s24, 0
    %p173 = por %p171, %p172
    %s175 = sadd.s32 %s174, 1
    %p178 = scmp.eq.s32.totalorder %s18, 1
    %p179 = scmp.ne.s32.totalorder %s174, %s176
    %p180 = scmp.eq.s32.totalorder %s18, 0
    %p181 = por %p179, %p180
    %p182 = scmp.ne.s32.totalorder %s174, %s176
    %p183 = scmp.eq.s32.totalorder %s23, 1
    %p184 = por %p182, %p183
    %p185 = scmp.ne.s32.totalorder %s176, %s177
    %p186 = scmp.eq.s32.totalorder %s23, 0
    %p187 = por %p185, %p186
    %p188 = scmp.ne.s32.totalorder %s176, %s177
    %p189 = scmp.eq.s32.totalorder %s24, 1
    %p190 = por %p188, %p189
    %p192 = scmp.ne.s32.totalorder %s177, %s191
    %p193 = scmp.eq.s32.totalorder %s24, 0
    %p194 = por %p192, %p193
    %s195 = ssub.s32 %s25, %s37
    %p196 = scmp.eq.s32.totalorder %s195, 0
    %s198 = sadd.s32 %s197, 1
    %s199 = scalar_select %p196, %s197, %s198
    %p202 = pneg %p196
    %p203 = scmp.eq.s32.totalorder %s18, 1
    %p204 = por %p202, %p203
    %p205 = scmp.ne.s32.totalorder %s197, %s200
    %p206 = scmp.eq.s32.totalorder %s18, 0
    %p207 = por %p205, %p206
    %p208 = scmp.ne.s32.totalorder %s197, %s200
    %p209 = scmp.eq.s32.totalorder %s23, 1
    %p210 = por %p208, %p209
    %p211 = scmp.ne.s32.totalorder %s200, %s201
    %p212 = scmp.eq.s32.totalorder %s23, 0
    %p213 = por %p211, %p212
    %p214 = scmp.ne.s32.totalorder %s200, %s201
    %p215 = scmp.eq.s32.totalorder %s24, 1
    %p216 = por %p214, %p215
    %p218 = scmp.ne.s32.totalorder %s201, %s217
    %p219 = scmp.eq.s32.totalorder %s24, 0
    %p220 = por %p218, %p219
    %p221 = scmp.le.s32.totalorder 1, %s18
    %p222 = scmp.lt.s32.totalorder %s18, 3
    %p223 = pnand %p221, %p222
    %p224 = pneg %p223
    // Predicated region
    $region9: #{_gat_stack.7} parent=5 // pred_check
      _
    $region10: #{_gat_stack.7} parent=5 // pred_check_branch
      %226 = sbr.rel (%p223) target = $region12
    $region11: #{_gat_stack.7} parent=5 // pred_region
      %s227 = ssub.s32 %s18, 1
      // Predicated region
      $region13: #{_gat_stack.7} parent=11 // pred_check
        %p228 = pneg %p187
      $region14: #{_gat_stack.7} parent=11 // pred_check_branch
        %230 = sbr.rel (%p228) target = $region16
      $region15: #{_gat_stack.7} parent=11 // pred_region
        _
      $region16: #{_gat_stack.7} parent=11 // pred_fallthru
        _
    $region12: #{_gat_stack.7} parent=5 // pred_fallthru
      _
    %p231 = scmp.lt.s32.totalorder %s18, 2
    // Predicated region
    $region17: #{_gat_stack.7} parent=5 // pred_check
      %p232 = pneg %p231
    $region18: #{_gat_stack.7} parent=5 // pred_check_branch
      %234 = sbr.rel (%p232) target = $region20
    $region19: #{_gat_stack.7} parent=5 // pred_region
      // Predicated region
      $region21: #{_gat_stack.7} parent=19 // pred_check
        %p235 = pneg %p66
      $region22: #{_gat_stack.7} parent=19 // pred_check_branch
        %237 = sbr.rel (%p235) target = $region24
      $region23: #{_gat_stack.7} parent=19 // pred_region
        %s238 = sshra.s32 %s26, 7
        %s239 = sand.u32 %s26, 127
        %s240 = sadd.s32 %s238, %s25
        %s241 = smul.u32 %s240, 128
        %s242 = sshra.s32 %s26, 7
        %s243 = sand.u32 %s26, 127
        %s244 = sadd.s32 %s241, %s243
        %s245 = sld [smem:[#allocation6 + %s244]]
        %s246 = smul.u32 4, %s245
        %p247 = scmp.lt.s32.totalorder %s246, 3
        %s248 = scalar_select %p247, %s246, 3
        %s249 = smul.addr %s248, 2
        %s250 = smul.addr %s249, 4
        %s251 = scalar_lea.vmem %s1, %s250
        %s252 = sshra.s32 %s26, 7
        %s253 = sand.u32 %s26, 127
        %s254 = sadd.s32 %s252, %s25
        %s255 = smul.u32 %s254, 128
        %s256 = sshra.s32 %s26, 7
        %s257 = sand.u32 %s26, 127
        %s258 = sadd.s32 %s255, %s257
        %s259 = sld [smem:[#allocation6 + %s258]]
        %s260 = smul.u32 4, %s259
      $region24: #{_gat_stack.7} parent=19 // pred_fallthru
        _
      // Predicated region
      $region25: #{_gat_stack.7} parent=19 // pred_check
        %p261 = pneg %p92
      $region26: #{_gat_stack.7} parent=19 // pred_check_branch
        %263 = sbr.rel (%p261) target = $region28
      $region27: #{_gat_stack.7} parent=19 // pred_region
        %s264 = smul.u32 2, %s25
        %p265 = scmp.lt.s32.totalorder %s264, 3
        %s266 = scalar_select %p265, %s264, 3
        %s267 = smul.addr %s266, 8
        %s268 = scalar_lea.vmem %s2, %s267
        %s269 = smul.u32 2, %s25
      $region28: #{_gat_stack.7} parent=19 // pred_fallthru
        _
      // Predicated region
      $region29: #{_gat_stack.7} parent=19 // pred_check
        %p270 = pneg %p134
      $region30: #{_gat_stack.7} parent=19 // pred_check_branch
        %272 = sbr.rel (%p270) target = $region32
      $region31: #{_gat_stack.7} parent=19 // pred_region
        %s273 = sshra.s32 %s26, 7
        %s274 = sand.u32 %s26, 127
        %s275 = sadd.s32 %s273, %s25
        %s276 = smul.u32 %s275, 128
        %s277 = sshra.s32 %s26, 7
        %s278 = sand.u32 %s26, 127
        %s279 = sadd.s32 %s276, %s278
        %s280 = sld [smem:[#allocation6 + %s279]]
        %p281 = scmp.lt.s32.totalorder %s280, 0
        %s282 = scalar_select %p281, %s280, 0
        %s283 = smul.addr %s282, 4
        %s284 = scalar_lea.vmem %s3, %s283
        %s285 = sshra.s32 %s26, 7
        %s286 = sand.u32 %s26, 127
        %s287 = sadd.s32 %s285, %s25
        %s288 = smul.u32 %s287, 128
        %s289 = sshra.s32 %s26, 7
        %s290 = sand.u32 %s26, 127
        %s291 = sadd.s32 %s288, %s290
        %s292 = sld [smem:[#allocation6 + %s291]]
      $region32: #{_gat_stack.7} parent=19 // pred_fallthru
        _
      // Predicated region
      $region33: #{_gat_stack.7} parent=19 // pred_check
        %p293 = pneg %p160
      $region34: #{_gat_stack.7} parent=19 // pred_check_branch
        %295 = sbr.rel (%p293) target = $region36
      $region35: #{_gat_stack.7} parent=19 // pred_region
        %s296 = smul.u32 2, %s25
        %p297 = scmp.lt.s32.totalorder %s296, 3
        %s298 = scalar_select %p297, %s296, 3
        %s299 = smul.addr %s298, 8
        %s300 = scalar_lea.vmem %s4, %s299
        %s301 = smul.u32 2, %s25
      $region36: #{_gat_stack.7} parent=19 // pred_fallthru
        _
    $region20: #{_gat_stack.7} parent=5 // pred_fallthru
      _
    %p302 = scmp.le.s32.totalorder 1, %s18
    %p303 = scmp.lt.s32.totalorder %s18, 3
    %p304 = pnand %p302, %p303
    %p305 = pneg %p304
    // Predicated region
    $region37: #{_gat_stack.7} parent=5 // pred_check
      _
    $region38: #{_gat_stack.7} parent=5 // pred_check_branch
      %307 = sbr.rel (%p304) target = $region40
    $region39: #{_gat_stack.7} parent=5 // pred_region
      %s308 = ssub.s32 %s18, 1
      %s309 = sshra.s32 %s28, 7
      %s310 = sand.u32 %s28, 127
      %s311 = sadd.s32 %s309, %s27
      %s312 = smul.u32 %s311, 128
      %s313 = sshra.s32 %s28, 7
      %s314 = sand.u32 %s28, 127
      %s315 = sadd.s32 %s312, %s314
      %s316 = sld [smem:[#allocation6 + %s315]]
      %s317 = smul.u32 4, %s316
      %p318 = scmp.lt.s32.totalorder %s317, 3
      %s319 = scalar_select %p318, %s317, 3
      %s320 = smul.addr %s319, 2
      %s321 = smul.addr %s320, 4
      %s322 = scalar_lea.vmem %s1, %s321
      %p323 = pneg %p72
      %p324 = pneg %p69
      %s325 = smul.u32 2, %s27
      %p326 = scmp.lt.s32.totalorder %s325, 3
      %s327 = scalar_select %p326, %s325, 3
      %s328 = smul.addr %s327, 8
      %s329 = scalar_lea.vmem %s2, %s328
      %p330 = pneg %p98
      %p331 = pneg %p95
      %s332 = sshra.s32 %s28, 7
      %s333 = sand.u32 %s28, 127
      %s334 = sadd.s32 %s332, %s27
      %s335 = smul.u32 %s334, 128
      %s336 = sshra.s32 %s28, 7
      %s337 = sand.u32 %s28, 127
      %s338 = sadd.s32 %s335, %s337
      %s339 = sld [smem:[#allocation6 + %s338]]
      %p340 = scmp.lt.s32.totalorder %s339, 0
      %s341 = scalar_select %p340, %s339, 0
      %s342 = smul.addr %s341, 4
      %s343 = scalar_lea.vmem %s3, %s342
      %p344 = pneg %p140
      %p345 = pneg %p137
      %s346 = smul.u32 2, %s27
      %p347 = scmp.lt.s32.totalorder %s346, 3
      %s348 = scalar_select %p347, %s346, 3
      %s349 = smul.addr %s348, 8
      %s350 = scalar_lea.vmem %s4, %s349
      %p351 = pneg %p166
      %p352 = pneg %p163
      %p353 = pneg %p187
      %p354 = pneg %p184
      %p355 = pneg %p213
      %p356 = pneg %p210
      %s357 = smul.u32 2, %s27
      %p358 = scmp.lt.s32.totalorder %s357, 3
      %s359 = scalar_select %p358, %s357, 3
      %s360 = smul.addr %s359, 2
      %s361 = smul.addr %s360, 4
      %s362 = scalar_lea.vmem %s6, %s361
      %s363 = sshra.s32 %s28, 7
      %s364 = sand.u32 %s28, 127
      %s365 = sadd.s32 %s363, %s27
      %s366 = smul.u32 %s365, 128
      %s367 = sshra.s32 %s28, 7
      %s368 = sand.u32 %s28, 127
      %s369 = sadd.s32 %s366, %s368
      %s370 = sld [smem:[#allocation6 + %s369]]
      %s371 = smul.u32 4, %s370
      %p372 = scmp.lt.s32.totalorder %s371, 3
      %s373 = scalar_select %p372, %s371, 3
      %s374 = smul.addr %s373, 2
      %s375 = smul.addr %s374, 4
      %s376 = scalar_lea.vmem %s1, %s375
      %s377 = sshra.s32 %s28, 7
      %s378 = sand.u32 %s28, 127
      %s379 = sadd.s32 %s377, %s27
      %s380 = smul.u32 %s379, 128
      %s381 = sshra.s32 %s28, 7
      %s382 = sand.u32 %s28, 127
      %s383 = sadd.s32 %s380, %s382
      %s384 = sld [smem:[#allocation6 + %s383]]
      %s385 = smul.u32 4, %s384
      %s386 = smul.u32 2, %s27
      %p387 = scmp.lt.s32.totalorder %s386, 3
      %s388 = scalar_select %p387, %s386, 3
      %s389 = smul.addr %s388, 8
      %s390 = scalar_lea.vmem %s2, %s389
      %s391 = smul.u32 2, %s27
      %s392 = sshra.s32 %s28, 7
      %s393 = sand.u32 %s28, 127
      %s394 = sadd.s32 %s392, %s27
      %s395 = smul.u32 %s394, 128
      %s396 = sshra.s32 %s28, 7
      %s397 = sand.u32 %s28, 127
      %s398 = sadd.s32 %s395, %s397
      %s399 = sld [smem:[#allocation6 + %s398]]
      %p400 = scmp.lt.s32.totalorder %s399, 0
      %s401 = scalar_select %p400, %s399, 0
      %s402 = smul.addr %s401, 4
      %s403 = scalar_lea.vmem %s3, %s402
      %s404 = sshra.s32 %s28, 7
      %s405 = sand.u32 %s28, 127
      %s406 = sadd.s32 %s404, %s27
      %s407 = smul.u32 %s406, 128
      %s408 = sshra.s32 %s28, 7
      %s409 = sand.u32 %s28, 127
      %s410 = sadd.s32 %s407, %s409
      %s411 = sld [smem:[#allocation6 + %s410]]
      %s412 = smul.u32 2, %s27
      %p413 = scmp.lt.s32.totalorder %s412, 3
      %s414 = scalar_select %p413, %s412, 3
      %s415 = smul.addr %s414, 8
      %s416 = scalar_lea.vmem %s4, %s415
      %s417 = smul.u32 2, %s27
      %s418 = smul.u32 2, %s27
      %p419 = scmp.lt.s32.totalorder %s418, 3
      %s420 = scalar_select %p419, %s418, 3
      %s421 = smul.addr %s420, 2
      %s422 = smul.addr %s421, 4
      %s423 = scalar_lea.vmem %s6, %s422
      %s424 = smul.u32 2, %s27
      %p426 = scmp.eq.s32.totalorder %s28, 0
      // Predicated region
      $region41: #{_gat_stack.7} parent=39 // pred_check
        %p427 = pneg %p426
      $region42: #{_gat_stack.7} parent=39 // pred_check_branch
        %429 = sbr.rel (%p427) target = $region44
      $region43: #{_gat_stack.7} parent=39 // pred_region
        %vm430 = vcmask 7168
        %431 = vst.msk [vmem:[#allocation2] sm:$0xff] %vm430, -1e+30
        %432 = vst.msk [vmem:[#allocation2 + $0x8] sm:$0xff] %vm430, -1e+30
        %433 = vst.msk [vmem:[#allocation2 + $0x10] sm:$0xff] %vm430, -1e+30
        %434 = vst.msk [vmem:[#allocation2 + $0x18] sm:$0xff] %vm430, -1e+30
        %435 = vst.msk [vmem:[#allocation2 + $0x20] sm:$0xff] %vm430, -1e+30
        %436 = vst.msk [vmem:[#allocation2 + $0x28] sm:$0xff] %vm430, -1e+30
        %437 = vst.msk [vmem:[#allocation2 + $0x30] sm:$0xff] %vm430, -1e+30
        %438 = vst.msk [vmem:[#allocation2 + $0x38] sm:$0xff] %vm430, -1e+30
        %439 = vst.msk [vmem:[#allocation3] sm:$0xff] %vm430, 0.0
        %440 = vst.msk [vmem:[#allocation3 + $0x8] sm:$0xff] %vm430, 0.0
        %441 = vst.msk [vmem:[#allocation3 + $0x10] sm:$0xff] %vm430, 0.0
        %442 = vst.msk [vmem:[#allocation3 + $0x18] sm:$0xff] %vm430, 0.0
        %443 = vst.msk [vmem:[#allocation3 + $0x20] sm:$0xff] %vm430, 0.0
        %444 = vst.msk [vmem:[#allocation3 + $0x28] sm:$0xff] %vm430, 0.0
        %445 = vst.msk [vmem:[#allocation3 + $0x30] sm:$0xff] %vm430, 0.0
        %446 = vst.msk [vmem:[#allocation3 + $0x38] sm:$0xff] %vm430, 0.0
        %vm447 = vcmask 523264
        %448 = vst.msk [vmem:[#allocation4] sm:$0xff] %vm447, 0.0
        %449 = vst.msk [vmem:[#allocation4 + $0x8] sm:$0xff] %vm447, 0.0
        %450 = vst.msk [vmem:[#allocation4 + $0x10] sm:$0xff] %vm447, 0.0
        %451 = vst.msk [vmem:[#allocation4 + $0x18] sm:$0xff] %vm447, 0.0
        %452 = vst.msk [vmem:[#allocation4 + $0x20] sm:$0xff] %vm447, 0.0
        %453 = vst.msk [vmem:[#allocation4 + $0x28] sm:$0xff] %vm447, 0.0
        %454 = vst.msk [vmem:[#allocation4 + $0x30] sm:$0xff] %vm447, 0.0
        %455 = vst.msk [vmem:[#allocation4 + $0x38] sm:$0xff] %vm447, 0.0
      $region44: #{_gat_stack.7} parent=39 // pred_fallthru
        _
      %s456 = sshra.s32 %s28, 7
      %s457 = sand.u32 %s28, 127
      %s458 = sadd.s32 %s456, %s27
      %s459 = smul.u32 %s458, 128
      %s460 = sshra.s32 %s28, 7
      %s461 = sand.u32 %s28, 127
      %s462 = sadd.s32 %s459, %s461
      %s463 = sld [smem:[#allocation6 + %s462]]
      %v464 = vlaneseq
      %v465 = vshrl.u32 %v464, 7
      %v466 = vadd.s32 %v465, 8
      %s467 = smul.u32 %s27, 16
      %v468 = vstv %s467
      %v469 = vadd.s32 %v465, %v468
      %v470 = vadd.s32 %v466, %v468
      %v471 = vlaneseq
      %v472 = vand.u32 %v471, 127
      %s473 = smul.u32 %s463, 32
      %v474 = vstv %s473
      %v475 = vadd.s32 %v472, %v474
      %v476 = vsub.s32 %v475, %v469
      %v477 = vsub.s32 %v475, %v470
      %v478 = vld [vmem:[%s416] sm:$0xff]
      %v479 = vld [vmem:[%s416 + $0x8] sm:$0xff]
      %vm480 = vcmp.gt.s32.totalorder %v478, 0
      %vm481 = vcmp.gt.s32.totalorder %v479, 0
      %vm482 = vcmp.eq.s32.totalorder %v476, 0
      %vm483 = vcmp.eq.s32.totalorder %v477, 0
      %vm484 = vcmp.eq.s32.totalorder %v476, 4294967295
      %vm485 = vcmp.eq.s32.totalorder %v477, 4294967295
      %vm486 = vmor %vm482, %vm484
      %vm487 = vmor %vm483, %vm485
      %vm488 = vcmp.eq.s32.totalorder %v476, 1
      %vm489 = vcmp.eq.s32.totalorder %v477, 1
      %v490 = vsel %vm480, 1, 0
      %v491 = vsel %vm481, 1, 0
      %492 = vset.pattern.permute.xlu0 0
      %493 = vperm.xlu0 %492, %v490
      %v494 = vpop.permute.xlu0 %493
      %495 = vset.pattern.permute.xlu0 0
      %496 = vperm.xlu0 %495, %v491
      %v497 = vpop.permute.xlu0 %496
      %vm498 = vcmp.eq.s32.totalorder %v494, 1
      %vm499 = vcmp.eq.s32.totalorder %v497, 1
      %vm500 = vmand %vm488, %vm498
      %vm501 = vmand %vm489, %vm499
      %vm502 = vmor %vm486, %vm500
      %vm503 = vmor %vm487, %vm501
      %vm504 = vcmp.eq.s32.totalorder %v476, 4
      %vm505 = vcmp.eq.s32.totalorder %v477, 4
      %506 = vset.pattern.permute.xlu0 1
      %507 = vperm.xlu0 %506, %v490
      %v508 = vpop.permute.xlu0 %507
      %509 = vset.pattern.permute.xlu0 1
      %510 = vperm.xlu0 %509, %v491
      %v511 = vpop.permute.xlu0 %510
      %vm512 = vcmp.eq.s32.totalorder %v508, 1
      %vm513 = vcmp.eq.s32.totalorder %v511, 1
      %vm514 = vmand %vm504, %vm512
      %vm515 = vmand %vm505, %vm513
      %vm516 = vmor %vm502, %vm514
      %vm517 = vmor %vm503, %vm515
      %vm518 = vcmp.eq.s32.totalorder %v476, 4294967292
      %vm519 = vcmp.eq.s32.totalorder %v477, 4294967292
      %520 = vset.pattern.permute.xlu0 2
      %521 = vperm.xlu0 %520, %v490
      %v522 = vpop.permute.xlu0 %521
      %523 = vset.pattern.permute.xlu0 2
      %524 = vperm.xlu0 %523, %v491
      %v525 = vpop.permute.xlu0 %524
      %vm526 = vcmp.eq.s32.totalorder %v522, 1
      %vm527 = vcmp.eq.s32.totalorder %v525, 1
      %vm528 = vmand %vm518, %vm526
      %vm529 = vmand %vm519, %vm527
      %vm530 = vmor %vm516, %vm528
      %vm531 = vmor %vm517, %vm529
      %v532 = vld [vmem:[%s376] sm:$0xff]
      %v533 = vld [vmem:[%s376 + $0x8] sm:$0xff]
      %v534 = vld [vmem:[%s376 + $0x10] sm:$0xff]
      %v535 = vld [vmem:[%s376 + $0x18] sm:$0xff]
      %v536 = vld [vmem:[%s390] sm:$0xff]
      %v537 = vld [vmem:[%s390 + $0x8] sm:$0xff]
      %v538 = vld [vmem:[%s403] sm:$0xf]
      %540 = vset.pattern.permute.xlu0 4
      %541 = vperm.xlu0 %540, %v536
      %v542 = vpop.permute.xlu0 %541
      %545 = vset.pattern.permute.xlu0 4
      %546 = vperm.xlu0 %545, %v537
      %v547 = vpop.permute.xlu0 %546
      %v549 = vlaneseq
      %v550 = vshrl.u32 %v549, 7
      %v551 = vsub.s32 0, %v550
      %v552 = vrot.slane %v538, %v551
      %v553 = vadd.f32 %v542, %v552
      %v554 = vadd.f32 %v547, %v552
      %v555 = vmul.f32 %v553, 0.2
      %v556 = vmul.f32 %v554, 0.2
      %v557 = vmax.f32 %v553, %v555
      %v558 = vmax.f32 %v554, %v556
      %v559 = vsel %vm530, %v557, -1e+30
      %v560 = vsel %vm531, %v558, -1e+30
      %v561 = vld [vmem:[#allocation2] sm:$0xff]
      %v562 = vld [vmem:[#allocation2 + $0x8] sm:$0xff]
      %vm563 = vcmask 261120
      %v564 = vsel %vm563, %v559, -inf
      %565 = vmax.xlane.f32.xlu0 %v564
      %v566 = vpop.xlane.xlu0 %565
      %v567 = vsel %vm563, %v560, -inf
      %568 = vmax.xlane.f32.xlu0 %v567
      %v569 = vpop.xlane.xlu0 %568
      %v570 = vmax.f32 %v561, %v566
      %v571 = vmax.f32 %v562, %v569
      %v572 = vsub.f32 %v561, %v570
      %v573 = vsub.f32 %v562, %v571
      %v574 = vmul.f32 %v572, 1.442695
      %v575 = vpow.pop %v574
      %v576 = vmul.f32 %v573, 1.442695
      %v577 = vpow.pop %v576
      %579 = vset.pattern.permute.xlu0 0
      %580 = vperm.xlu0 %579, %v570
      %v581 = vpop.permute.xlu0 %580
      %584 = vset.pattern.permute.xlu0 0
      %585 = vperm.xlu0 %584, %v571
      %v586 = vpop.permute.xlu0 %585
      %v588 = vsub.f32 %v559, %v581
      %v589 = vsub.f32 %v560, %v586
      %v590 = vmul.f32 %v588, 1.442695
      %v591 = vpow.pop %v590
      %v592 = vmul.f32 %v589, 1.442695
      %v593 = vpow.pop %v592
      %v594 = vsel %vm530, %v591, 0.0
      %v595 = vsel %vm531, %v593, 0.0
      %v596 = vld [vmem:[#allocation3] sm:$0xff]
      %v597 = vld [vmem:[#allocation3 + $0x8] sm:$0xff]
      %v598 = vmul.f32 %v575, %v596
      %v599 = vmul.f32 %v577, %v597
      %v600 = vsel %vm563, %v594, 0.0
      %601 = vadd.xlane.f32.xlu0 %v600
      %v602 = vpop.xlane.xlu0 %601
      %v603 = vsel %vm563, %v595, 0.0
      %604 = vadd.xlane.f32.xlu0 %v603
      %v605 = vpop.xlane.xlu0 %604
      %v606 = vadd.f32 %v598, %v602
      %v607 = vadd.f32 %v599, %v605
      %vm608 = vcmask 7168
      %609 = vst.msk [vmem:[#allocation3] sm:$0xff] %vm608, %v606
      %610 = vst.msk [vmem:[#allocation3 + $0x8] sm:$0xff] %vm608, %v607
      %v611 = vpack.c.bf16 %v595, %v594
      %v616 = vunpack.c.l.b16 %v532
      %v617 = vunpack.c.l.b16 %v533
      %v618 = vunpack.c.l.b16 %v534
      %v619 = vunpack.c.l.b16 %v535
      %v620 = vpack.c.b16 %v617, %v616
      %v621 = vpack.c.b16 %v619, %v618
      %v625 = vsel %vm563, %v611, 0
      %627 = vmatprep.subr.bf16.mxu0 0
      %628 = vmatpush1.bf16.msra.mxu0 %v620
      %629 = vmatprep.subr.bf16.mxu0 0
      %630 = vmatpush1.bf16.msra.mxu0 %v621
      %631 = vmatprep.subr.bf16.mxu0 0
      %632 = vmatpush1.bf16.msra.mxu0 0
      %633 = vmatprep.subr.bf16.mxu0 0
      %634 = vmatpush1.bf16.msra.mxu0 0
      %635 = vmatprep.subr.bf16.mxu0 0
      %636 = vmatpush1.bf16.msra.mxu0 0
      %637 = vmatprep.subr.bf16.mxu0 0
      %638 = vmatpush1.bf16.msra.mxu0 0
      %639 = vmatprep.subr.bf16.mxu0 0
      %640 = vmatpush1.bf16.msra.mxu0 0
      %641 = vmatprep.subr.bf16.mxu0 0
      %642 = vmatpush1.bf16.msra.mxu0 0
      %643 = vmatprep.subr.bf16.mxu0 0
      %644 = vmatpush1.bf16.msra.mxu0 0
      %645 = vmatprep.subr.bf16.mxu0 0
      %646 = vmatpush1.bf16.msra.mxu0 0
      %647 = vmatprep.subr.bf16.mxu0 0
      %648 = vmatpush1.bf16.msra.mxu0 0
      %649 = vmatprep.subr.bf16.mxu0 0
      %650 = vmatpush1.bf16.msra.mxu0 0
      %651 = vmatprep.subr.bf16.mxu0 0
      %652 = vmatpush1.bf16.msra.mxu0 0
      %653 = vmatprep.subr.bf16.mxu0 0
      %654 = vmatpush1.bf16.msra.mxu0 0
      %655 = vmatprep.subr.bf16.mxu0 0
      %656 = vmatpush1.bf16.msra.mxu0 0
      %657 = vmatprep.subr.bf16.mxu0 0
      %658 = vmatpush1.bf16.msra.mxu0 0
      %659 = vmatprep.mubr.bf16.mxu0 0
      %660 = vmatmul.mubr.bf16.gmra.mrb[0].mxu0 %v625
      %v661 = vpop.f32.mrb[0].mxu0
      %v662 = vadd.f32 0.0, %v661
      %v663 = vpop.f32.mrb[0].mxu0
      %v664 = vpop.f32.mrb[0].mxu0
      %v665 = vadd.f32 0.0, %v664
      %v666 = vpop.f32.mrb[0].mxu0
      %667 = vdwg.mxu0
      %v668 = vld [vmem:[#allocation4] sm:$0xff]
      %v669 = vld [vmem:[#allocation4 + $0x8] sm:$0xff]
      %671 = vset.pattern.permute.xlu0 0
      %672 = vperm.xlu0 %671, %v575
      %v673 = vpop.permute.xlu0 %672
      %676 = vset.pattern.permute.xlu0 0
      %677 = vperm.xlu0 %676, %v577
      %v678 = vpop.permute.xlu0 %677
      %v680 = vmul.f32 %v673, %v668
      %v681 = vmul.f32 %v678, %v669
      %v682 = vadd.f32 %v680, %v662
      %v683 = vadd.f32 %v681, %v665
      %vm684 = vcmask 523264
      %685 = vst.msk [vmem:[#allocation4] sm:$0xff] %vm684, %v682
      %686 = vst.msk [vmem:[#allocation4 + $0x8] sm:$0xff] %vm684, %v683
      %687 = vst.msk [vmem:[#allocation2] sm:$0xff] %vm608, %v570
      %688 = vst.msk [vmem:[#allocation2 + $0x8] sm:$0xff] %vm608, %v571
      %689 = vset.pattern.permute.xlu0 5
      %690 = vperm.xlu0 %689, %v536
      %v691 = vpop.permute.xlu0 %690
      %693 = vset.pattern.permute.xlu0 5
      %694 = vperm.xlu0 %693, %v537
      %v695 = vpop.permute.xlu0 %694
      %v697 = vlaneseq
      %v698 = vshrl.u32 %v697, 7
      %v699 = vsub.s32 1, %v698
      %v700 = vrot.slane %v538, %v699
      %v701 = vadd.f32 %v691, %v700
      %v702 = vadd.f32 %v695, %v700
      %v703 = vmul.f32 %v701, 0.2
      %v704 = vmul.f32 %v702, 0.2
      %v705 = vmax.f32 %v701, %v703
      %v706 = vmax.f32 %v702, %v704
      %v707 = vsel %vm530, %v705, -1e+30
      %v708 = vsel %vm531, %v706, -1e+30
      %s709 = scalar_lea.vmem [#allocation2], 16
      %v710 = vld [vmem:[%s709] sm:$0xff]
      %v711 = vld [vmem:[%s709 + $0x8] sm:$0xff]
      %v712 = vsel %vm563, %v707, -inf
      %713 = vmax.xlane.f32.xlu0 %v712
      %v714 = vpop.xlane.xlu0 %713
      %v715 = vsel %vm563, %v708, -inf
      %716 = vmax.xlane.f32.xlu0 %v715
      %v717 = vpop.xlane.xlu0 %716
      %v718 = vmax.f32 %v710, %v714
      %v719 = vmax.f32 %v711, %v717
      %v720 = vsub.f32 %v710, %v718
      %v721 = vsub.f32 %v711, %v719
      %v722 = vmul.f32 %v720, 1.442695
      %v723 = vpow.pop %v722
      %v724 = vmul.f32 %v721, 1.442695
      %v725 = vpow.pop %v724
      %727 = vset.pattern.permute.xlu0 0
      %728 = vperm.xlu0 %727, %v718
      %v729 = vpop.permute.xlu0 %728
      %732 = vset.pattern.permute.xlu0 0
      %733 = vperm.xlu0 %732, %v719
      %v734 = vpop.permute.xlu0 %733
      %v736 = vsub.f32 %v707, %v729
      %v737 = vsub.f32 %v708, %v734
      %v738 = vmul.f32 %v736, 1.442695
      %v739 = vpow.pop %v738
      %v740 = vmul.f32 %v737, 1.442695
      %v741 = vpow.pop %v740
      %v742 = vsel %vm530, %v739, 0.0
      %v743 = vsel %vm531, %v741, 0.0
      %s744 = scalar_lea.vmem [#allocation3], 16
      %v745 = vld [vmem:[%s744] sm:$0xff]
      %v746 = vld [vmem:[%s744 + $0x8] sm:$0xff]
      %v747 = vmul.f32 %v723, %v745
      %v748 = vmul.f32 %v725, %v746
      %v749 = vsel %vm563, %v742, 0.0
      %750 = vadd.xlane.f32.xlu0 %v749
      %v751 = vpop.xlane.xlu0 %750
      %v752 = vsel %vm563, %v743, 0.0
      %753 = vadd.xlane.f32.xlu0 %v752
      %v754 = vpop.xlane.xlu0 %753
      %v755 = vadd.f32 %v747, %v751
      %v756 = vadd.f32 %v748, %v754
      %757 = vst.msk [vmem:[%s744] sm:$0xff] %vm608, %v755
      %758 = vst.msk [vmem:[%s744 + $0x8] sm:$0xff] %vm608, %v756
      %v759 = vpack.c.bf16 %v743, %v742
      %760 = vrot.lane.b32.xlu0 %v620, 64
      %v761 = vpop.permute.xlu0 %760
      %762 = vrot.lane.b32.xlu0 %v621, 64
      %v763 = vpop.permute.xlu0 %762
      %v767 = vsel %vm563, %v759, 0
      %769 = vmatprep.subr.bf16.mxu0 0
      %770 = vmatpush1.bf16.msra.mxu0 %v761
      %771 = vmatprep.subr.bf16.mxu0 0
      %772 = vmatpush1.bf16.msra.mxu0 %v763
      %773 = vmatprep.subr.bf16.mxu0 0
      %774 = vmatpush1.bf16.msra.mxu0 0
      %775 = vmatprep.subr.bf16.mxu0 0
      %776 = vmatpush1.bf16.msra.mxu0 0
      %777 = vmatprep.subr.bf16.mxu0 0
      %778 = vmatpush1.bf16.msra.mxu0 0
      %779 = vmatprep.subr.bf16.mxu0 0
      %780 = vmatpush1.bf16.msra.mxu0 0
      %781 = vmatprep.subr.bf16.mxu0 0
      %782 = vmatpush1.bf16.msra.mxu0 0
      %783 = vmatprep.subr.bf16.mxu0 0
      %784 = vmatpush1.bf16.msra.mxu0 0
      %785 = vmatprep.subr.bf16.mxu0 0
      %786 = vmatpush1.bf16.msra.mxu0 0
      %787 = vmatprep.subr.bf16.mxu0 0
      %788 = vmatpush1.bf16.msra.mxu0 0
      %789 = vmatprep.subr.bf16.mxu0 0
      %790 = vmatpush1.bf16.msra.mxu0 0
      %791 = vmatprep.subr.bf16.mxu0 0
      %792 = vmatpush1.bf16.msra.mxu0 0
      %793 = vmatprep.subr.bf16.mxu0 0
      %794 = vmatpush1.bf16.msra.mxu0 0
      %795 = vmatprep.subr.bf16.mxu0 0
      %796 = vmatpush1.bf16.msra.mxu0 0
      %797 = vmatprep.subr.bf16.mxu0 0
      %798 = vmatpush1.bf16.msra.mxu0 0
      %799 = vmatprep.subr.bf16.mxu0 0
      %800 = vmatpush1.bf16.msra.mxu0 0
      %801 = vmatprep.mubr.bf16.mxu0 0
      %802 = vmatmul.mubr.bf16.gmra.mrb[0].mxu0 %v767
      %v803 = vpop.f32.mrb[0].mxu0
      %v804 = vadd.f32 0.0, %v803
      %v805 = vpop.f32.mrb[0].mxu0
      %v806 = vpop.f32.mrb[0].mxu0
      %v807 = vadd.f32 0.0, %v806
      %v808 = vpop.f32.mrb[0].mxu0
      %809 = vdwg.mxu0
      %s810 = scalar_lea.vmem [#allocation4], 16
      %v811 = vld [vmem:[%s810] sm:$0xff]
      %v812 = vld [vmem:[%s810 + $0x8] sm:$0xff]
      %814 = vset.pattern.permute.xlu0 0
      %815 = vperm.xlu0 %814, %v723
      %v816 = vpop.permute.xlu0 %815
      %819 = vset.pattern.permute.xlu0 0
      %820 = vperm.xlu0 %819, %v725
      %v821 = vpop.permute.xlu0 %820
      %v823 = vmul.f32 %v816, %v811
      %v824 = vmul.f32 %v821, %v812
      %v825 = vadd.f32 %v823, %v804
      %v826 = vadd.f32 %v824, %v807
      %827 = vst.msk [vmem:[%s810] sm:$0xff] %vm684, %v825
      %828 = vst.msk [vmem:[%s810 + $0x8] sm:$0xff] %vm684, %v826
      %829 = vst.msk [vmem:[%s709] sm:$0xff] %vm608, %v718
      %830 = vst.msk [vmem:[%s709 + $0x8] sm:$0xff] %vm608, %v719
      %831 = vset.pattern.permute.xlu0 6
      %832 = vperm.xlu0 %831, %v536
      %v833 = vpop.permute.xlu0 %832
      %835 = vset.pattern.permute.xlu0 6
      %836 = vperm.xlu0 %835, %v537
      %v837 = vpop.permute.xlu0 %836
      %v839 = vlaneseq
      %v840 = vshrl.u32 %v839, 7
      %v841 = vsub.s32 2, %v840
      %v842 = vrot.slane %v538, %v841
      %v843 = vadd.f32 %v833, %v842
      %v844 = vadd.f32 %v837, %v842
      %v845 = vmul.f32 %v843, 0.2
      %v846 = vmul.f32 %v844, 0.2
      %v847 = vmax.f32 %v843, %v845
      %v848 = vmax.f32 %v844, %v846
      %v849 = vsel %vm530, %v847, -1e+30
      %v850 = vsel %vm531, %v848, -1e+30
      %s851 = scalar_lea.vmem [#allocation2], 32
      %v852 = vld [vmem:[%s851] sm:$0xff]
      %v853 = vld [vmem:[%s851 + $0x8] sm:$0xff]
      %v854 = vsel %vm563, %v849, -inf
      %855 = vmax.xlane.f32.xlu0 %v854
      %v856 = vpop.xlane.xlu0 %855
      %v857 = vsel %vm563, %v850, -inf
      %858 = vmax.xlane.f32.xlu0 %v857
      %v859 = vpop.xlane.xlu0 %858
      %v860 = vmax.f32 %v852, %v856
      %v861 = vmax.f32 %v853, %v859
      %v862 = vsub.f32 %v852, %v860
      %v863 = vsub.f32 %v853, %v861
      %v864 = vmul.f32 %v862, 1.442695
      %v865 = vpow.pop %v864
      %v866 = vmul.f32 %v863, 1.442695
      %v867 = vpow.pop %v866
      %869 = vset.pattern.permute.xlu0 0
      %870 = vperm.xlu0 %869, %v860
      %v871 = vpop.permute.xlu0 %870
      %874 = vset.pattern.permute.xlu0 0
      %875 = vperm.xlu0 %874, %v861
      %v876 = vpop.permute.xlu0 %875
      %v878 = vsub.f32 %v849, %v871
      %v879 = vsub.f32 %v850, %v876
      %v880 = vmul.f32 %v878, 1.442695
      %v881 = vpow.pop %v880
      %v882 = vmul.f32 %v879, 1.442695
      %v883 = vpow.pop %v882
      %v884 = vsel %vm530, %v881, 0.0
      %v885 = vsel %vm531, %v883, 0.0
      %s886 = scalar_lea.vmem [#allocation3], 32
      %v887 = vld [vmem:[%s886] sm:$0xff]
      %v888 = vld [vmem:[%s886 + $0x8] sm:$0xff]
      %v889 = vmul.f32 %v865, %v887
      %v890 = vmul.f32 %v867, %v888
      %v891 = vsel %vm563, %v884, 0.0
      %892 = vadd.xlane.f32.xlu0 %v891
      %v893 = vpop.xlane.xlu0 %892
      %v894 = vsel %vm563, %v885, 0.0
      %895 = vadd.xlane.f32.xlu0 %v894
      %v896 = vpop.xlane.xlu0 %895
      %v897 = vadd.f32 %v889, %v893
      %v898 = vadd.f32 %v890, %v896
      %899 = vst.msk [vmem:[%s886] sm:$0xff] %vm608, %v897
      %900 = vst.msk [vmem:[%s886 + $0x8] sm:$0xff] %vm608, %v898
      %v901 = vpack.c.bf16 %v885, %v884
      %v902 = vunpack.c.h.b16 %v532
      %v903 = vunpack.c.h.b16 %v533
      %v904 = vunpack.c.h.b16 %v534
      %v905 = vunpack.c.h.b16 %v535
      %v906 = vpack.c.b16 %v903, %v902
      %v907 = vpack.c.b16 %v905, %v904
      %v911 = vsel %vm563, %v901, 0
      %913 = vmatprep.subr.bf16.mxu0 0
      %914 = vmatpush1.bf16.msra.mxu0 %v906
      %915 = vmatprep.subr.bf16.mxu0 0
      %916 = vmatpush1.bf16.msra.mxu0 %v907
      %917 = vmatprep.subr.bf16.mxu0 0
      %918 = vmatpush1.bf16.msra.mxu0 0
      %919 = vmatprep.subr.bf16.mxu0 0
      %920 = vmatpush1.bf16.msra.mxu0 0
      %921 = vmatprep.subr.bf16.mxu0 0
      %922 = vmatpush1.bf16.msra.mxu0 0
      %923 = vmatprep.subr.bf16.mxu0 0
      %924 = vmatpush1.bf16.msra.mxu0 0
      %925 = vmatprep.subr.bf16.mxu0 0
      %926 = vmatpush1.bf16.msra.mxu0 0
      %927 = vmatprep.subr.bf16.mxu0 0
      %928 = vmatpush1.bf16.msra.mxu0 0
      %929 = vmatprep.subr.bf16.mxu0 0
      %930 = vmatpush1.bf16.msra.mxu0 0
      %931 = vmatprep.subr.bf16.mxu0 0
      %932 = vmatpush1.bf16.msra.mxu0 0
      %933 = vmatprep.subr.bf16.mxu0 0
      %934 = vmatpush1.bf16.msra.mxu0 0
      %935 = vmatprep.subr.bf16.mxu0 0
      %936 = vmatpush1.bf16.msra.mxu0 0
      %937 = vmatprep.subr.bf16.mxu0 0
      %938 = vmatpush1.bf16.msra.mxu0 0
      %939 = vmatprep.subr.bf16.mxu0 0
      %940 = vmatpush1.bf16.msra.mxu0 0
      %941 = vmatprep.subr.bf16.mxu0 0
      %942 = vmatpush1.bf16.msra.mxu0 0
      %943 = vmatprep.subr.bf16.mxu0 0
      %944 = vmatpush1.bf16.msra.mxu0 0
      %945 = vmatprep.mubr.bf16.mxu0 0
      %946 = vmatmul.mubr.bf16.gmra.mrb[0].mxu0 %v911
      %v947 = vpop.f32.mrb[0].mxu0
      %v948 = vadd.f32 0.0, %v947
      %v949 = vpop.f32.mrb[0].mxu0
      %v950 = vpop.f32.mrb[0].mxu0
      %v951 = vadd.f32 0.0, %v950
      %v952 = vpop.f32.mrb[0].mxu0
      %953 = vdwg.mxu0
      %s954 = scalar_lea.vmem [#allocation4], 32
      %v955 = vld [vmem:[%s954] sm:$0xff]
      %v956 = vld [vmem:[%s954 + $0x8] sm:$0xff]
      %958 = vset.pattern.permute.xlu0 0
      %959 = vperm.xlu0 %958, %v865
      %v960 = vpop.permute.xlu0 %959
      %963 = vset.pattern.permute.xlu0 0
      %964 = vperm.xlu0 %963, %v867
      %v965 = vpop.permute.xlu0 %964
      %v967 = vmul.f32 %v960, %v955
      %v968 = vmul.f32 %v965, %v956
      %v969 = vadd.f32 %v967, %v948
      %v970 = vadd.f32 %v968, %v951
      %971 = vst.msk [vmem:[%s954] sm:$0xff] %vm684, %v969
      %972 = vst.msk [vmem:[%s954 + $0x8] sm:$0xff] %vm684, %v970
      %973 = vst.msk [vmem:[%s851] sm:$0xff] %vm608, %v860
      %974 = vst.msk [vmem:[%s851 + $0x8] sm:$0xff] %vm608, %v861
      %975 = vset.pattern.permute.xlu0 7
      %976 = vperm.xlu0 %975, %v536
      %v977 = vpop.permute.xlu0 %976
      %979 = vset.pattern.permute.xlu0 7
      %980 = vperm.xlu0 %979, %v537
      %v981 = vpop.permute.xlu0 %980
      %v983 = vlaneseq
      %v984 = vshrl.u32 %v983, 7
      %v985 = vsub.s32 3, %v984
      %v986 = vrot.slane %v538, %v985
      %v987 = vadd.f32 %v977, %v986
      %v988 = vadd.f32 %v981, %v986
      %v989 = vmul.f32 %v987, 0.2
      %v990 = vmul.f32 %v988, 0.2
      %v991 = vmax.f32 %v987, %v989
      %v992 = vmax.f32 %v988, %v990
      %v993 = vsel %vm530, %v991, -1e+30
      %v994 = vsel %vm531, %v992, -1e+30
      %s995 = scalar_lea.vmem [#allocation2], 48
      %v996 = vld [vmem:[%s995] sm:$0xff]
      %v997 = vld [vmem:[%s995 + $0x8] sm:$0xff]
      %v998 = vsel %vm563, %v993, -inf
      %999 = vmax.xlane.f32.xlu0 %v998
      %v1000 = vpop.xlane.xlu0 %999
      %v1001 = vsel %vm563, %v994, -inf
      %1002 = vmax.xlane.f32.xlu0 %v1001
      %v1003 = vpop.xlane.xlu0 %1002
      %v1004 = vmax.f32 %v996, %v1000
      %v1005 = vmax.f32 %v997, %v1003
      %v1006 = vsub.f32 %v996, %v1004
      %v1007 = vsub.f32 %v997, %v1005
      %v1008 = vmul.f32 %v1006, 1.442695
      %v1009 = vpow.pop %v1008
      %v1010 = vmul.f32 %v1007, 1.442695
      %v1011 = vpow.pop %v1010
      %1013 = vset.pattern.permute.xlu0 0
      %1014 = vperm.xlu0 %1013, %v1004
      %v1015 = vpop.permute.xlu0 %1014
      %1018 = vset.pattern.permute.xlu0 0
      %1019 = vperm.xlu0 %1018, %v1005
      %v1020 = vpop.permute.xlu0 %1019
      %v1022 = vsub.f32 %v993, %v1015
      %v1023 = vsub.f32 %v994, %v1020
      %v1024 = vmul.f32 %v1022, 1.442695
      %v1025 = vpow.pop %v1024
      %v1026 = vmul.f32 %v1023, 1.442695
      %v1027 = vpow.pop %v1026
      %v1028 = vsel %vm530, %v1025, 0.0
      %v1029 = vsel %vm531, %v1027, 0.0
      %s1030 = scalar_lea.vmem [#allocation3], 48
      %v1031 = vld [vmem:[%s1030] sm:$0xff]
      %v1032 = vld [vmem:[%s1030 + $0x8] sm:$0xff]
      %v1033 = vmul.f32 %v1009, %v1031
      %v1034 = vmul.f32 %v1011, %v1032
      %v1035 = vsel %vm563, %v1028, 0.0
      %1036 = vadd.xlane.f32.xlu0 %v1035
      %v1037 = vpop.xlane.xlu0 %1036
      %v1038 = vsel %vm563, %v1029, 0.0
      %1039 = vadd.xlane.f32.xlu0 %v1038
      %v1040 = vpop.xlane.xlu0 %1039
      %v1041 = vadd.f32 %v1033, %v1037
      %v1042 = vadd.f32 %v1034, %v1040
      %1043 = vst.msk [vmem:[%s1030] sm:$0xff] %vm608, %v1041
      %1044 = vst.msk [vmem:[%s1030 + $0x8] sm:$0xff] %vm608, %v1042
      %v1045 = vpack.c.bf16 %v1029, %v1028
      %1046 = vrot.lane.b32.xlu0 %v906, 64
      %v1047 = vpop.permute.xlu0 %1046
      %1048 = vrot.lane.b32.xlu0 %v907, 64
      %v1049 = vpop.permute.xlu0 %1048
      %v1053 = vsel %vm563, %v1045, 0
      %1055 = vmatprep.subr.bf16.mxu0 0
      %1056 = vmatpush1.bf16.msra.mxu0 %v1047
      %1057 = vmatprep.subr.bf16.mxu0 0
      %1058 = vmatpush1.bf16.msra.mxu0 %v1049
      %1059 = vmatprep.subr.bf16.mxu0 0
      %1060 = vmatpush1.bf16.msra.mxu0 0
      %1061 = vmatprep.subr.bf16.mxu0 0
      %1062 = vmatpush1.bf16.msra.mxu0 0
      %1063 = vmatprep.subr.bf16.mxu0 0
      %1064 = vmatpush1.bf16.msra.mxu0 0
      %1065 = vmatprep.subr.bf16.mxu0 0
      %1066 = vmatpush1.bf16.msra.mxu0 0
      %1067 = vmatprep.subr.bf16.mxu0 0
      %1068 = vmatpush1.bf16.msra.mxu0 0
      %1069 = vmatprep.subr.bf16.mxu0 0
      %1070 = vmatpush1.bf16.msra.mxu0 0
      %1071 = vmatprep.subr.bf16.mxu0 0
      %1072 = vmatpush1.bf16.msra.mxu0 0
      %1073 = vmatprep.subr.bf16.mxu0 0
      %1074 = vmatpush1.bf16.msra.mxu0 0
      %1075 = vmatprep.subr.bf16.mxu0 0
      %1076 = vmatpush1.bf16.msra.mxu0 0
      %1077 = vmatprep.subr.bf16.mxu0 0
      %1078 = vmatpush1.bf16.msra.mxu0 0
      %1079 = vmatprep.subr.bf16.mxu0 0
      %1080 = vmatpush1.bf16.msra.mxu0 0
      %1081 = vmatprep.subr.bf16.mxu0 0
      %1082 = vmatpush1.bf16.msra.mxu0 0
      %1083 = vmatprep.subr.bf16.mxu0 0
      %1084 = vmatpush1.bf16.msra.mxu0 0
      %1085 = vmatprep.subr.bf16.mxu0 0
      %1086 = vmatpush1.bf16.msra.mxu0 0
      %1087 = vmatprep.mubr.bf16.mxu0 0
      %1088 = vmatmul.mubr.bf16.gmra.mrb[0].mxu0 %v1053
      %v1089 = vpop.f32.mrb[0].mxu0
      %v1090 = vadd.f32 0.0, %v1089
      %v1091 = vpop.f32.mrb[0].mxu0
      %v1092 = vpop.f32.mrb[0].mxu0
      %v1093 = vadd.f32 0.0, %v1092
      %v1094 = vpop.f32.mrb[0].mxu0
      %1095 = vdwg.mxu0
      %s1096 = scalar_lea.vmem [#allocation4], 48
      %v1097 = vld [vmem:[%s1096] sm:$0xff]
      %v1098 = vld [vmem:[%s1096 + $0x8] sm:$0xff]
      %1100 = vset.pattern.permute.xlu0 0
      %1101 = vperm.xlu0 %1100, %v1009
      %v1102 = vpop.permute.xlu0 %1101
      %1105 = vset.pattern.permute.xlu0 0
      %1106 = vperm.xlu0 %1105, %v1011
      %v1107 = vpop.permute.xlu0 %1106
      %v1109 = vmul.f32 %v1102, %v1097
      %v1110 = vmul.f32 %v1107, %v1098
      %v1111 = vadd.f32 %v1109, %v1090
      %v1112 = vadd.f32 %v1110, %v1093
      %1113 = vst.msk [vmem:[%s1096] sm:$0xff] %vm684, %v1111
      %1114 = vst.msk [vmem:[%s1096 + $0x8] sm:$0xff] %vm684, %v1112
      %1115 = vst.msk [vmem:[%s995] sm:$0xff] %vm608, %v1004
      %1116 = vst.msk [vmem:[%s995 + $0x8] sm:$0xff] %vm608, %v1005
      // Predicated region
      $region45: #{_gat_stack.7} parent=39 // pred_check
        %p1117 = pneg %p426
      $region46: #{_gat_stack.7} parent=39 // pred_check_branch
        %1119 = sbr.rel (%p1117) target = $region48
      $region47: #{_gat_stack.7} parent=39 // pred_region
        %v1120 = vld [vmem:[#allocation3] sm:$0xff]
        %v1121 = vld [vmem:[#allocation3 + $0x8] sm:$0xff]
        %v1122 = vrcp.pop %v1120
        %v1123 = vrcp.pop %v1121
        %v1124 = vld [vmem:[#allocation4] sm:$0xff]
        %v1125 = vld [vmem:[#allocation4 + $0x8] sm:$0xff]
        %1127 = vset.pattern.permute.xlu0 0
        %1128 = vperm.xlu0 %1127, %v1122
        %v1129 = vpop.permute.xlu0 %1128
        %1132 = vset.pattern.permute.xlu0 0
        %1133 = vperm.xlu0 %1132, %v1123
        %v1134 = vpop.permute.xlu0 %1133
        %v1136 = vmul.f32 %v1124, %v1129
        %v1137 = vmul.f32 %v1125, %v1134
        %v1138 = vld [vmem:[%s744] sm:$0xff]
        %v1139 = vld [vmem:[%s744 + $0x8] sm:$0xff]
        %v1140 = vrcp.pop %v1138
        %v1141 = vrcp.pop %v1139
        %v1142 = vld [vmem:[%s810] sm:$0xff]
        %v1143 = vld [vmem:[%s810 + $0x8] sm:$0xff]
        %1145 = vset.pattern.permute.xlu0 0
        %1146 = vperm.xlu0 %1145, %v1140
        %v1147 = vpop.permute.xlu0 %1146
        %1150 = vset.pattern.permute.xlu0 0
        %1151 = vperm.xlu0 %1150, %v1141
        %v1152 = vpop.permute.xlu0 %1151
        %v1154 = vmul.f32 %v1142, %v1147
        %v1155 = vmul.f32 %v1143, %v1152
        %v1156 = vld [vmem:[%s886] sm:$0xff]
        %v1157 = vld [vmem:[%s886 + $0x8] sm:$0xff]
        %v1158 = vrcp.pop %v1156
        %v1159 = vrcp.pop %v1157
        %v1160 = vld [vmem:[%s954] sm:$0xff]
        %v1161 = vld [vmem:[%s954 + $0x8] sm:$0xff]
        %1163 = vset.pattern.permute.xlu0 0
        %1164 = vperm.xlu0 %1163, %v1158
        %v1165 = vpop.permute.xlu0 %1164
        %1168 = vset.pattern.permute.xlu0 0
        %1169 = vperm.xlu0 %1168, %v1159
        %v1170 = vpop.permute.xlu0 %1169
        %v1172 = vmul.f32 %v1160, %v1165
        %v1173 = vmul.f32 %v1161, %v1170
        %v1174 = vld [vmem:[%s1030] sm:$0xff]
        %v1175 = vld [vmem:[%s1030 + $0x8] sm:$0xff]
        %v1176 = vrcp.pop %v1174
        %v1177 = vrcp.pop %v1175
        %v1178 = vld [vmem:[%s1096] sm:$0xff]
        %v1179 = vld [vmem:[%s1096 + $0x8] sm:$0xff]
        %1181 = vset.pattern.permute.xlu0 0
        %1182 = vperm.xlu0 %1181, %v1176
        %v1183 = vpop.permute.xlu0 %1182
        %1186 = vset.pattern.permute.xlu0 0
        %1187 = vperm.xlu0 %1186, %v1177
        %v1188 = vpop.permute.xlu0 %1187
        %v1190 = vmul.f32 %v1178, %v1183
        %v1191 = vmul.f32 %v1179, %v1188
        %1194 = vrot.lane.b32.xlu0 %v1154, 64
        %v1195 = vpop.permute.xlu0 %1194
        %1196 = vrot.lane.b32.xlu0 %v1155, 64
        %v1197 = vpop.permute.xlu0 %1196
        %1202 = vrot.lane.b32.xlu0 %v1190, 64
        %v1203 = vpop.permute.xlu0 %1202
        %1204 = vrot.lane.b32.xlu0 %v1191, 64
        %v1205 = vpop.permute.xlu0 %1204
        %v1208 = vsel %vm684, %v1136, %v1195
        %v1209 = vsel %vm684, %v1137, %v1197
        %v1210 = vsel %vm684, %v1172, %v1203
        %v1211 = vsel %vm684, %v1173, %v1205
        %v1212 = vld [vmem:[%s5] sm:$0x3]
        %v1214 = vlaneseq
        %v1215 = vshrl.u32 %v1214, 7
        %v1216 = vsub.s32 0, %v1215
        %v1217 = vrot.slane %v1212, %v1216
        %v1218 = vlaneseq
        %v1219 = vshrl.u32 %v1218, 7
        %v1220 = vsub.s32 1, %v1219
        %v1221 = vrot.slane %v1212, %v1220
        %v1224 = vadd.f32 %v1208, %v1217
        %v1225 = vadd.f32 %v1210, %v1221
        %v1226 = vadd.f32 %v1209, %v1217
        %v1227 = vadd.f32 %v1211, %v1221
        %vm1228 = vcmp.gt.f32.partialorder %v1224, 0.0
        %vm1229 = vcmp.gt.f32.partialorder %v1225, 0.0
        %vm1230 = vcmp.gt.f32.partialorder %v1226, 0.0
        %vm1231 = vcmp.gt.f32.partialorder %v1227, 0.0
        %v1232 = vmin.f32 %v1224, 0.0
        %v1233 = vmin.f32 %v1225, 0.0
        %v1234 = vmin.f32 %v1226, 0.0
        %v1235 = vmin.f32 %v1227, 0.0
        %v1236 = vmul.f32 %v1232, 1.442695
        %v1237 = vpow.pop %v1236
        %v1238 = vmul.f32 %v1233, 1.442695
        %v1239 = vpow.pop %v1238
        %v1240 = vmul.f32 %v1234, 1.442695
        %v1241 = vpow.pop %v1240
        %v1242 = vmul.f32 %v1235, 1.442695
        %v1243 = vpow.pop %v1242
        %v1244 = vsub.f32 %v1237, 1.0
        %v1245 = vsub.f32 %v1239, 1.0
        %v1246 = vsub.f32 %v1241, 1.0
        %v1247 = vsub.f32 %v1243, 1.0
        %v1248 = vsel %vm1228, %v1224, %v1244
        %v1249 = vsel %vm1229, %v1225, %v1245
        %v1250 = vsel %vm1230, %v1226, %v1246
        %v1251 = vsel %vm1231, %v1227, %v1247
        %v1252 = vpack.c.bf16 %v1250, %v1248
        %v1253 = vpack.c.bf16 %v1251, %v1249
        %v1256 = vunpack.c.l.b16 %v1252
        %v1257 = vunpack.c.l.b16 %v1253
        %v1258 = vunpack.c.h.b16 %v1252
        %v1259 = vunpack.c.h.b16 %v1253
        %v1260 = vpack.c.b16 %v1257, %v1256
        %v1261 = vpack.c.b16 %v1259, %v1258
        %1264 = vst [vmem:[%s423] sm:$0xff] %v1260
        %1265 = vst [vmem:[%s423 + $0x8] sm:$0xff] %v1261
      $region48: #{_gat_stack.7} parent=39 // pred_fallthru
        _
      %s1266 = smul.u32 2, %s27
      %p1267 = scmp.lt.s32.totalorder %s1266, 3
      %s1268 = scalar_select %p1267, %s1266, 3
      %s1269 = smul.addr %s1268, 2
      %s1270 = smul.addr %s1269, 4
      %s1271 = scalar_lea.vmem %s6, %s1270
      // Predicated region
      $region49: #{_gat_stack.7} parent=39 // pred_check
        %p1272 = pneg %p210
      $region50: #{_gat_stack.7} parent=39 // pred_check_branch
        %1274 = sbr.rel (%p1272) target = $region52
      $region51: #{_gat_stack.7} parent=39 // pred_region
        %s1275 = smul.u32 2, %s27
      $region52: #{_gat_stack.7} parent=39 // pred_fallthru
        _
    $region40: #{_gat_stack.7} parent=5 // pred_fallthru
      _
    %p1276 = scmp.le.s32.totalorder 2, %s18
    // Predicated region
    $region53: #{_gat_stack.7} parent=5 // pred_check
      %p1277 = pneg %p1276
    $region54: #{_gat_stack.7} parent=5 // pred_check_branch
      %1279 = sbr.rel (%p1277) target = $region56
    $region55: #{_gat_stack.7} parent=5 // pred_region
      %s1280 = ssub.s32 %s18, 2
      // Predicated region
      $region57: #{_gat_stack.7} parent=55 // pred_check
        %p1281 = pneg %p216
      $region58: #{_gat_stack.7} parent=55 // pred_check_branch
        %1283 = sbr.rel (%p1281) target = $region60
      $region59: #{_gat_stack.7} parent=55 // pred_region
        %s1284 = smul.u32 2, %s29
        %p1285 = scmp.lt.s32.totalorder %s1284, 3
        %s1286 = scalar_select %p1285, %s1284, 3
        %s1287 = smul.addr %s1286, 2
        %s1288 = smul.addr %s1287, 4
        %s1289 = scalar_lea.vmem %s6, %s1288
      $region60: #{_gat_stack.7} parent=55 // pred_fallthru
        _
    $region56: #{_gat_stack.7} parent=5 // pred_fallthru
      _
  $region6: #{_gat_stack.7} parent=0 // loop_footer
    %s22 = sadd.s32 1, %s18
  $region7: #{_gat_stack.7} parent=0 // loop_footer_branch
    %17 = sbr.rel target = $region3
  $region8: #{_gat_stack.7} parent=0 // loop_exit
    _

// kernel: _gat_stack.11
$region0: #{_gat_stack.11}
  #allocation0 [shape = 'u32[]', space=smem, size = 0x4, offset = 0x4, fixed_abs, tag = 'smem constant byte address 0x4 - core index']
  #allocation1 [shape = 'u32[144,128]{1,0:T(1,128)}', space=vmem, size = 0x12000, scoped, tag = 'internal scratch']
  #allocation2 [shape = 'f32[1,16,1]{2,1,0:T(8,128)}', space=vmem, size = 0x2000, scoped, tag = 'scratch operand']
  #allocation3 [shape = 'f32[1,16,1]{2,1,0:T(8,128)}', space=vmem, size = 0x2000, scoped, tag = 'scratch operand']
  #allocation4 [shape = 'f32[1,16,128]{2,1,0:T(8,128)}', space=vmem, size = 0x2000, scoped, tag = 'scratch operand']
  #allocation5 [shape = 's32[1]{0}', space=sflag, size = 0x4, scoped, tag = 'scoped memory for _gat_stack.11']
  #allocation6 [shape = 'u8[1024]{0}', space=smem, size = 0x400, scoped, tag = 'prefetched SMEM operand 0']
  %s0 = inlined_call_operand.vmem [shape: s32[2,1], index: 0, kind: input, shape index: {}]
  %s1 = inlined_call_operand.vmem [shape: bf16[32,128], index: 1, kind: input, shape index: {}]
  %s2 = inlined_call_operand.vmem [shape: f32[32,128], index: 2, kind: input, shape index: {}]
  %s3 = inlined_call_operand.vmem [shape: f32[1,32], index: 3, kind: input, shape index: {}]
  %s4 = inlined_call_operand.vmem [shape: s32[32,8], index: 4, kind: input, shape index: {}]
  %s5 = inlined_call_operand.vmem [shape: f32[1,128], index: 5, kind: input, shape index: {}]
  %s6 = inlined_call_operand.hbm [shape: f32[32,128], index: 6, kind: output, shape index: {}]
  %s7 = sld [smem:[#allocation0]]
  $region61: #{_gat_stack.11} parent=0
    _
  %s9 = ssub.s32 1, %s7
  %s10 = scalar_select 0, %s9, %s7
  %s11 = sshll.u32 %s0, 4
  %s12 = int_to_ptr.vmem [resolvable:$true] %s11
  %14 = dma.vmem_to_smem %s12, 32, [#allocation6], [#allocation5]
  %15 = dma.done [#allocation5], 32
  %16 = sfence
  $region1: #{_gat_stack.11} parent=0
    #allocation7 [shape = 'u8[16384]{0}', space=vmem, size = 0x4000, scoped, tag = 'output window, operand 0']
    #allocation8 [shape = 's32[2]{0}', space=sflag, size = 0x8, scoped, tag = 'scoped memory for _gat_stack.11']
    %17 = vsyncpa [#allocation8], 0
    %s18 = scalar_lea.sflag [#allocation8], 1
    %19 = vsyncpa %s18, 0
    loop: start=0, step=1, limit=4
    $region2: #{_gat_stack.11} parent=1 // loop_pre_header
      _
    $region3: #{_gat_stack.11} parent=1 // loop_header
      %s21 = sphi 0, %s25
      %p22 = scmp.ge.s32.totalorder %s21, 4
      %s28 = sphi 0, %s40
      %s29 = sphi 0, %s36
      %s30 = sphi 0, %s28
      %s31 = sphi 0, %s29
      %s32 = sphi 0, %s30
      %s33 = sphi 0, %s31
      %s59 = sphi 0, %s61
      %s62 = sphi 0, %s59
      %s63 = sphi 0, %s62
      %s79 = sphi 0, %s63
      %s85 = sphi 0, %s87
      %s88 = sphi 0, %s85
      %s89 = sphi 0, %s88
      %s105 = sphi 0, %s89
      %s127 = sphi 0, %s129
      %s130 = sphi 0, %s127
      %s131 = sphi 0, %s130
      %s147 = sphi 0, %s131
      %s153 = sphi 0, %s155
      %s156 = sphi 0, %s153
      %s157 = sphi 0, %s156
      %s173 = sphi 0, %s157
      %s177 = sphi 0, %s177
      %s179 = sphi 0, %s177
      %s180 = sphi 0, %s179
      %s194 = sphi 0, %s180
      %s200 = sphi 0, %s202
      %s203 = sphi 0, %s200
      %s204 = sphi 0, %s203
      %s220 = sphi 0, %s204
    $region4: #{_gat_stack.11} parent=1 // loop_header_branch
      %24 = sbr.rel (%p22) target = $region8
    $region5: #{_gat_stack.11} parent=1 // loop_body
      %s26 = ssub.s32 %s21, 1
      %s27 = ssub.s32 %s21, 2
      %s34 = sadd.s32 1, %s29
      %p35 = scmp.ge.s32.totalorder %s34, 1
      %s36 = scalar_select %p35, 0, %s34
      %s37 = sadd.s32 1, %s28
      %s38 = scalar_select %p35, %s37, %s28
      %p39 = scmp.ge.s32.totalorder %s38, 2
      %s40 = scalar_select %p39, 0, %s38
      %s41 = sshra.s32 %s29, 7
      %s42 = sand.u32 %s29, 127
      %s43 = sadd.s32 %s41, %s28
      %s44 = smul.u32 %s43, 128
      %s45 = sshra.s32 %s29, 7
      %s46 = sand.u32 %s29, 127
      %s47 = sadd.s32 %s44, %s46
      %s48 = sld [smem:[#allocation6 + %s47]]
      %s49 = sshra.s32 %s36, 7
      %s50 = sand.u32 %s36, 127
      %s51 = sadd.s32 %s49, %s40
      %s52 = smul.u32 %s51, 128
      %s53 = sshra.s32 %s36, 7
      %s54 = sand.u32 %s36, 127
      %s55 = sadd.s32 %s52, %s54
      %s56 = sld [smem:[#allocation6 + %s55]]
      %s57 = ssub.s32 %s48, %s56
      %p58 = scmp.eq.s32.totalorder %s57, 0
      %s60 = sadd.s32 %s59, 1
      %s61 = scalar_select %p58, %s59, %s60
      %p64 = pneg %p58
      %p65 = scmp.eq.s32.totalorder %s21, 1
      %p66 = por %p64, %p65
      %p67 = scmp.ne.s32.totalorder %s59, %s62
      %p68 = scmp.eq.s32.totalorder %s21, 0
      %p69 = por %p67, %p68
      %p70 = scmp.ne.s32.totalorder %s59, %s62
      %p71 = scmp.eq.s32.totalorder %s26, 1
      %p72 = por %p70, %p71
      %p73 = scmp.ne.s32.totalorder %s62, %s63
      %p74 = scmp.eq.s32.totalorder %s26, 0
      %p75 = por %p73, %p74
      %p76 = scmp.ne.s32.totalorder %s62, %s63
      %p77 = scmp.eq.s32.totalorder %s27, 1
      %p78 = por %p76, %p77
      %p80 = scmp.ne.s32.totalorder %s63, %s79
      %p81 = scmp.eq.s32.totalorder %s27, 0
      %p82 = por %p80, %p81
      %s83 = ssub.s32 %s28, %s40
      %p84 = scmp.eq.s32.totalorder %s83, 0
      %s86 = sadd.s32 %s85, 1
      %s87 = scalar_select %p84, %s85, %s86
      %p90 = pneg %p84
      %p91 = scmp.eq.s32.totalorder %s21, 1
      %p92 = por %p90, %p91
      %p93 = scmp.ne.s32.totalorder %s85, %s88
      %p94 = scmp.eq.s32.totalorder %s21, 0
      %p95 = por %p93, %p94
      %p96 = scmp.ne.s32.totalorder %s85, %s88
      %p97 = scmp.eq.s32.totalorder %s26, 1
      %p98 = por %p96, %p97
      %p99 = scmp.ne.s32.totalorder %s88, %s89
      %p100 = scmp.eq.s32.totalorder %s26, 0
      %p101 = por %p99, %p100
      %p102 = scmp.ne.s32.totalorder %s88, %s89
      %p103 = scmp.eq.s32.totalorder %s27, 1
      %p104 = por %p102, %p103
      %p106 = scmp.ne.s32.totalorder %s89, %s105
      %p107 = scmp.eq.s32.totalorder %s27, 0
      %p108 = por %p106, %p107
      %s109 = sshra.s32 %s29, 7
      %s110 = sand.u32 %s29, 127
      %s111 = sadd.s32 %s109, %s28
      %s112 = smul.u32 %s111, 128
      %s113 = sshra.s32 %s29, 7
      %s114 = sand.u32 %s29, 127
      %s115 = sadd.s32 %s112, %s114
      %s116 = sld [smem:[#allocation6 + %s115]]
      %s117 = sshra.s32 %s36, 7
      %s118 = sand.u32 %s36, 127
      %s119 = sadd.s32 %s117, %s40
      %s120 = smul.u32 %s119, 128
      %s121 = sshra.s32 %s36, 7
      %s122 = sand.u32 %s36, 127
      %s123 = sadd.s32 %s120, %s122
      %s124 = sld [smem:[#allocation6 + %s123]]
      %s125 = ssub.s32 %s116, %s124
      %p126 = scmp.eq.s32.totalorder %s125, 0
      %s128 = sadd.s32 %s127, 1
      %s129 = scalar_select %p126, %s127, %s128
      %p132 = pneg %p126
      %p133 = scmp.eq.s32.totalorder %s21, 1
      %p134 = por %p132, %p133
      %p135 = scmp.ne.s32.totalorder %s127, %s130
      %p136 = scmp.eq.s32.totalorder %s21, 0
      %p137 = por %p135, %p136
      %p138 = scmp.ne.s32.totalorder %s127, %s130
      %p139 = scmp.eq.s32.totalorder %s26, 1
      %p140 = por %p138, %p139
      %p141 = scmp.ne.s32.totalorder %s130, %s131
      %p142 = scmp.eq.s32.totalorder %s26, 0
      %p143 = por %p141, %p142
      %p144 = scmp.ne.s32.totalorder %s130, %s131
      %p145 = scmp.eq.s32.totalorder %s27, 1
      %p146 = por %p144, %p145
      %p148 = scmp.ne.s32.totalorder %s131, %s147
      %p149 = scmp.eq.s32.totalorder %s27, 0
      %p150 = por %p148, %p149
      %s151 = ssub.s32 %s28, %s40
      %p152 = scmp.eq.s32.totalorder %s151, 0
      %s154 = sadd.s32 %s153, 1
      %s155 = scalar_select %p152, %s153, %s154
      %p158 = pneg %p152
      %p159 = scmp.eq.s32.totalorder %s21, 1
      %p160 = por %p158, %p159
      %p161 = scmp.ne.s32.totalorder %s153, %s156
      %p162 = scmp.eq.s32.totalorder %s21, 0
      %p163 = por %p161, %p162
      %p164 = scmp.ne.s32.totalorder %s153, %s156
      %p165 = scmp.eq.s32.totalorder %s26, 1
      %p166 = por %p164, %p165
      %p167 = scmp.ne.s32.totalorder %s156, %s157
      %p168 = scmp.eq.s32.totalorder %s26, 0
      %p169 = por %p167, %p168
      %p170 = scmp.ne.s32.totalorder %s156, %s157
      %p171 = scmp.eq.s32.totalorder %s27, 1
      %p172 = por %p170, %p171
      %p174 = scmp.ne.s32.totalorder %s157, %s173
      %p175 = scmp.eq.s32.totalorder %s27, 0
      %p176 = por %p174, %p175
      %s178 = sadd.s32 %s177, 1
      %p181 = scmp.eq.s32.totalorder %s21, 1
      %p182 = scmp.ne.s32.totalorder %s177, %s179
      %p183 = scmp.eq.s32.totalorder %s21, 0
      %p184 = por %p182, %p183
      %p185 = scmp.ne.s32.totalorder %s177, %s179
      %p186 = scmp.eq.s32.totalorder %s26, 1
      %p187 = por %p185, %p186
      %p188 = scmp.ne.s32.totalorder %s179, %s180
      %p189 = scmp.eq.s32.totalorder %s26, 0
      %p190 = por %p188, %p189
      %p191 = scmp.ne.s32.totalorder %s179, %s180
      %p192 = scmp.eq.s32.totalorder %s27, 1
      %p193 = por %p191, %p192
      %p195 = scmp.ne.s32.totalorder %s180, %s194
      %p196 = scmp.eq.s32.totalorder %s27, 0
      %p197 = por %p195, %p196
      %s198 = ssub.s32 %s28, %s40
      %p199 = scmp.eq.s32.totalorder %s198, 0
      %s201 = sadd.s32 %s200, 1
      %s202 = scalar_select %p199, %s200, %s201
      %p205 = pneg %p199
      %p206 = scmp.eq.s32.totalorder %s21, 1
      %p207 = por %p205, %p206
      %p208 = scmp.ne.s32.totalorder %s200, %s203
      %p209 = scmp.eq.s32.totalorder %s21, 0
      %p210 = por %p208, %p209
      %p211 = scmp.ne.s32.totalorder %s200, %s203
      %p212 = scmp.eq.s32.totalorder %s26, 1
      %p213 = por %p211, %p212
      %p214 = scmp.ne.s32.totalorder %s203, %s204
      %p215 = scmp.eq.s32.totalorder %s26, 0
      %p216 = por %p214, %p215
      %p217 = scmp.ne.s32.totalorder %s203, %s204
      %p218 = scmp.eq.s32.totalorder %s27, 1
      %p219 = por %p217, %p218
      %p221 = scmp.ne.s32.totalorder %s204, %s220
      %p222 = scmp.eq.s32.totalorder %s27, 0
      %p223 = por %p221, %p222
      %p224 = scmp.le.s32.totalorder 1, %s21
      %p225 = scmp.lt.s32.totalorder %s21, 3
      %p226 = pnand %p224, %p225
      %p227 = pneg %p226
      // Predicated region
      $region9: #{_gat_stack.11} parent=5 // pred_check
        _
      $region10: #{_gat_stack.11} parent=5 // pred_check_branch
        %229 = sbr.rel (%p226) target = $region12
      $region11: #{_gat_stack.11} parent=5 // pred_region
        %s230 = ssub.s32 %s21, 1
        // Predicated region
        $region13: #{_gat_stack.11} parent=11 // pred_check
          %p231 = pneg %p190
        $region14: #{_gat_stack.11} parent=11 // pred_check_branch
          %233 = sbr.rel (%p231) target = $region16
        $region15: #{_gat_stack.11} parent=11 // pred_region
          _
        $region16: #{_gat_stack.11} parent=11 // pred_fallthru
          _
      $region12: #{_gat_stack.11} parent=5 // pred_fallthru
        _
      %p234 = scmp.lt.s32.totalorder %s21, 2
      // Predicated region
      $region17: #{_gat_stack.11} parent=5 // pred_check
        %p235 = pneg %p234
      $region18: #{_gat_stack.11} parent=5 // pred_check_branch
        %237 = sbr.rel (%p235) target = $region20
      $region19: #{_gat_stack.11} parent=5 // pred_region
        // Predicated region
        $region21: #{_gat_stack.11} parent=19 // pred_check
          %p238 = pneg %p69
        $region22: #{_gat_stack.11} parent=19 // pred_check_branch
          %240 = sbr.rel (%p238) target = $region24
        $region23: #{_gat_stack.11} parent=19 // pred_region
          %s241 = sshra.s32 %s29, 7
          %s242 = sand.u32 %s29, 127
          %s243 = sadd.s32 %s241, %s28
          %s244 = smul.u32 %s243, 128
          %s245 = sshra.s32 %s29, 7
          %s246 = sand.u32 %s29, 127
          %s247 = sadd.s32 %s244, %s246
          %s248 = sld [smem:[#allocation6 + %s247]]
          %s249 = smul.u32 4, %s248
          %p250 = scmp.lt.s32.totalorder %s249, 3
          %s251 = scalar_select %p250, %s249, 3
          %s252 = smul.addr %s251, 4
          %s253 = scalar_lea.vmem %s1, %s252
          %s254 = sshra.s32 %s29, 7
          %s255 = sand.u32 %s29, 127
          %s256 = sadd.s32 %s254, %s28
          %s257 = smul.u32 %s256, 128
          %s258 = sshra.s32 %s29, 7
          %s259 = sand.u32 %s29, 127
          %s260 = sadd.s32 %s257, %s259
          %s261 = sld [smem:[#allocation6 + %s260]]
          %s262 = smul.u32 4, %s261
        $region24: #{_gat_stack.11} parent=19 // pred_fallthru
          _
        // Predicated region
        $region25: #{_gat_stack.11} parent=19 // pred_check
          %p263 = pneg %p95
        $region26: #{_gat_stack.11} parent=19 // pred_check_branch
          %265 = sbr.rel (%p263) target = $region28
        $region27: #{_gat_stack.11} parent=19 // pred_region
          %s266 = smul.u32 2, %s28
          %p267 = scmp.lt.s32.totalorder %s266, 3
          %s268 = scalar_select %p267, %s266, 3
          %s269 = smul.addr %s268, 8
          %s270 = scalar_lea.vmem %s2, %s269
          %s271 = smul.u32 2, %s28
        $region28: #{_gat_stack.11} parent=19 // pred_fallthru
          _
        // Predicated region
        $region29: #{_gat_stack.11} parent=19 // pred_check
          %p272 = pneg %p137
        $region30: #{_gat_stack.11} parent=19 // pred_check_branch
          %274 = sbr.rel (%p272) target = $region32
        $region31: #{_gat_stack.11} parent=19 // pred_region
          %s275 = sshra.s32 %s29, 7
          %s276 = sand.u32 %s29, 127
          %s277 = sadd.s32 %s275, %s28
          %s278 = smul.u32 %s277, 128
          %s279 = sshra.s32 %s29, 7
          %s280 = sand.u32 %s29, 127
          %s281 = sadd.s32 %s278, %s280
          %s282 = sld [smem:[#allocation6 + %s281]]
          %p283 = scmp.lt.s32.totalorder %s282, 0
          %s284 = scalar_select %p283, %s282, 0
          %s285 = scalar_lea.vmem %s3, %s284
          %s286 = sshra.s32 %s29, 7
          %s287 = sand.u32 %s29, 127
          %s288 = sadd.s32 %s286, %s28
          %s289 = smul.u32 %s288, 128
          %s290 = sshra.s32 %s29, 7
          %s291 = sand.u32 %s29, 127
          %s292 = sadd.s32 %s289, %s291
          %s293 = sld [smem:[#allocation6 + %s292]]
        $region32: #{_gat_stack.11} parent=19 // pred_fallthru
          _
        // Predicated region
        $region33: #{_gat_stack.11} parent=19 // pred_check
          %p294 = pneg %p163
        $region34: #{_gat_stack.11} parent=19 // pred_check_branch
          %296 = sbr.rel (%p294) target = $region36
        $region35: #{_gat_stack.11} parent=19 // pred_region
          %s297 = smul.u32 2, %s28
          %p298 = scmp.lt.s32.totalorder %s297, 3
          %s299 = scalar_select %p298, %s297, 3
          %s300 = smul.addr %s299, 8
          %s301 = scalar_lea.vmem %s4, %s300
          %s302 = smul.u32 2, %s28
        $region36: #{_gat_stack.11} parent=19 // pred_fallthru
          _
      $region20: #{_gat_stack.11} parent=5 // pred_fallthru
        _
      %p303 = scmp.le.s32.totalorder 1, %s21
      %p304 = scmp.lt.s32.totalorder %s21, 3
      %p305 = pnand %p303, %p304
      %p306 = pneg %p305
      // Predicated region
      $region37: #{_gat_stack.11} parent=5 // pred_check
        _
      $region38: #{_gat_stack.11} parent=5 // pred_check_branch
        %308 = sbr.rel (%p305) target = $region40
      $region39: #{_gat_stack.11} parent=5 // pred_region
        %s309 = ssub.s32 %s21, 1
        %s310 = sshra.s32 %s31, 7
        %s311 = sand.u32 %s31, 127
        %s312 = sadd.s32 %s310, %s30
        %s313 = smul.u32 %s312, 128
        %s314 = sshra.s32 %s31, 7
        %s315 = sand.u32 %s31, 127
        %s316 = sadd.s32 %s313, %s315
        %s317 = sld [smem:[#allocation6 + %s316]]
        %s318 = smul.u32 4, %s317
        %p319 = scmp.lt.s32.totalorder %s318, 3
        %s320 = scalar_select %p319, %s318, 3
        %s321 = smul.addr %s320, 4
        %s322 = scalar_lea.vmem %s1, %s321
        %p323 = pneg %p75
        %p324 = pneg %p72
        %s325 = smul.u32 2, %s30
        %p326 = scmp.lt.s32.totalorder %s325, 3
        %s327 = scalar_select %p326, %s325, 3
        %s328 = smul.addr %s327, 8
        %s329 = scalar_lea.vmem %s2, %s328
        %p330 = pneg %p101
        %p331 = pneg %p98
        %s332 = sshra.s32 %s31, 7
        %s333 = sand.u32 %s31, 127
        %s334 = sadd.s32 %s332, %s30
        %s335 = smul.u32 %s334, 128
        %s336 = sshra.s32 %s31, 7
        %s337 = sand.u32 %s31, 127
        %s338 = sadd.s32 %s335, %s337
        %s339 = sld [smem:[#allocation6 + %s338]]
        %p340 = scmp.lt.s32.totalorder %s339, 0
        %s341 = scalar_select %p340, %s339, 0
        %s342 = scalar_lea.vmem %s3, %s341
        %p343 = pneg %p143
        %p344 = pneg %p140
        %s345 = smul.u32 2, %s30
        %p346 = scmp.lt.s32.totalorder %s345, 3
        %s347 = scalar_select %p346, %s345, 3
        %s348 = smul.addr %s347, 8
        %s349 = scalar_lea.vmem %s4, %s348
        %p350 = pneg %p169
        %p351 = pneg %p166
        %p352 = pneg %p190
        %p353 = pneg %p187
        %p354 = pneg %p216
        %p355 = pneg %p213
        %s356 = sand.u32 %s203, 1
        %s357 = scalar_lea.sflag [#allocation8], %s356
        %s358 = sand.u32 %s203, 1
        %s359 = smul.addr %s358, 16
        %s360 = scalar_lea.vmem [#allocation7], %s359
        %s361 = sshra.s32 %s31, 7
        %s362 = sand.u32 %s31, 127
        %s363 = sadd.s32 %s361, %s30
        %s364 = smul.u32 %s363, 128
        %s365 = sshra.s32 %s31, 7
        %s366 = sand.u32 %s31, 127
        %s367 = sadd.s32 %s364, %s366
        %s368 = sld [smem:[#allocation6 + %s367]]
        %s369 = smul.u32 4, %s368
        %p370 = scmp.lt.s32.totalorder %s369, 3
        %s371 = scalar_select %p370, %s369, 3
        %s372 = smul.addr %s371, 4
        %s373 = scalar_lea.vmem %s1, %s372
        %s374 = sshra.s32 %s31, 7
        %s375 = sand.u32 %s31, 127
        %s376 = sadd.s32 %s374, %s30
        %s377 = smul.u32 %s376, 128
        %s378 = sshra.s32 %s31, 7
        %s379 = sand.u32 %s31, 127
        %s380 = sadd.s32 %s377, %s379
        %s381 = sld [smem:[#allocation6 + %s380]]
        %s382 = smul.u32 4, %s381
        %s383 = smul.u32 2, %s30
        %p384 = scmp.lt.s32.totalorder %s383, 3
        %s385 = scalar_select %p384, %s383, 3
        %s386 = smul.addr %s385, 8
        %s387 = scalar_lea.vmem %s2, %s386
        %s388 = smul.u32 2, %s30
        %s389 = sshra.s32 %s31, 7
        %s390 = sand.u32 %s31, 127
        %s391 = sadd.s32 %s389, %s30
        %s392 = smul.u32 %s391, 128
        %s393 = sshra.s32 %s31, 7
        %s394 = sand.u32 %s31, 127
        %s395 = sadd.s32 %s392, %s394
        %s396 = sld [smem:[#allocation6 + %s395]]
        %p397 = scmp.lt.s32.totalorder %s396, 0
        %s398 = scalar_select %p397, %s396, 0
        %s399 = scalar_lea.vmem %s3, %s398
        %s400 = sshra.s32 %s31, 7
        %s401 = sand.u32 %s31, 127
        %s402 = sadd.s32 %s400, %s30
        %s403 = smul.u32 %s402, 128
        %s404 = sshra.s32 %s31, 7
        %s405 = sand.u32 %s31, 127
        %s406 = sadd.s32 %s403, %s405
        %s407 = sld [smem:[#allocation6 + %s406]]
        %s408 = smul.u32 2, %s30
        %p409 = scmp.lt.s32.totalorder %s408, 3
        %s410 = scalar_select %p409, %s408, 3
        %s411 = smul.addr %s410, 8
        %s412 = scalar_lea.vmem %s4, %s411
        %s413 = smul.u32 2, %s30
        %s414 = smul.u32 2, %s30
        %p416 = scmp.eq.s32.totalorder %s31, 0
        // Predicated region
        $region41: #{_gat_stack.11} parent=39 // pred_check
          %p417 = pneg %p416
        $region42: #{_gat_stack.11} parent=39 // pred_check_branch
          %419 = sbr.rel (%p417) target = $region44
        $region43: #{_gat_stack.11} parent=39 // pred_region
          %vm420 = vcmask 7168
          %421 = vst.msk [vmem:[#allocation2] sm:$0xff] %vm420, -1e+30
          %422 = vst.msk [vmem:[#allocation2 + $0x8] sm:$0xff] %vm420, -1e+30
          %423 = vst.msk [vmem:[#allocation3] sm:$0xff] %vm420, 0.0
          %424 = vst.msk [vmem:[#allocation3 + $0x8] sm:$0xff] %vm420, 0.0
          %425 = vst [vmem:[#allocation4] sm:$0xff] 0.0
          %426 = vst [vmem:[#allocation4 + $0x8] sm:$0xff] 0.0
        $region44: #{_gat_stack.11} parent=39 // pred_fallthru
          _
        %s427 = sshra.s32 %s31, 7
        %s428 = sand.u32 %s31, 127
        %s429 = sadd.s32 %s427, %s30
        %s430 = smul.u32 %s429, 128
        %s431 = sshra.s32 %s31, 7
        %s432 = sand.u32 %s31, 127
        %s433 = sadd.s32 %s430, %s432
        %s434 = sld [smem:[#allocation6 + %s433]]
        %v435 = vlaneseq
        %v436 = vshrl.u32 %v435, 7
        %v437 = vadd.s32 %v436, 8
        %s438 = smul.u32 %s30, 16
        %v439 = vstv %s438
        %v440 = vadd.s32 %v436, %v439
        %v441 = vadd.s32 %v437, %v439
        %v442 = vlaneseq
        %v443 = vand.u32 %v442, 127
        %s444 = smul.u32 %s434, 32
        %v445 = vstv %s444
        %v446 = vadd.s32 %v443, %v445
        %v447 = vsub.s32 %v446, %v440
        %v448 = vsub.s32 %v446, %v441
        %v449 = vld [vmem:[%s412] sm:$0xff]
        %v450 = vld [vmem:[%s412 + $0x8] sm:$0xff]
        %vm451 = vcmp.gt.s32.totalorder %v449, 0
        %vm452 = vcmp.gt.s32.totalorder %v450, 0
        %vm453 = vcmp.eq.s32.totalorder %v447, 0
        %vm454 = vcmp.eq.s32.totalorder %v448, 0
        %vm455 = vcmp.eq.s32.totalorder %v447, 4294967295
        %vm456 = vcmp.eq.s32.totalorder %v448, 4294967295
        %vm457 = vmor %vm453, %vm455
        %vm458 = vmor %vm454, %vm456
        %vm459 = vcmp.eq.s32.totalorder %v447, 1
        %vm460 = vcmp.eq.s32.totalorder %v448, 1
        %v461 = vsel %vm451, 1, 0
        %v462 = vsel %vm452, 1, 0
        %463 = vset.pattern.permute.xlu0 0
        %464 = vperm.xlu0 %463, %v461
        %v465 = vpop.permute.xlu0 %464
        %466 = vset.pattern.permute.xlu0 0
        %467 = vperm.xlu0 %466, %v462
        %v468 = vpop.permute.xlu0 %467
        %vm469 = vcmp.eq.s32.totalorder %v465, 1
        %vm470 = vcmp.eq.s32.totalorder %v468, 1
        %vm471 = vmand %vm459, %vm469
        %vm472 = vmand %vm460, %vm470
        %vm473 = vmor %vm457, %vm471
        %vm474 = vmor %vm458, %vm472
        %vm475 = vcmp.eq.s32.totalorder %v447, 4
        %vm476 = vcmp.eq.s32.totalorder %v448, 4
        %477 = vset.pattern.permute.xlu0 1
        %478 = vperm.xlu0 %477, %v461
        %v479 = vpop.permute.xlu0 %478
        %480 = vset.pattern.permute.xlu0 1
        %481 = vperm.xlu0 %480, %v462
        %v482 = vpop.permute.xlu0 %481
        %vm483 = vcmp.eq.s32.totalorder %v479, 1
        %vm484 = vcmp.eq.s32.totalorder %v482, 1
        %vm485 = vmand %vm475, %vm483
        %vm486 = vmand %vm476, %vm484
        %vm487 = vmor %vm473, %vm485
        %vm488 = vmor %vm474, %vm486
        %vm489 = vcmp.eq.s32.totalorder %v447, 4294967292
        %vm490 = vcmp.eq.s32.totalorder %v448, 4294967292
        %491 = vset.pattern.permute.xlu0 2
        %492 = vperm.xlu0 %491, %v461
        %v493 = vpop.permute.xlu0 %492
        %494 = vset.pattern.permute.xlu0 2
        %495 = vperm.xlu0 %494, %v462
        %v496 = vpop.permute.xlu0 %495
        %vm497 = vcmp.eq.s32.totalorder %v493, 1
        %vm498 = vcmp.eq.s32.totalorder %v496, 1
        %vm499 = vmand %vm489, %vm497
        %vm500 = vmand %vm490, %vm498
        %vm501 = vmor %vm487, %vm499
        %vm502 = vmor %vm488, %vm500
        %v503 = vld [vmem:[%s373] sm:$0xf]
        %v504 = vld [vmem:[%s373 + $0x4] sm:$0xf]
        %v505 = vld [vmem:[%s373 + $0x8] sm:$0xf]
        %v506 = vld [vmem:[%s373 + $0xc] sm:$0xf]
        %v507 = vld [vmem:[%s387] sm:$0xff]
        %v508 = vld [vmem:[%s387 + $0x8] sm:$0xff]
        %v509 = vld [vmem:[%s399] sm:$0x1]
        %511 = vset.pattern.permute.xlu0 1
        %512 = vperm.xlu0 %511, %v507
        %v513 = vpop.permute.xlu0 %512
        %516 = vset.pattern.permute.xlu0 1
        %517 = vperm.xlu0 %516, %v508
        %v518 = vpop.permute.xlu0 %517
        %v521 = vlaneseq
        %v522 = vshrl.u32 %v521, 7
        %v523 = vsub.s32 0, %v522
        %v524 = vrot.slane %v509, %v523
        %v526 = vadd.f32 %v513, %v524
        %v527 = vadd.f32 %v518, %v524
        %v528 = vmul.f32 %v526, 0.2
        %v529 = vmul.f32 %v527, 0.2
        %v530 = vmax.f32 %v526, %v528
        %v531 = vmax.f32 %v527, %v529
        %v532 = vsel %vm501, %v530, -1e+30
        %v533 = vsel %vm502, %v531, -1e+30
        %v534 = vld [vmem:[#allocation2] sm:$0xff]
        %v535 = vld [vmem:[#allocation2 + $0x8] sm:$0xff]
        %vm536 = vcmask 261120
        %v537 = vsel %vm536, %v532, -inf
        %538 = vmax.xlane.f32.xlu0 %v537
        %v539 = vpop.xlane.xlu0 %538
        %v540 = vsel %vm536, %v533, -inf
        %541 = vmax.xlane.f32.xlu0 %v540
        %v542 = vpop.xlane.xlu0 %541
        %v543 = vmax.f32 %v534, %v539
        %v544 = vmax.f32 %v535, %v542
        %v545 = vsub.f32 %v534, %v543
        %v546 = vsub.f32 %v535, %v544
        %v547 = vmul.f32 %v545, 1.442695
        %v548 = vpow.pop %v547
        %v549 = vmul.f32 %v546, 1.442695
        %v550 = vpow.pop %v549
        %552 = vset.pattern.permute.xlu0 0
        %553 = vperm.xlu0 %552, %v543
        %v554 = vpop.permute.xlu0 %553
        %557 = vset.pattern.permute.xlu0 0
        %558 = vperm.xlu0 %557, %v544
        %v559 = vpop.permute.xlu0 %558
        %v561 = vsub.f32 %v532, %v554
        %v562 = vsub.f32 %v533, %v559
        %v563 = vmul.f32 %v561, 1.442695
        %v564 = vpow.pop %v563
        %v565 = vmul.f32 %v562, 1.442695
        %v566 = vpow.pop %v565
        %v567 = vsel %vm501, %v564, 0.0
        %v568 = vsel %vm502, %v566, 0.0
        %v569 = vld [vmem:[#allocation3] sm:$0xff]
        %v570 = vld [vmem:[#allocation3 + $0x8] sm:$0xff]
        %v571 = vmul.f32 %v548, %v569
        %v572 = vmul.f32 %v550, %v570
        %v573 = vsel %vm536, %v567, 0.0
        %574 = vadd.xlane.f32.xlu0 %v573
        %v575 = vpop.xlane.xlu0 %574
        %v576 = vsel %vm536, %v568, 0.0
        %577 = vadd.xlane.f32.xlu0 %v576
        %v578 = vpop.xlane.xlu0 %577
        %v579 = vadd.f32 %v571, %v575
        %v580 = vadd.f32 %v572, %v578
        %vm581 = vcmask 7168
        %582 = vst.msk [vmem:[#allocation3] sm:$0xff] %vm581, %v579
        %583 = vst.msk [vmem:[#allocation3 + $0x8] sm:$0xff] %vm581, %v580
        %v584 = vpack.c.bf16 %v568, %v567
        %v589 = vunpack.c.l.b16 %v503
        %v590 = vunpack.c.l.b16 %v504
        %v591 = vunpack.c.l.b16 %v505
        %v592 = vunpack.c.l.b16 %v506
        %v593 = vpack.c.b16 %v590, %v589
        %v594 = vpack.c.b16 %v592, %v591
        %v598 = vsel %vm536, %v584, 0
        %600 = vmatprep.subr.bf16.mxu0 0
        %601 = vmatpush1.bf16.msra.mxu0 %v593
        %602 = vmatprep.subr.bf16.mxu0 0
        %603 = vmatpush1.bf16.msra.mxu0 %v594
        %604 = vmatprep.subr.bf16.mxu0 0
        %605 = vmatpush1.bf16.msra.mxu0 0
        %606 = vmatprep.subr.bf16.mxu0 0
        %607 = vmatpush1.bf16.msra.mxu0 0
        %608 = vmatprep.subr.bf16.mxu0 0
        %609 = vmatpush1.bf16.msra.mxu0 0
        %610 = vmatprep.subr.bf16.mxu0 0
        %611 = vmatpush1.bf16.msra.mxu0 0
        %612 = vmatprep.subr.bf16.mxu0 0
        %613 = vmatpush1.bf16.msra.mxu0 0
        %614 = vmatprep.subr.bf16.mxu0 0
        %615 = vmatpush1.bf16.msra.mxu0 0
        %616 = vmatprep.subr.bf16.mxu0 0
        %617 = vmatpush1.bf16.msra.mxu0 0
        %618 = vmatprep.subr.bf16.mxu0 0
        %619 = vmatpush1.bf16.msra.mxu0 0
        %620 = vmatprep.subr.bf16.mxu0 0
        %621 = vmatpush1.bf16.msra.mxu0 0
        %622 = vmatprep.subr.bf16.mxu0 0
        %623 = vmatpush1.bf16.msra.mxu0 0
        %624 = vmatprep.subr.bf16.mxu0 0
        %625 = vmatpush1.bf16.msra.mxu0 0
        %626 = vmatprep.subr.bf16.mxu0 0
        %627 = vmatpush1.bf16.msra.mxu0 0
        %628 = vmatprep.subr.bf16.mxu0 0
        %629 = vmatpush1.bf16.msra.mxu0 0
        %630 = vmatprep.subr.bf16.mxu0 0
        %631 = vmatpush1.bf16.msra.mxu0 0
        %632 = vmatprep.mubr.bf16.mxu0 0
        %633 = vmatmul.mubr.bf16.gmra.mrb[0].mxu0 %v598
        %v634 = vpop.f32.mrb[0].mxu0
        %v635 = vadd.f32 0.0, %v634
        %v636 = vpop.f32.mrb[0].mxu0
        %v637 = vpop.f32.mrb[0].mxu0
        %v638 = vadd.f32 0.0, %v637
        %v639 = vpop.f32.mrb[0].mxu0
        %640 = vdwg.mxu0
        %v641 = vld [vmem:[#allocation4] sm:$0xff]
        %v642 = vld [vmem:[#allocation4 + $0x8] sm:$0xff]
        %644 = vset.pattern.permute.xlu0 0
        %645 = vperm.xlu0 %644, %v548
        %v646 = vpop.permute.xlu0 %645
        %649 = vset.pattern.permute.xlu0 0
        %650 = vperm.xlu0 %649, %v550
        %v651 = vpop.permute.xlu0 %650
        %v653 = vmul.f32 %v646, %v641
        %v654 = vmul.f32 %v651, %v642
        %v655 = vadd.f32 %v653, %v635
        %v656 = vadd.f32 %v654, %v638
        %657 = vst [vmem:[#allocation4] sm:$0xff] %v655
        %658 = vst [vmem:[#allocation4 + $0x8] sm:$0xff] %v656
        %659 = vst.msk [vmem:[#allocation2] sm:$0xff] %vm581, %v543
        %660 = vst.msk [vmem:[#allocation2 + $0x8] sm:$0xff] %vm581, %v544
        // Predicated region
        $region45: #{_gat_stack.11} parent=39 // pred_check
          %p661 = pneg %p416
        $region46: #{_gat_stack.11} parent=39 // pred_check_branch
          %663 = sbr.rel (%p661) target = $region48
        $region47: #{_gat_stack.11} parent=39 // pred_region
          %v664 = vld [vmem:[#allocation3] sm:$0xff]
          %v665 = vld [vmem:[#allocation3 + $0x8] sm:$0xff]
          %v666 = vrcp.pop %v664
          %v667 = vrcp.pop %v665
          %v668 = vld [vmem:[#allocation4] sm:$0xff]
          %v669 = vld [vmem:[#allocation4 + $0x8] sm:$0xff]
          %671 = vset.pattern.permute.xlu0 0
          %672 = vperm.xlu0 %671, %v666
          %v673 = vpop.permute.xlu0 %672
          %676 = vset.pattern.permute.xlu0 0
          %677 = vperm.xlu0 %676, %v667
          %v678 = vpop.permute.xlu0 %677
          %v680 = vmul.f32 %v668, %v673
          %v681 = vmul.f32 %v669, %v678
          %v682 = vld [vmem:[%s5] sm:$0x1]
          %v684 = vlaneseq
          %v685 = vshrl.u32 %v684, 7
          %v686 = vsub.s32 0, %v685
          %v687 = vrot.slane %v682, %v686
          %v689 = vadd.f32 %v680, %v687
          %v690 = vadd.f32 %v681, %v687
          %691 = vst [vmem:[%s360] sm:$0xff] %v689
          %692 = vst [vmem:[%s360 + $0x8] sm:$0xff] %v690
        $region48: #{_gat_stack.11} parent=39 // pred_fallthru
          _
        %s693 = sand.u32 %s203, 1
        %s694 = scalar_lea.sflag [#allocation8], %s693
        %s695 = sand.u32 %s203, 1
        %s696 = smul.addr %s695, 16
        %s697 = scalar_lea.vmem [#allocation7], %s696
        // Predicated region
        $region49: #{_gat_stack.11} parent=39 // pred_check
          %p698 = pneg %p213
        $region50: #{_gat_stack.11} parent=39 // pred_check_branch
          %700 = sbr.rel (%p698) target = $region52
        $region51: #{_gat_stack.11} parent=39 // pred_region
          %s701 = smul.u32 2, %s30
          %s703 = ssub.s32 256, 256
          %704 = vsyncadd %s694, %s703
          %s705 = smul.addr %s701, 128
          %s706 = scalar_lea.hbm %s6, %s705
          %s707 = sshll.u32 %s697, 4
          %s708 = int_to_ptr.vmem [resolvable:$true] %s707
          %713 = dma.vmem_to_hbm [thread:$0]  %s708, 256, %s706, %s694, 128, 128, 8
        $region52: #{_gat_stack.11} parent=39 // pred_fallthru
          _
      $region40: #{_gat_stack.11} parent=5 // pred_fallthru
        _
      %p714 = scmp.le.s32.totalorder 2, %s21
      // Predicated region
      $region53: #{_gat_stack.11} parent=5 // pred_check
        %p715 = pneg %p714
      $region54: #{_gat_stack.11} parent=5 // pred_check_branch
        %717 = sbr.rel (%p715) target = $region56
      $region55: #{_gat_stack.11} parent=5 // pred_region
        %s718 = ssub.s32 %s21, 2
        // Predicated region
        $region57: #{_gat_stack.11} parent=55 // pred_check
          %p719 = pneg %p219
        $region58: #{_gat_stack.11} parent=55 // pred_check_branch
          %721 = sbr.rel (%p719) target = $region60
        $region59: #{_gat_stack.11} parent=55 // pred_region
          %s722 = sand.u32 %s204, 1
          %s723 = scalar_lea.sflag [#allocation8], %s722
          %s724 = sand.u32 %s204, 1
          %s725 = smul.addr %s724, 16
          %s726 = scalar_lea.vmem [#allocation7], %s725
          %727 = dma.done %s723, 256
        $region60: #{_gat_stack.11} parent=55 // pred_fallthru
          _
      $region56: #{_gat_stack.11} parent=5 // pred_fallthru
        _
    $region6: #{_gat_stack.11} parent=1 // loop_footer
      %s25 = sadd.s32 1, %s21
    $region7: #{_gat_stack.11} parent=1 // loop_footer_branch
      %20 = sbr.rel target = $region3
    $region8: #{_gat_stack.11} parent=1 // loop_exit
      _
    %728 = vsyncpa [#allocation8], 1
    %s729 = scalar_lea.sflag [#allocation8], 1
    %730 = vsyncpa %s729, 1

</llo_original>
